<compile_context>
chip_gen: v7x
topology: tpu7x:2x2x1
jax: 0.10.0
libtpu: 0.0.40
codegen_flags: <defaults>
</compile_context>

<pallas_src>
import functools

import jax
import jax.numpy as jnp
import numpy as np
from jax import lax
from jax.experimental import pallas as pl
from jax.experimental.pallas import tpu as pltpu


_VMEM_LIMIT_BYTES = 32 * 1024 * 1024   # explicit scoped-VMEM request (fits all gens incl. v7x)
_TILE_VMEM_BUDGET = 6 * 1024 * 1024    # per-tile working-set target (double-buffer safe)


def _largest_divisor_tile(h, cap, ok):
    """Largest tile size th that divides h, th <= cap, and satisfies ok(th)."""
    best = None
    for th in range(1, min(h, max(cap, 1)) + 1):
        if h % th == 0 and ok(th):
            best = th
    return best if best is not None else h


# ----------------------------------------------------------------------------
# Kernel 1: ConvTranspose2d(kernel=2, stride=2) as two matmuls per row tile.
#   out[n, 2i+a, 2j+b, co] = sum_ci x[n,i,j,ci] * W[ci,co,a,b] + bias[co]
# The kernel writes (tile, a=2, W, 2*Co) so the final depth-to-space is a
# contiguous (free) reshape in the wrapper.
# ----------------------------------------------------------------------------
def _make_upconv_kernel(th, w, cin, chalf):
    def kernel(x_ref, w_ref, b_ref, o_ref):
        # x_ref: (1, th, W, Cin), w_ref: (2, Cin, 2*Chalf) [(a) x (ci) x (b,co)]
        # b_ref: (1, 2*Chalf), o_ref: (1, th, 2, W, 2*Chalf)
        x = x_ref[0].reshape(th * w, cin)
        for a in range(2):
            y = jnp.dot(x, w_ref[a], preferred_element_type=jnp.float32) + b_ref[...]
            o_ref[0, :, a, :, :] = y.reshape(th, w, 2 * chalf).astype(o_ref.dtype)
    return kernel


def conv_transpose2x2_stride2(x_nhwc, w_iohw, bias, *, max_tile_rows=128,
                              compute_dtype=jnp.float32, out_dtype=jnp.float32):
    N, H, W, Cin = x_nhwc.shape
    Chalf = w_iohw.shape[1]
    # PyTorch weight (ci, co, a, b) -> (a, ci, (b, co))
    w_mat = jnp.transpose(w_iohw, (2, 0, 3, 1)).reshape(2, Cin, 2 * Chalf)
    w_mat = w_mat.astype(compute_dtype)
    b_mat = jnp.tile(bias, 2).reshape(1, 2 * Chalf).astype(jnp.float32)
    x = x_nhwc.astype(compute_dtype)

    in_bpe = jnp.dtype(compute_dtype).itemsize
    out_bpe = jnp.dtype(out_dtype).itemsize

    def fits(th):
        in_tile = th * W * Cin * in_bpe
        out_tile = th * 2 * W * 2 * Chalf * out_bpe
        return 2 * (in_tile + out_tile) <= _TILE_VMEM_BUDGET

    th = _largest_divisor_tile(H, max_tile_rows, fits)
    nt = H // th

    out5 = pl.pallas_call(
        _make_upconv_kernel(th, W, Cin, Chalf),
        out_shape=jax.ShapeDtypeStruct((N, H, 2, W, 2 * Chalf), out_dtype),
        grid=(N, nt),
        in_specs=[
            pl.BlockSpec((1, th, W, Cin), lambda n, t: (n, t, 0, 0)),
            pl.BlockSpec((2, Cin, 2 * Chalf), lambda n, t: (0, 0, 0)),
            pl.BlockSpec((1, 2 * Chalf), lambda n, t: (0, 0)),
        ],
        out_specs=pl.BlockSpec((1, th, 2, W, 2 * Chalf), lambda n, t: (n, t, 0, 0, 0)),
        compiler_params=pltpu.CompilerParams(
            dimension_semantics=("parallel", "parallel"),
            vmem_limit_bytes=_VMEM_LIMIT_BYTES),
    )(x, w_mat, b_mat)
    # (N, H, 2, W, 2*Chalf) -> (N, 2H, 2W, Chalf) is a contiguous reshape (free).
    return out5.reshape(N, 2 * H, 2 * W, Chalf)


# ----------------------------------------------------------------------------
# Kernel 2: fused [concat of K inputs] -> Conv3x3(pad=1) -> folded-BN -> ReLU.
# Row-tiled; the per-tile 1-row bottom halo arrives as a small side input so
# normal BlockSpecs (auto double-buffered) can be used.
# ----------------------------------------------------------------------------
def _make_conv3x3_kernel(n_in, th, wc, cins, cout):
    def kernel(*refs):
        mains = refs[0:2 * n_in:2]     # each (1, th, Wc+2, C_k)
        halos = refs[1:2 * n_in:2]     # each (1, 1, 2, Wc+2, C_k)
        ws = refs[2 * n_in:3 * n_in]   # each (3, 3*C_k, Cout)
        b_ref = refs[3 * n_in]         # (1, Cout)
        o_ref = refs[3 * n_in + 1]     # (1, th*Wc, Cout)

        # Seed the accumulator with the folded-BN bias (saves an epilogue add).
        acc = jnp.broadcast_to(b_ref[...], (th * wc, cout)).astype(jnp.float32)
        for k in range(n_in):
            ck = cins[k]
            win = jnp.concatenate([mains[k][0], halos[k][0, 0]], axis=0)  # (th+2, Wc+2, Ck)
            for dy in range(3):
                rows = win[dy:dy + th]                                    # (th, Wc+2, Ck)
                lhs = jnp.concatenate(
                    [rows[:, dx:dx + wc, :] for dx in range(3)], axis=-1  # K = 3*Ck
                ).reshape(th * wc, 3 * ck)
                acc = acc + jnp.dot(lhs, ws[k][dy],
                                    preferred_element_type=jnp.float32)
        o_ref[0] = jnp.maximum(acc, 0.0).astype(o_ref.dtype)   # ReLU epilogue (f32)
    return kernel


def _halo_rows(xp, th):
    """Bottom 2 halo rows per tile: xp[:, t*th+th : t*th+th+2] stacked over t."""
    nt = (xp.shape[1] - 2) // th
    return jnp.stack([xp[:, t * th + th: t * th + th + 2] for t in range(nt)], axis=1)


def conv3x3_bn_relu(inputs_padded, weights_k3, bias_total, *, out_dtype=jnp.float32,
                    max_tile_rows=128):
    """inputs_padded: list of (N, Hc+2, Wc+2, C_k) arrays (already zero-padded by 1).
    weights_k3:       list of (3, 3*C_k, Cout) BN-folded weights (one per input).
    """
    N, Hp, Wp, _ = inputs_padded[0].shape
    Hc, Wc = Hp - 2, Wp - 2
    cins = tuple(int(x.shape[-1]) for x in inputs_padded)
    cout = int(weights_k3[0].shape[-1])
    n_in = len(inputs_padded)
    in_bpe = max(jnp.dtype(x.dtype).itemsize for x in inputs_padded)
    out_bpe = jnp.dtype(out_dtype).itemsize

    def fits(th):
        if not ((th * Wc) % 8 == 0 or th == Hc):   # keep the out block (8,.)-aligned
            return False
        win = sum((th + 2) * Wp * c for c in cins) * in_bpe
        out = th * Wc * cout * out_bpe
        acc = th * Wc * cout * 4
        return 2 * (win + out) + 2 * acc <= _TILE_VMEM_BUDGET

    th = _largest_divisor_tile(Hc, max_tile_rows, fits)
    nt = Hc // th

    halos = [_halo_rows(x, th) for x in inputs_padded]

    in_specs, args = [], []
    for x, h, c in zip(inputs_padded, halos, cins):
        in_specs.append(pl.BlockSpec((1, th, Wp, c), lambda n, t: (n, t, 0, 0)))
        in_specs.append(pl.BlockSpec((1, 1, 2, Wp, c), lambda n, t: (n, t, 0, 0, 0)))
        args += [x, h]
    for w, c in zip(weights_k3, cins):
        in_specs.append(pl.BlockSpec((3, 3 * c, cout), lambda n, t: (0, 0, 0)))
        args.append(w)
    in_specs.append(pl.BlockSpec((1, cout), lambda n, t: (0, 0)))
    args.append(bias_total.reshape(1, cout).astype(jnp.float32))

    out = pl.pallas_call(
        _make_conv3x3_kernel(n_in, th, Wc, cins, cout),
        out_shape=jax.ShapeDtypeStruct((N, Hc * Wc, cout), out_dtype),
        grid=(N, nt),
        in_specs=in_specs,
        out_specs=pl.BlockSpec((1, th * Wc, cout), lambda n, t: (n, t, 0)),
        compiler_params=pltpu.CompilerParams(
            dimension_semantics=("parallel", "parallel"),
            vmem_limit_bytes=_VMEM_LIMIT_BYTES),
    )(*args)
    return out.reshape(N, Hc, Wc, cout)


# ----------------------------------------------------------------------------
# Parameter prep: fold eval-mode BatchNorm into the conv weights / bias.
# ----------------------------------------------------------------------------
def _fold_bn(w_oihw, conv_bias, gamma, beta, mean, var, eps):
    scale = gamma / jnp.sqrt(var + eps)
    w_scaled = w_oihw * scale[:, None, None, None]
    bias_total = (conv_bias - mean) * scale + beta
    return w_scaled, bias_total


def _conv_weight_k3(w_oihw, compute_dtype):
    # (co, ci, ky, kx) -> (ky, (kx, ci), co)  to match the in-kernel lane-concat order
    cout, cin = w_oihw.shape[0], w_oihw.shape[1]
    return jnp.transpose(w_oihw, (2, 3, 1, 0)).reshape(3, 3 * cin, cout).astype(compute_dtype)


# ----------------------------------------------------------------------------
# `Up` module: parameters + forward
# ----------------------------------------------------------------------------
def init_up_params(key, ch_in, ch_out):
    ch_half = ch_in // 2
    ks = jax.random.split(key, 6)
    p = {
        "up_w": 0.1 * jax.random.normal(ks[0], (ch_in, ch_half, 2, 2), jnp.float32),
        "up_b": 0.1 * jax.random.normal(ks[1], (ch_half,), jnp.float32),
        "c1_w": 0.1 * jax.random.normal(ks[2], (ch_out, ch_in, 3, 3), jnp.float32),
        "c1_b": 0.1 * jax.random.normal(ks[3], (ch_out,), jnp.float32),
        "c2_w": 0.1 * jax.random.normal(ks[4], (ch_out, ch_out, 3, 3), jnp.float32),
        "c2_b": 0.1 * jax.random.normal(ks[5], (ch_out,), jnp.float32),
    }
    ar = jnp.arange(ch_out, dtype=jnp.float32)
    p["bn1_gamma"] = 1.0 + 0.10 * ar
    p["bn1_beta"] = 0.05 * ar
    p["bn1_mean"] = 0.01 * ar
    p["bn1_var"] = 1.0 + 0.02 * ar
    p["bn2_gamma"] = 1.0 - 0.05 * ar
    p["bn2_beta"] = -0.03 * ar
    p["bn2_mean"] = 0.02 * ar
    p["bn2_var"] = 1.0 + 0.01 * ar
    return p


def up_forward(params, x1_nchw, x2_nchw, *, compute_dtype=jnp.float32,
               max_tile_rows=128, eps=1e-5):
    # NCHW (PyTorch convention) in/out; kernels run in NHWC.
    x1 = jnp.transpose(x1_nchw, (0, 2, 3, 1))
    x2 = jnp.transpose(x2_nchw, (0, 2, 3, 1))

    x1u = conv_transpose2x2_stride2(x1, params["up_w"], params["up_b"],
                                    compute_dtype=compute_dtype,
                                    out_dtype=compute_dtype,
                                    max_tile_rows=max_tile_rows)

    diffY = x2.shape[1] - x1u.shape[1]
    diffX = x2.shape[2] - x1u.shape[2]
    # F.pad(x1, [diffX, diffX - diffX//2, diffY, diffY - diffY//2]) (as in the
    # PyTorch spec) fused with the +1 halo padding of the first 3x3 conv.
    x1p = jnp.pad(x1u.astype(compute_dtype),
                  ((0, 0),
                   (diffY + 1, diffY - diffY // 2 + 1),
                   (diffX + 1, diffX - diffX // 2 + 1),
                   (0, 0)))
    x2p = jnp.pad(x2.astype(compute_dtype), ((0, 0), (1, 1), (1, 1), (0, 0)))

    chalf = x2.shape[-1]
    w1, b1 = _fold_bn(params["c1_w"], params["c1_b"], params["bn1_gamma"],
                      params["bn1_beta"], params["bn1_mean"], params["bn1_var"], eps)
    # torch.cat([x2, x1], dim=1): x2 uses input channels [0, chalf), x1 the rest.
    w1_x2 = _conv_weight_k3(w1[:, :chalf], compute_dtype)
    w1_x1 = _conv_weight_k3(w1[:, chalf:], compute_dtype)
    y1 = conv3x3_bn_relu([x2p, x1p], [w1_x2, w1_x1], b1,
                         out_dtype=compute_dtype, max_tile_rows=max_tile_rows)

    w2, b2 = _fold_bn(params["c2_w"], params["c2_b"], params["bn2_gamma"],
                      params["bn2_beta"], params["bn2_mean"], params["bn2_var"], eps)
    y1p = jnp.pad(y1, ((0, 0), (1, 1), (1, 1), (0, 0)))
    y2 = conv3x3_bn_relu([y1p], [_conv_weight_k3(w2, compute_dtype)], b2,
                         out_dtype=jnp.float32, max_tile_rows=max_tile_rows)
    return jnp.transpose(y2, (0, 3, 1, 2))   # back to NCHW


# ----------------------------------------------------------------------------
# Pure-JAX reference (NCHW, lax.conv) for verification.
# ----------------------------------------------------------------------------
def reference_up(params, x1, x2, eps=1e-5):
    N, _, H, W = x1.shape
    D = params["up_w"].shape[1]
    up = jnp.einsum("nchw,cdab->ndhawb", x1, params["up_w"])
    up = up.reshape(N, D, 2 * H, 2 * W) + params["up_b"][None, :, None, None]
    x = jnp.concatenate([x2, up], axis=1)

    def conv_bn_relu(x, w, b, g, be, m, v):
        y = lax.conv_general_dilated(x, w, (1, 1), ((1, 1), (1, 1)),
                                     dimension_numbers=("NCHW", "OIHW", "NCHW"))
        y = y + b[None, :, None, None]
        y = (y - m[None, :, None, None]) / jnp.sqrt(v[None, :, None, None] + eps)
        y = y * g[None, :, None, None] + be[None, :, None, None]
        return jnp.maximum(y, 0.0)

    x = conv_bn_relu(x, params["c1_w"], params["c1_b"], params["bn1_gamma"],
                     params["bn1_beta"], params["bn1_mean"], params["bn1_var"])
    x = conv_bn_relu(x, params["c2_w"], params["c2_b"], params["bn2_gamma"],
                     params["bn2_beta"], params["bn2_mean"], params["bn2_var"])
    return x


if __name__ == "__main__":
    key = jax.random.PRNGKey(0)
    k1, k2, kp = jax.random.split(key, 3)

    ch_in, ch_out = 4, 4
    N, H, W = 2, 16, 16
    # x1: low-res feature map (NCHW); x2: skip connection at 2x resolution.
    x1 = jax.random.normal(k1, (N, ch_in, H, W), jnp.float32)
    x2 = jax.random.normal(k2, (N, ch_in // 2, 2 * H, 2 * W), jnp.float32)
    params = init_up_params(kp, ch_in, ch_out)

    # max_tile_rows=8 exercises the multi-tile (grid=(N, row_tiles)) path.
    fwd_f32 = jax.jit(functools.partial(up_forward, max_tile_rows=8))
    out = jax.block_until_ready(fwd_f32(params, x1, x2))
    ref = jax.block_until_ready(reference_up(params, x1, x2))
    np.testing.assert_allclose(np.asarray(out), np.asarray(ref), rtol=1e-3, atol=1e-3)
    assert out.shape == (N, ch_out, 2 * H, 2 * W)

    # bf16 MXU path (recommended on v6e/v7x): bf16 activations/weights on the
    # MXU, f32 accumulation + f32 BN/ReLU epilogue.
    fwd_bf16 = jax.jit(functools.partial(up_forward, compute_dtype=jnp.bfloat16,
                                         max_tile_rows=8))
    out_bf16 = jax.block_until_ready(fwd_bf16(params, x1, x2))
    np.testing.assert_allclose(np.asarray(out_bf16), np.asarray(ref),
                               rtol=3e-2, atol=3e-2)

    print("KERNEL_OK")
</pallas_src>

<mosaic_0001>
module attributes {stable_mosaic.version = 11 : i64} {
  func.func @kernel(%arg0: i32, %arg1: i32, %arg2: memref<1x8x16x4xf32, #tpu.memory_space<vmem>>, %arg3: memref<2x4x4xf32, #tpu.memory_space<vmem>>, %arg4: memref<1x4xf32, #tpu.memory_space<vmem>>, %arg5: memref<1x8x2x16x4xf32, #tpu.memory_space<vmem>>) attributes {dimension_semantics = [#tpu.dimension_semantics<parallel>, #tpu.dimension_semantics<parallel>], iteration_bounds = array<i64: 2, 2>, scalar_prefetch = 0 : i64, scratch_operands = 0 : i64, tpu.core_type = #tpu.core_type<tc>, window_params = [{transform_indices = @transform_0, window_bounds = array<i64: 1, 8, 16, 4>}, {pipeline_mode = #tpu.pipeline_mode<synchronous>, transform_indices = @transform_1, window_bounds = array<i64: 2, 4, 4>}, {pipeline_mode = #tpu.pipeline_mode<synchronous>, transform_indices = @transform_2, window_bounds = array<i64: 1, 4>}, {transform_indices = @transform_3, window_bounds = array<i64: 1, 8, 2, 16, 4>}]} {
    %c0 = arith.constant 0 : index
    %c0_0 = arith.constant 0 : index
    %c0_1 = arith.constant 0 : index
    %c0_2 = arith.constant 0 : index
    %0 = vector.load %arg2[%c0, %c0_0, %c0_1, %c0_2] : memref<1x8x16x4xf32, #tpu.memory_space<vmem>>, vector<1x8x16x4xf32>
    %1 = vector.shape_cast %0 : vector<1x8x16x4xf32> to vector<8x16x4xf32>
    %2 = vector.shape_cast %1 : vector<8x16x4xf32> to vector<128x4xf32>
    %c0_3 = arith.constant 0 : index
    %c0_4 = arith.constant 0 : index
    %c0_5 = arith.constant 0 : index
    %3 = vector.load %arg3[%c0_3, %c0_4, %c0_5] : memref<2x4x4xf32, #tpu.memory_space<vmem>>, vector<1x4x4xf32>
    %4 = vector.shape_cast %3 : vector<1x4x4xf32> to vector<4x4xf32>
    %cst = arith.constant dense<0.000000e+00> : vector<128x4xf32>
    %5 = tpu.matmul %2, %4, %cst {dimension_numbers = #tpu.dot_dimension_numbers<[1], [0], [0], [1], [0, 0, 1, 1], [], []>} : vector<128x4xf32>, vector<4x4xf32>, vector<128x4xf32> -> vector<128x4xf32>
    %c0_6 = arith.constant 0 : index
    %c0_7 = arith.constant 0 : index
    %6 = vector.load %arg4[%c0_6, %c0_7] : memref<1x4xf32, #tpu.memory_space<vmem>>, vector<1x4xf32>
    %7 = vector.broadcast %6 : vector<1x4xf32> to vector<128x4xf32>
    %8 = arith.addf %5, %7 : vector<128x4xf32>
    %9 = vector.shape_cast %8 : vector<128x4xf32> to vector<8x16x4xf32>
    %c0_8 = arith.constant 0 : index
    %c0_9 = arith.constant 0 : index
    %c0_10 = arith.constant 0 : index
    %c0_11 = arith.constant 0 : index
    %c0_12 = arith.constant 0 : index
    %10 = vector.load %arg5[%c0_8, %c0_9, %c0_10, %c0_11, %c0_12] : memref<1x8x2x16x4xf32, #tpu.memory_space<vmem>>, vector<1x8x1x16x4xf32>
    %11 = vector.shape_cast %10 : vector<1x8x1x16x4xf32> to vector<8x16x4xf32>
    %12 = vector.shape_cast %9 : vector<8x16x4xf32> to vector<1x8x1x16x4xf32>
    tpu.vector_store %arg5[%c0_8, %c0_9, %c0_10, %c0_11, %c0_12], %12 {strides = array<i32>} : memref<1x8x2x16x4xf32, #tpu.memory_space<vmem>>, vector<1x8x1x16x4xf32>,
    %c1 = arith.constant 1 : index
    %c0_13 = arith.constant 0 : index
    %c0_14 = arith.constant 0 : index
    %13 = vector.load %arg3[%c1, %c0_13, %c0_14] : memref<2x4x4xf32, #tpu.memory_space<vmem>>, vector<1x4x4xf32>
    %14 = vector.shape_cast %13 : vector<1x4x4xf32> to vector<4x4xf32>
    %cst_15 = arith.constant dense<0.000000e+00> : vector<128x4xf32>
    %15 = tpu.matmul %2, %14, %cst_15 {dimension_numbers = #tpu.dot_dimension_numbers<[1], [0], [0], [1], [0, 0, 1, 1], [], []>} : vector<128x4xf32>, vector<4x4xf32>, vector<128x4xf32> -> vector<128x4xf32>
    %c0_16 = arith.constant 0 : index
    %c0_17 = arith.constant 0 : index
    %16 = vector.load %arg4[%c0_16, %c0_17] : memref<1x4xf32, #tpu.memory_space<vmem>>, vector<1x4xf32>
    %17 = vector.broadcast %16 : vector<1x4xf32> to vector<128x4xf32>
    %18 = arith.addf %15, %17 : vector<128x4xf32>
    %19 = vector.shape_cast %18 : vector<128x4xf32> to vector<8x16x4xf32>
    %c0_18 = arith.constant 0 : index
    %c0_19 = arith.constant 0 : index
    %c1_20 = arith.constant 1 : index
    %c0_21 = arith.constant 0 : index
    %c0_22 = arith.constant 0 : index
    %20 = vector.load %arg5[%c0_18, %c0_19, %c1_20, %c0_21, %c0_22] : memref<1x8x2x16x4xf32, #tpu.memory_space<vmem>>, vector<1x8x1x16x4xf32>
    %21 = vector.shape_cast %20 : vector<1x8x1x16x4xf32> to vector<8x16x4xf32>
    %22 = vector.shape_cast %19 : vector<8x16x4xf32> to vector<1x8x1x16x4xf32>
    tpu.vector_store %arg5[%c0_18, %c0_19, %c1_20, %c0_21, %c0_22], %22 {strides = array<i32>} : memref<1x8x2x16x4xf32, #tpu.memory_space<vmem>>, vector<1x8x1x16x4xf32>,
    return
  }
  func.func @transform_0(%arg0: i32, %arg1: i32) -> (i32, i32, i32, i32) {
    %c0_i32 = arith.constant 0 : i32
    %c0_i32_0 = arith.constant 0 : i32
    %c0_i32_1 = arith.constant 0 : i32
    return %arg0, %arg1, %c0_i32, %c0_i32_0 : i32, i32, i32, i32
  }
  func.func @transform_1(%arg0: i32, %arg1: i32) -> (i32, i32, i32) {
    %c0_i32 = arith.constant 0 : i32
    %c0_i32_0 = arith.constant 0 : i32
    %c0_i32_1 = arith.constant 0 : i32
    %c0_i32_2 = arith.constant 0 : i32
    return %c0_i32, %c0_i32_0, %c0_i32_1 : i32, i32, i32
  }
  func.func @transform_2(%arg0: i32, %arg1: i32) -> (i32, i32) {
    %c0_i32 = arith.constant 0 : i32
    %c0_i32_0 = arith.constant 0 : i32
    %c0_i32_1 = arith.constant 0 : i32
    return %c0_i32, %c0_i32_0 : i32, i32
  }
  func.func @transform_3(%arg0: i32, %arg1: i32) -> (i32, i32, i32, i32, i32) {
    %c0_i32 = arith.constant 0 : i32
    %c0_i32_0 = arith.constant 0 : i32
    %c0_i32_1 = arith.constant 0 : i32
    %c0_i32_2 = arith.constant 0 : i32
    return %arg0, %arg1, %c0_i32, %c0_i32_0, %c0_i32_1 : i32, i32, i32, i32, i32
  }
}

module attributes {stable_mosaic.version = 11 : i64} {
  func.func @kernel(%arg0: i32, %arg1: i32, %arg2: memref<1x8x34x2xf32, #tpu.memory_space<vmem>>, %arg3: memref<1x1x2x34x2xf32, #tpu.memory_space<vmem>>, %arg4: memref<1x8x34x2xf32, #tpu.memory_space<vmem>>, %arg5: memref<1x1x2x34x2xf32, #tpu.memory_space<vmem>>, %arg6: memref<3x6x4xf32, #tpu.memory_space<vmem>>, %arg7: memref<3x6x4xf32, #tpu.memory_space<vmem>>, %arg8: memref<1x4xf32, #tpu.memory_space<vmem>>, %arg9: memref<1x256x4xf32, #tpu.memory_space<vmem>>) attributes {dimension_semantics = [#tpu.dimension_semantics<parallel>, #tpu.dimension_semantics<parallel>], iteration_bounds = array<i64: 2, 4>, scalar_prefetch = 0 : i64, scratch_operands = 0 : i64, tpu.core_type = #tpu.core_type<tc>, window_params = [{transform_indices = @transform_0, window_bounds = array<i64: 1, 8, 34, 2>}, {transform_indices = @transform_1, window_bounds = array<i64: 1, 1, 2, 34, 2>}, {transform_indices = @transform_2, window_bounds = array<i64: 1, 8, 34, 2>}, {transform_indices = @transform_3, window_bounds = array<i64: 1, 1, 2, 34, 2>}, {pipeline_mode = #tpu.pipeline_mode<synchronous>, transform_indices = @transform_4, window_bounds = array<i64: 3, 6, 4>}, {pipeline_mode = #tpu.pipeline_mode<synchronous>, transform_indices = @transform_5, window_bounds = array<i64: 3, 6, 4>}, {pipeline_mode = #tpu.pipeline_mode<synchronous>, transform_indices = @transform_6, window_bounds = array<i64: 1, 4>}, {transform_indices = @transform_7, window_bounds = array<i64: 1, 256, 4>}]} {
    %c0 = arith.constant 0 : index
    %c0_0 = arith.constant 0 : index
    %0 = vector.load %arg8[%c0, %c0_0] : memref<1x4xf32, #tpu.memory_space<vmem>>, vector<1x4xf32>
    %1 = vector.shape_cast %0 : vector<1x4xf32> to vector<1x4xf32>
    %2 = vector.broadcast %1 : vector<1x4xf32> to vector<256x4xf32>
    %c0_1 = arith.constant 0 : index
    %c0_2 = arith.constant 0 : index
    %c0_3 = arith.constant 0 : index
    %c0_4 = arith.constant 0 : index
    %3 = vector.load %arg2[%c0_1, %c0_2, %c0_3, %c0_4] : memref<1x8x34x2xf32, #tpu.memory_space<vmem>>, vector<1x8x34x2xf32>
    %4 = vector.shape_cast %3 : vector<1x8x34x2xf32> to vector<8x34x2xf32>
    %c0_5 = arith.constant 0 : index
    %c0_6 = arith.constant 0 : index
    %c0_7 = arith.constant 0 : index
    %c0_8 = arith.constant 0 : index
    %c0_9 = arith.constant 0 : index
    %5 = vector.load %arg3[%c0_5, %c0_6, %c0_7, %c0_8, %c0_9] : memref<1x1x2x34x2xf32, #tpu.memory_space<vmem>>, vector<1x1x2x34x2xf32>
    %6 = vector.shape_cast %5 : vector<1x1x2x34x2xf32> to vector<2x34x2xf32>
    %7 = tpu.concatenate %4, %6 in 0 : vector<8x34x2xf32>, vector<2x34x2xf32> -> vector<10x34x2xf32>
    %8 = vector.extract_strided_slice %7 {offsets = [0, 0, 0], sizes = [8, 34, 2], strides = [1, 1, 1]} : vector<10x34x2xf32> to vector<8x34x2xf32>
    %9 = vector.extract_strided_slice %8 {offsets = [0, 0, 0], sizes = [8, 32, 2], strides = [1, 1, 1]} : vector<8x34x2xf32> to vector<8x32x2xf32>
    %10 = vector.extract_strided_slice %8 {offsets = [0, 1, 0], sizes = [8, 32, 2], strides = [1, 1, 1]} : vector<8x34x2xf32> to vector<8x32x2xf32>
    %11 = vector.extract_strided_slice %8 {offsets = [0, 2, 0], sizes = [8, 32, 2], strides = [1, 1, 1]} : vector<8x34x2xf32> to vector<8x32x2xf32>
    %12 = tpu.concatenate %9, %10, %11 in 2 : vector<8x32x2xf32>, vector<8x32x2xf32>, vector<8x32x2xf32> -> vector<8x32x6xf32>
    %13 = vector.shape_cast %12 : vector<8x32x6xf32> to vector<256x6xf32>
    %c0_10 = arith.constant 0 : index
    %c0_11 = arith.constant 0 : index
    %c0_12 = arith.constant 0 : index
    %14 = vector.load %arg6[%c0_10, %c0_11, %c0_12] : memref<3x6x4xf32, #tpu.memory_space<vmem>>, vector<1x6x4xf32>
    %15 = vector.shape_cast %14 : vector<1x6x4xf32> to vector<6x4xf32>
    %cst = arith.constant dense<0.000000e+00> : vector<256x4xf32>
    %16 = tpu.matmul %13, %15, %cst {dimension_numbers = #tpu.dot_dimension_numbers<[1], [0], [0], [1], [0, 0, 1, 1], [], []>} : vector<256x6xf32>, vector<6x4xf32>, vector<256x4xf32> -> vector<256x4xf32>
    %17 = arith.addf %2, %16 : vector<256x4xf32>
    %18 = vector.extract_strided_slice %7 {offsets = [1, 0, 0], sizes = [8, 34, 2], strides = [1, 1, 1]} : vector<10x34x2xf32> to vector<8x34x2xf32>
    %19 = vector.extract_strided_slice %18 {offsets = [0, 0, 0], sizes = [8, 32, 2], strides = [1, 1, 1]} : vector<8x34x2xf32> to vector<8x32x2xf32>
    %20 = vector.extract_strided_slice %18 {offsets = [0, 1, 0], sizes = [8, 32, 2], strides = [1, 1, 1]} : vector<8x34x2xf32> to vector<8x32x2xf32>
    %21 = vector.extract_strided_slice %18 {offsets = [0, 2, 0], sizes = [8, 32, 2], strides = [1, 1, 1]} : vector<8x34x2xf32> to vector<8x32x2xf32>
    %22 = tpu.concatenate %19, %20, %21 in 2 : vector<8x32x2xf32>, vector<8x32x2xf32>, vector<8x32x2xf32> -> vector<8x32x6xf32>
    %23 = vector.shape_cast %22 : vector<8x32x6xf32> to vector<256x6xf32>
    %c1 = arith.constant 1 : index
    %c0_13 = arith.constant 0 : index
    %c0_14 = arith.constant 0 : index
    %24 = vector.load %arg6[%c1, %c0_13, %c0_14] : memref<3x6x4xf32, #tpu.memory_space<vmem>>, vector<1x6x4xf32>
    %25 = vector.shape_cast %24 : vector<1x6x4xf32> to vector<6x4xf32>
    %cst_15 = arith.constant dense<0.000000e+00> : vector<256x4xf32>
    %26 = tpu.matmul %23, %25, %cst_15 {dimension_numbers = #tpu.dot_dimension_numbers<[1], [0], [0], [1], [0, 0, 1, 1], [], []>} : vector<256x6xf32>, vector<6x4xf32>, vector<256x4xf32> -> vector<256x4xf32>
    %27 = arith.addf %17, %26 : vector<256x4xf32>
    %28 = vector.extract_strided_slice %7 {offsets = [2, 0, 0], sizes = [8, 34, 2], strides = [1, 1, 1]} : vector<10x34x2xf32> to vector<8x34x2xf32>
    %29 = vector.extract_strided_slice %28 {offsets = [0, 0, 0], sizes = [8, 32, 2], strides = [1, 1, 1]} : vector<8x34x2xf32> to vector<8x32x2xf32>
    %30 = vector.extract_strided_slice %28 {offsets = [0, 1, 0], sizes = [8, 32, 2], strides = [1, 1, 1]} : vector<8x34x2xf32> to vector<8x32x2xf32>
    %31 = vector.extract_strided_slice %28 {offsets = [0, 2, 0], sizes = [8, 32, 2], strides = [1, 1, 1]} : vector<8x34x2xf32> to vector<8x32x2xf32>
    %32 = tpu.concatenate %29, %30, %31 in 2 : vector<8x32x2xf32>, vector<8x32x2xf32>, vector<8x32x2xf32> -> vector<8x32x6xf32>
    %33 = vector.shape_cast %32 : vector<8x32x6xf32> to vector<256x6xf32>
    %c2 = arith.constant 2 : index
    %c0_16 = arith.constant 0 : index
    %c0_17 = arith.constant 0 : index
    %34 = vector.load %arg6[%c2, %c0_16, %c0_17] : memref<3x6x4xf32, #tpu.memory_space<vmem>>, vector<1x6x4xf32>
    %35 = vector.shape_cast %34 : vector<1x6x4xf32> to vector<6x4xf32>
    %cst_18 = arith.constant dense<0.000000e+00> : vector<256x4xf32>
    %36 = tpu.matmul %33, %35, %cst_18 {dimension_numbers = #tpu.dot_dimension_numbers<[1], [0], [0], [1], [0, 0, 1, 1], [], []>} : vector<256x6xf32>, vector<6x4xf32>, vector<256x4xf32> -> vector<256x4xf32>
    %37 = arith.addf %27, %36 : vector<256x4xf32>
    %c0_19 = arith.constant 0 : index
    %c0_20 = arith.constant 0 : index
    %c0_21 = arith.constant 0 : index
    %c0_22 = arith.constant 0 : index
    %38 = vector.load %arg4[%c0_19, %c0_20, %c0_21, %c0_22] : memref<1x8x34x2xf32, #tpu.memory_space<vmem>>, vector<1x8x34x2xf32>
    %39 = vector.shape_cast %38 : vector<1x8x34x2xf32> to vector<8x34x2xf32>
    %c0_23 = arith.constant 0 : index
    %c0_24 = arith.constant 0 : index
    %c0_25 = arith.constant 0 : index
    %c0_26 = arith.constant 0 : index
    %c0_27 = arith.constant 0 : index
    %40 = vector.load %arg5[%c0_23, %c0_24, %c0_25, %c0_26, %c0_27] : memref<1x1x2x34x2xf32, #tpu.memory_space<vmem>>, vector<1x1x2x34x2xf32>
    %41 = vector.shape_cast %40 : vector<1x1x2x34x2xf32> to vector<2x34x2xf32>
    %42 = tpu.concatenate %39, %41 in 0 : vector<8x34x2xf32>, vector<2x34x2xf32> -> vector<10x34x2xf32>
    %43 = vector.extract_strided_slice %42 {offsets = [0, 0, 0], sizes = [8, 34, 2], strides = [1, 1, 1]} : vector<10x34x2xf32> to vector<8x34x2xf32>
    %44 = vector.extract_strided_slice %43 {offsets = [0, 0, 0], sizes = [8, 32, 2], strides = [1, 1, 1]} : vector<8x34x2xf32> to vector<8x32x2xf32>
    %45 = vector.extract_strided_slice %43 {offsets = [0, 1, 0], sizes = [8, 32, 2], strides = [1, 1, 1]} : vector<8x34x2xf32> to vector<8x32x2xf32>
    %46 = vector.extract_strided_slice %43 {offsets = [0, 2, 0], sizes = [8, 32, 2], strides = [1, 1, 1]} : vector<8x34x2xf32> to vector<8x32x2xf32>
    %47 = tpu.concatenate %44, %45, %46 in 2 : vector<8x32x2xf32>, vector<8x32x2xf32>, vector<8x32x2xf32> -> vector<8x32x6xf32>
    %48 = vector.shape_cast %47 : vector<8x32x6xf32> to vector<256x6xf32>
    %c0_28 = arith.constant 0 : index
    %c0_29 = arith.constant 0 : index
    %c0_30 = arith.constant 0 : index
    %49 = vector.load %arg7[%c0_28, %c0_29, %c0_30] : memref<3x6x4xf32, #tpu.memory_space<vmem>>, vector<1x6x4xf32>
    %50 = vector.shape_cast %49 : vector<1x6x4xf32> to vector<6x4xf32>
    %cst_31 = arith.constant dense<0.000000e+00> : vector<256x4xf32>
    %51 = tpu.matmul %48, %50, %cst_31 {dimension_numbers = #tpu.dot_dimension_numbers<[1], [0], [0], [1], [0, 0, 1, 1], [], []>} : vector<256x6xf32>, vector<6x4xf32>, vector<256x4xf32> -> vector<256x4xf32>
    %52 = arith.addf %37, %51 : vector<256x4xf32>
    %53 = vector.extract_strided_slice %42 {offsets = [1, 0, 0], sizes = [8, 34, 2], strides = [1, 1, 1]} : vector<10x34x2xf32> to vector<8x34x2xf32>
    %54 = vector.extract_strided_slice %53 {offsets = [0, 0, 0], sizes = [8, 32, 2], strides = [1, 1, 1]} : vector<8x34x2xf32> to vector<8x32x2xf32>
    %55 = vector.extract_strided_slice %53 {offsets = [0, 1, 0], sizes = [8, 32, 2], strides = [1, 1, 1]} : vector<8x34x2xf32> to vector<8x32x2xf32>
    %56 = vector.extract_strided_slice %53 {offsets = [0, 2, 0], sizes = [8, 32, 2], strides = [1, 1, 1]} : vector<8x34x2xf32> to vector<8x32x2xf32>
    %57 = tpu.concatenate %54, %55, %56 in 2 : vector<8x32x2xf32>, vector<8x32x2xf32>, vector<8x32x2xf32> -> vector<8x32x6xf32>
    %58 = vector.shape_cast %57 : vector<8x32x6xf32> to vector<256x6xf32>
    %c1_32 = arith.constant 1 : index
    %c0_33 = arith.constant 0 : index
    %c0_34 = arith.constant 0 : index
    %59 = vector.load %arg7[%c1_32, %c0_33, %c0_34] : memref<3x6x4xf32, #tpu.memory_space<vmem>>, vector<1x6x4xf32>
    %60 = vector.shape_cast %59 : vector<1x6x4xf32> to vector<6x4xf32>
    %cst_35 = arith.constant dense<0.000000e+00> : vector<256x4xf32>
    %61 = tpu.matmul %58, %60, %cst_35 {dimension_numbers = #tpu.dot_dimension_numbers<[1], [0], [0], [1], [0, 0, 1, 1], [], []>} : vector<256x6xf32>, vector<6x4xf32>, vector<256x4xf32> -> vector<256x4xf32>
    %62 = arith.addf %52, %61 : vector<256x4xf32>
    %63 = vector.extract_strided_slice %42 {offsets = [2, 0, 0], sizes = [8, 34, 2], strides = [1, 1, 1]} : vector<10x34x2xf32> to vector<8x34x2xf32>
    %64 = vector.extract_strided_slice %63 {offsets = [0, 0, 0], sizes = [8, 32, 2], strides = [1, 1, 1]} : vector<8x34x2xf32> to vector<8x32x2xf32>
    %65 = vector.extract_strided_slice %63 {offsets = [0, 1, 0], sizes = [8, 32, 2], strides = [1, 1, 1]} : vector<8x34x2xf32> to vector<8x32x2xf32>
    %66 = vector.extract_strided_slice %63 {offsets = [0, 2, 0], sizes = [8, 32, 2], strides = [1, 1, 1]} : vector<8x34x2xf32> to vector<8x32x2xf32>
    %67 = tpu.concatenate %64, %65, %66 in 2 : vector<8x32x2xf32>, vector<8x32x2xf32>, vector<8x32x2xf32> -> vector<8x32x6xf32>
    %68 = vector.shape_cast %67 : vector<8x32x6xf32> to vector<256x6xf32>
    %c2_36 = arith.constant 2 : index
    %c0_37 = arith.constant 0 : index
    %c0_38 = arith.constant 0 : index
    %69 = vector.load %arg7[%c2_36, %c0_37, %c0_38] : memref<3x6x4xf32, #tpu.memory_space<vmem>>, vector<1x6x4xf32>
    %70 = vector.shape_cast %69 : vector<1x6x4xf32> to vector<6x4xf32>
    %cst_39 = arith.constant dense<0.000000e+00> : vector<256x4xf32>
    %71 = tpu.matmul %68, %70, %cst_39 {dimension_numbers = #tpu.dot_dimension_numbers<[1], [0], [0], [1], [0, 0, 1, 1], [], []>} : vector<256x6xf32>, vector<6x4xf32>, vector<256x4xf32> -> vector<256x4xf32>
    %72 = arith.addf %62, %71 : vector<256x4xf32>
    %cst_40 = arith.constant 0.000000e+00 : f32
    %73 = vector.broadcast %cst_40 : f32 to vector<256x4xf32>
    %74 = arith.maximumf %72, %73 : vector<256x4xf32>
    %c0_41 = arith.constant 0 : index
    %c0_42 = arith.constant 0 : index
    %c0_43 = arith.constant 0 : index
    %75 = vector.load %arg9[%c0_41, %c0_42, %c0_43] : memref<1x256x4xf32, #tpu.memory_space<vmem>>, vector<1x256x4xf32>
    %76 = vector.shape_cast %75 : vector<1x256x4xf32> to vector<256x4xf32>
    %77 = vector.shape_cast %74 : vector<256x4xf32> to vector<1x256x4xf32>
    tpu.vector_store %arg9[%c0_41, %c0_42, %c0_43], %77 {strides = array<i32>} : memref<1x256x4xf32, #tpu.memory_space<vmem>>, vector<1x256x4xf32>,
    return
  }
  func.func @transform_0(%arg0: i32, %arg1: i32) -> (i32, i32, i32, i32) {
    %c0_i32 = arith.constant 0 : i32
    %c0_i32_0 = arith.constant 0 : i32
    %c0_i32_1 = arith.constant 0 : i32
    return %arg0, %arg1, %c0_i32, %c0_i32_0 : i32, i32, i32, i32
  }
  func.func @transform_1(%arg0: i32, %arg1: i32) -> (i32, i32, i32, i32, i32) {
    %c0_i32 = arith.constant 0 : i32
    %c0_i32_0 = arith.constant 0 : i32
    %c0_i32_1 = arith.constant 0 : i32
    %c0_i32_2 = arith.constant 0 : i32
    return %arg0, %arg1, %c0_i32, %c0_i32_0, %c0_i32_1 : i32, i32, i32, i32, i32
  }
  func.func @transform_2(%arg0: i32, %arg1: i32) -> (i32, i32, i32, i32) {
    %c0_i32 = arith.constant 0 : i32
    %c0_i32_0 = arith.constant 0 : i32
    %c0_i32_1 = arith.constant 0 : i32
    return %arg0, %arg1, %c0_i32, %c0_i32_0 : i32, i32, i32, i32
  }
  func.func @transform_3(%arg0: i32, %arg1: i32) -> (i32, i32, i32, i32, i32) {
    %c0_i32 = arith.constant 0 : i32
    %c0_i32_0 = arith.constant 0 : i32
    %c0_i32_1 = arith.constant 0 : i32
    %c0_i32_2 = arith.constant 0 : i32
    return %arg0, %arg1, %c0_i32, %c0_i32_0, %c0_i32_1 : i32, i32, i32, i32, i32
  }
  func.func @transform_4(%arg0: i32, %arg1: i32) -> (i32, i32, i32) {
    %c0_i32 = arith.constant 0 : i32
    %c0_i32_0 = arith.constant 0 : i32
    %c0_i32_1 = arith.constant 0 : i32
    %c0_i32_2 = arith.constant 0 : i32
    return %c0_i32, %c0_i32_0, %c0_i32_1 : i32, i32, i32
  }
  func.func @transform_5(%arg0: i32, %arg1: i32) -> (i32, i32, i32) {
    %c0_i32 = arith.constant 0 : i32
    %c0_i32_0 = arith.constant 0 : i32
    %c0_i32_1 = arith.constant 0 : i32
    %c0_i32_2 = arith.constant 0 : i32
    return %c0_i32, %c0_i32_0, %c0_i32_1 : i32, i32, i32
  }
  func.func @transform_6(%arg0: i32, %arg1: i32) -> (i32, i32) {
    %c0_i32 = arith.constant 0 : i32
    %c0_i32_0 = arith.constant 0 : i32
    %c0_i32_1 = arith.constant 0 : i32
    return %c0_i32, %c0_i32_0 : i32, i32
  }
  func.func @transform_7(%arg0: i32, %arg1: i32) -> (i32, i32, i32) {
    %c0_i32 = arith.constant 0 : i32
    %c0_i32_0 = arith.constant 0 : i32
    return %arg0, %arg1, %c0_i32 : i32, i32, i32
  }
}

module attributes {stable_mosaic.version = 11 : i64} {
  func.func @kernel(%arg0: i32, %arg1: i32, %arg2: memref<1x8x34x4xf32, #tpu.memory_space<vmem>>, %arg3: memref<1x1x2x34x4xf32, #tpu.memory_space<vmem>>, %arg4: memref<3x12x4xf32, #tpu.memory_space<vmem>>, %arg5: memref<1x4xf32, #tpu.memory_space<vmem>>, %arg6: memref<1x256x4xf32, #tpu.memory_space<vmem>>) attributes {dimension_semantics = [#tpu.dimension_semantics<parallel>, #tpu.dimension_semantics<parallel>], iteration_bounds = array<i64: 2, 4>, scalar_prefetch = 0 : i64, scratch_operands = 0 : i64, tpu.core_type = #tpu.core_type<tc>, window_params = [{transform_indices = @transform_0, window_bounds = array<i64: 1, 8, 34, 4>}, {transform_indices = @transform_1, window_bounds = array<i64: 1, 1, 2, 34, 4>}, {pipeline_mode = #tpu.pipeline_mode<synchronous>, transform_indices = @transform_2, window_bounds = array<i64: 3, 12, 4>}, {pipeline_mode = #tpu.pipeline_mode<synchronous>, transform_indices = @transform_3, window_bounds = array<i64: 1, 4>}, {transform_indices = @transform_4, window_bounds = array<i64: 1, 256, 4>}]} {
    %c0 = arith.constant 0 : index
    %c0_0 = arith.constant 0 : index
    %0 = vector.load %arg5[%c0, %c0_0] : memref<1x4xf32, #tpu.memory_space<vmem>>, vector<1x4xf32>
    %1 = vector.shape_cast %0 : vector<1x4xf32> to vector<1x4xf32>
    %2 = vector.broadcast %1 : vector<1x4xf32> to vector<256x4xf32>
    %c0_1 = arith.constant 0 : index
    %c0_2 = arith.constant 0 : index
    %c0_3 = arith.constant 0 : index
    %c0_4 = arith.constant 0 : index
    %3 = vector.load %arg2[%c0_1, %c0_2, %c0_3, %c0_4] : memref<1x8x34x4xf32, #tpu.memory_space<vmem>>, vector<1x8x34x4xf32>
    %4 = vector.shape_cast %3 : vector<1x8x34x4xf32> to vector<8x34x4xf32>
    %c0_5 = arith.constant 0 : index
    %c0_6 = arith.constant 0 : index
    %c0_7 = arith.constant 0 : index
    %c0_8 = arith.constant 0 : index
    %c0_9 = arith.constant 0 : index
    %5 = vector.load %arg3[%c0_5, %c0_6, %c0_7, %c0_8, %c0_9] : memref<1x1x2x34x4xf32, #tpu.memory_space<vmem>>, vector<1x1x2x34x4xf32>
    %6 = vector.shape_cast %5 : vector<1x1x2x34x4xf32> to vector<2x34x4xf32>
    %7 = tpu.concatenate %4, %6 in 0 : vector<8x34x4xf32>, vector<2x34x4xf32> -> vector<10x34x4xf32>
    %8 = vector.extract_strided_slice %7 {offsets = [0, 0, 0], sizes = [8, 34, 4], strides = [1, 1, 1]} : vector<10x34x4xf32> to vector<8x34x4xf32>
    %9 = vector.extract_strided_slice %8 {offsets = [0, 0, 0], sizes = [8, 32, 4], strides = [1, 1, 1]} : vector<8x34x4xf32> to vector<8x32x4xf32>
    %10 = vector.extract_strided_slice %8 {offsets = [0, 1, 0], sizes = [8, 32, 4], strides = [1, 1, 1]} : vector<8x34x4xf32> to vector<8x32x4xf32>
    %11 = vector.extract_strided_slice %8 {offsets = [0, 2, 0], sizes = [8, 32, 4], strides = [1, 1, 1]} : vector<8x34x4xf32> to vector<8x32x4xf32>
    %12 = tpu.concatenate %9, %10, %11 in 2 : vector<8x32x4xf32>, vector<8x32x4xf32>, vector<8x32x4xf32> -> vector<8x32x12xf32>
    %13 = vector.shape_cast %12 : vector<8x32x12xf32> to vector<256x12xf32>
    %c0_10 = arith.constant 0 : index
    %c0_11 = arith.constant 0 : index
    %c0_12 = arith.constant 0 : index
    %14 = vector.load %arg4[%c0_10, %c0_11, %c0_12] : memref<3x12x4xf32, #tpu.memory_space<vmem>>, vector<1x12x4xf32>
    %15 = vector.shape_cast %14 : vector<1x12x4xf32> to vector<12x4xf32>
    %cst = arith.constant dense<0.000000e+00> : vector<256x4xf32>
    %16 = tpu.matmul %13, %15, %cst {dimension_numbers = #tpu.dot_dimension_numbers<[1], [0], [0], [1], [0, 0, 1, 1], [], []>} : vector<256x12xf32>, vector<12x4xf32>, vector<256x4xf32> -> vector<256x4xf32>
    %17 = arith.addf %2, %16 : vector<256x4xf32>
    %18 = vector.extract_strided_slice %7 {offsets = [1, 0, 0], sizes = [8, 34, 4], strides = [1, 1, 1]} : vector<10x34x4xf32> to vector<8x34x4xf32>
    %19 = vector.extract_strided_slice %18 {offsets = [0, 0, 0], sizes = [8, 32, 4], strides = [1, 1, 1]} : vector<8x34x4xf32> to vector<8x32x4xf32>
    %20 = vector.extract_strided_slice %18 {offsets = [0, 1, 0], sizes = [8, 32, 4], strides = [1, 1, 1]} : vector<8x34x4xf32> to vector<8x32x4xf32>
    %21 = vector.extract_strided_slice %18 {offsets = [0, 2, 0], sizes = [8, 32, 4], strides = [1, 1, 1]} : vector<8x34x4xf32> to vector<8x32x4xf32>
    %22 = tpu.concatenate %19, %20, %21 in 2 : vector<8x32x4xf32>, vector<8x32x4xf32>, vector<8x32x4xf32> -> vector<8x32x12xf32>
    %23 = vector.shape_cast %22 : vector<8x32x12xf32> to vector<256x12xf32>
    %c1 = arith.constant 1 : index
    %c0_13 = arith.constant 0 : index
    %c0_14 = arith.constant 0 : index
    %24 = vector.load %arg4[%c1, %c0_13, %c0_14] : memref<3x12x4xf32, #tpu.memory_space<vmem>>, vector<1x12x4xf32>
    %25 = vector.shape_cast %24 : vector<1x12x4xf32> to vector<12x4xf32>
    %cst_15 = arith.constant dense<0.000000e+00> : vector<256x4xf32>
    %26 = tpu.matmul %23, %25, %cst_15 {dimension_numbers = #tpu.dot_dimension_numbers<[1], [0], [0], [1], [0, 0, 1, 1], [], []>} : vector<256x12xf32>, vector<12x4xf32>, vector<256x4xf32> -> vector<256x4xf32>
    %27 = arith.addf %17, %26 : vector<256x4xf32>
    %28 = vector.extract_strided_slice %7 {offsets = [2, 0, 0], sizes = [8, 34, 4], strides = [1, 1, 1]} : vector<10x34x4xf32> to vector<8x34x4xf32>
    %29 = vector.extract_strided_slice %28 {offsets = [0, 0, 0], sizes = [8, 32, 4], strides = [1, 1, 1]} : vector<8x34x4xf32> to vector<8x32x4xf32>
    %30 = vector.extract_strided_slice %28 {offsets = [0, 1, 0], sizes = [8, 32, 4], strides = [1, 1, 1]} : vector<8x34x4xf32> to vector<8x32x4xf32>
    %31 = vector.extract_strided_slice %28 {offsets = [0, 2, 0], sizes = [8, 32, 4], strides = [1, 1, 1]} : vector<8x34x4xf32> to vector<8x32x4xf32>
    %32 = tpu.concatenate %29, %30, %31 in 2 : vector<8x32x4xf32>, vector<8x32x4xf32>, vector<8x32x4xf32> -> vector<8x32x12xf32>
    %33 = vector.shape_cast %32 : vector<8x32x12xf32> to vector<256x12xf32>
    %c2 = arith.constant 2 : index
    %c0_16 = arith.constant 0 : index
    %c0_17 = arith.constant 0 : index
    %34 = vector.load %arg4[%c2, %c0_16, %c0_17] : memref<3x12x4xf32, #tpu.memory_space<vmem>>, vector<1x12x4xf32>
    %35 = vector.shape_cast %34 : vector<1x12x4xf32> to vector<12x4xf32>
    %cst_18 = arith.constant dense<0.000000e+00> : vector<256x4xf32>
    %36 = tpu.matmul %33, %35, %cst_18 {dimension_numbers = #tpu.dot_dimension_numbers<[1], [0], [0], [1], [0, 0, 1, 1], [], []>} : vector<256x12xf32>, vector<12x4xf32>, vector<256x4xf32> -> vector<256x4xf32>
    %37 = arith.addf %27, %36 : vector<256x4xf32>
    %cst_19 = arith.constant 0.000000e+00 : f32
    %38 = vector.broadcast %cst_19 : f32 to vector<256x4xf32>
    %39 = arith.maximumf %37, %38 : vector<256x4xf32>
    %c0_20 = arith.constant 0 : index
    %c0_21 = arith.constant 0 : index
    %c0_22 = arith.constant 0 : index
    %40 = vector.load %arg6[%c0_20, %c0_21, %c0_22] : memref<1x256x4xf32, #tpu.memory_space<vmem>>, vector<1x256x4xf32>
    %41 = vector.shape_cast %40 : vector<1x256x4xf32> to vector<256x4xf32>
    %42 = vector.shape_cast %39 : vector<256x4xf32> to vector<1x256x4xf32>
    tpu.vector_store %arg6[%c0_20, %c0_21, %c0_22], %42 {strides = array<i32>} : memref<1x256x4xf32, #tpu.memory_space<vmem>>, vector<1x256x4xf32>,
    return
  }
  func.func @transform_0(%arg0: i32, %arg1: i32) -> (i32, i32, i32, i32) {
    %c0_i32 = arith.constant 0 : i32
    %c0_i32_0 = arith.constant 0 : i32
    %c0_i32_1 = arith.constant 0 : i32
    return %arg0, %arg1, %c0_i32, %c0_i32_0 : i32, i32, i32, i32
  }
  func.func @transform_1(%arg0: i32, %arg1: i32) -> (i32, i32, i32, i32, i32) {
    %c0_i32 = arith.constant 0 : i32
    %c0_i32_0 = arith.constant 0 : i32
    %c0_i32_1 = arith.constant 0 : i32
    %c0_i32_2 = arith.constant 0 : i32
    return %arg0, %arg1, %c0_i32, %c0_i32_0, %c0_i32_1 : i32, i32, i32, i32, i32
  }
  func.func @transform_2(%arg0: i32, %arg1: i32) -> (i32, i32, i32) {
    %c0_i32 = arith.constant 0 : i32
    %c0_i32_0 = arith.constant 0 : i32
    %c0_i32_1 = arith.constant 0 : i32
    %c0_i32_2 = arith.constant 0 : i32
    return %c0_i32, %c0_i32_0, %c0_i32_1 : i32, i32, i32
  }
  func.func @transform_3(%arg0: i32, %arg1: i32) -> (i32, i32) {
    %c0_i32 = arith.constant 0 : i32
    %c0_i32_0 = arith.constant 0 : i32
    %c0_i32_1 = arith.constant 0 : i32
    return %c0_i32, %c0_i32_0 : i32, i32
  }
  func.func @transform_4(%arg0: i32, %arg1: i32) -> (i32, i32, i32) {
    %c0_i32 = arith.constant 0 : i32
    %c0_i32_0 = arith.constant 0 : i32
    return %arg0, %arg1, %c0_i32 : i32, i32, i32
  }
}

</mosaic_0001>

<llo_original>
// kernel: tile.8
$region0: #{tile.8}
  #allocation0 [shape = 's32[1]{0}', space=sflag, size = 0x4, scoped, tag = 'scoped memory for tile.8']
  %s0 = inlined_call_operand.vmem [shape: f32[2], index: 0, kind: input, shape index: {}]
  %s1 = inlined_call_operand.vmem [shape: f32[2,2], index: 1, kind: output, shape index: {}]
  // Predicated region
  $region2: #{tile.8} parent=0 // pred_check
    _
  $region3: #{tile.8} parent=0 // pred_check_branch
    %3 = sbr.rel (0) target = $region5
  $region4: #{tile.8} parent=0 // pred_region
    _
  $region5: #{tile.8} parent=0 // pred_fallthru
    _
  %v4 = vld [vmem:[%s0] ss:$0 sm:$0xff]
  %5 = vst [vmem:[%s1] sm:$0x3] %v4

// kernel: tile.9
$region0: #{tile.9}
  %s0 = inlined_call_operand.vmem [shape: f32[2,2], index: 0, kind: input, shape index: {}]
  %s1 = inlined_call_operand.vmem [shape: f32[1,4], index: 1, kind: output, shape index: {}]
  $region1: #{tile.9} parent=0
    #allocation0 [shape = 'u8[4096]{0}', space=vmem, size = 0x1000, scoped, tag = 'scoped mem for output reshape']
    #allocation1 [shape = 'u8[4096]{0}', space=vmem, size = 0x1000, scoped, tag = 'scoped mem for input reshape']
    %s3 = sshllo.u32 0, 2
    %v4 = vld [vmem:[%s0] sm:%s3]
    %5 = vst [vmem:[#allocation1] sm:%s3] %v4
    %v6 = vld [vmem:[#allocation1] sm:$0x1]
    %vm7 = vcmask 15360
    %8 = vst.msk [vmem:[#allocation0] sm:$0x1] %vm7, %v6
    %s9 = scalar_lea.vmem [#allocation1], 1
    %v10 = vld [vmem:[%s9] sm:$0x1]
    %11 = vrot.lane.b32.xlu0 %v10, 2
    %v12 = vpop.permute.xlu0 %11
    %vm13 = vcmask 31760
    %14 = vst.msk [vmem:[#allocation0] sm:$0x1] %vm13, %v12
    %s16 = sshllo.u32 0, 1
    %v18 = vld [vmem:[#allocation0] sm:%s16]
    %s19 = sshllo.u32 0, 1
    %20 = vst [vmem:[%s1] sm:%s19] %v18

// kernel: up_forward.3
$region0: #{up_forward.3}
  #allocation0 [shape = 'u32[]', space=smem, size = 0x4, offset = 0x4, fixed_abs, tag = 'smem constant byte address 0x4 - core index']
  #allocation1 [shape = 'u32[144,128]{1,0:T(1,128)}', space=vmem, size = 0x12000, scoped, tag = 'internal scratch']
  %s0 = inlined_call_operand.vmem [shape: f32[2,16,16,4], index: 0, kind: input, shape index: {}]
  %s1 = inlined_call_operand.vmem [shape: f32[2,4,4], index: 1, kind: input, shape index: {}]
  %s2 = inlined_call_operand.vmem [shape: f32[1,4], index: 2, kind: input, shape index: {}]
  %s3 = inlined_call_operand.vmem [shape: f32[2,16,2,16,4], index: 3, kind: output, shape index: {}]
  %s4 = sld [smem:[#allocation0]]
  $region45: #{up_forward.3} parent=0
    _
  %s6 = ssub.s32 1, %s4
  %s7 = scalar_select 0, %s6, %s4
  loop: start=0, step=1, limit=6
  $region2: #{up_forward.3} parent=0 // loop_pre_header
    _
  $region3: #{up_forward.3} parent=0 // loop_header
    %s9 = sphi 0, %s13
    %p10 = scmp.ge.s32.totalorder %s9, 6
    %s16 = sphi 0, %s28
    %s17 = sphi 0, %s24
    %s18 = sphi 0, %s16
    %s19 = sphi 0, %s17
    %s20 = sphi 0, %s18
    %s21 = sphi 0, %s19
    %s33 = sphi 0, %s35
    %s36 = sphi 0, %s33
    %s37 = sphi 0, %s36
    %s53 = sphi 0, %s37
    %s57 = sphi 0, %s57
    %s59 = sphi 0, %s57
    %s60 = sphi 0, %s59
    %s74 = sphi 0, %s60
    %s78 = sphi 0, %s78
    %s80 = sphi 0, %s78
    %s81 = sphi 0, %s80
    %s95 = sphi 0, %s81
    %s103 = sphi 0, %s105
    %s106 = sphi 0, %s103
    %s107 = sphi 0, %s106
    %s123 = sphi 0, %s107
  $region4: #{up_forward.3} parent=0 // loop_header_branch
    %12 = sbr.rel (%p10) target = $region8
  $region5: #{up_forward.3} parent=0 // loop_body
    %s14 = ssub.s32 %s9, 1
    %s15 = ssub.s32 %s9, 2
    %s22 = sadd.s32 1, %s17
    %p23 = scmp.ge.s32.totalorder %s22, 2
    %s24 = scalar_select %p23, 0, %s22
    %s25 = sadd.s32 1, %s16
    %s26 = scalar_select %p23, %s25, %s16
    %p27 = scmp.ge.s32.totalorder %s26, 2
    %s28 = scalar_select %p27, 0, %s26
    %s29 = ssub.s32 %s16, %s28
    %s30 = ssub.s32 %s17, %s24
    %s31 = sor.u32 %s29, %s30
    %p32 = scmp.eq.s32.totalorder %s31, 0
    %s34 = sadd.s32 %s33, 1
    %s35 = scalar_select %p32, %s33, %s34
    %p38 = pneg %p32
    %p39 = scmp.eq.s32.totalorder %s9, 3
    %p40 = por %p38, %p39
    %p41 = scmp.ne.s32.totalorder %s33, %s36
    %p42 = scmp.eq.s32.totalorder %s9, 0
    %p43 = por %p41, %p42
    %p44 = scmp.ne.s32.totalorder %s33, %s36
    %p45 = scmp.eq.s32.totalorder %s14, 3
    %p46 = por %p44, %p45
    %p47 = scmp.ne.s32.totalorder %s36, %s37
    %p48 = scmp.eq.s32.totalorder %s14, 0
    %p49 = por %p47, %p48
    %p50 = scmp.ne.s32.totalorder %s36, %s37
    %p51 = scmp.eq.s32.totalorder %s15, 3
    %p52 = por %p50, %p51
    %p54 = scmp.ne.s32.totalorder %s37, %s53
    %p55 = scmp.eq.s32.totalorder %s15, 0
    %p56 = por %p54, %p55
    %s58 = sadd.s32 %s57, 1
    %p61 = scmp.eq.s32.totalorder %s9, 3
    %p62 = scmp.ne.s32.totalorder %s57, %s59
    %p63 = scmp.eq.s32.totalorder %s9, 0
    %p64 = por %p62, %p63
    %p65 = scmp.ne.s32.totalorder %s57, %s59
    %p66 = scmp.eq.s32.totalorder %s14, 3
    %p67 = por %p65, %p66
    %p68 = scmp.ne.s32.totalorder %s59, %s60
    %p69 = scmp.eq.s32.totalorder %s14, 0
    %p70 = por %p68, %p69
    %p71 = scmp.ne.s32.totalorder %s59, %s60
    %p72 = scmp.eq.s32.totalorder %s15, 3
    %p73 = por %p71, %p72
    %p75 = scmp.ne.s32.totalorder %s60, %s74
    %p76 = scmp.eq.s32.totalorder %s15, 0
    %p77 = por %p75, %p76
    %s79 = sadd.s32 %s78, 1
    %p82 = scmp.eq.s32.totalorder %s9, 3
    %p83 = scmp.ne.s32.totalorder %s78, %s80
    %p84 = scmp.eq.s32.totalorder %s9, 0
    %p85 = por %p83, %p84
    %p86 = scmp.ne.s32.totalorder %s78, %s80
    %p87 = scmp.eq.s32.totalorder %s14, 3
    %p88 = por %p86, %p87
    %p89 = scmp.ne.s32.totalorder %s80, %s81
    %p90 = scmp.eq.s32.totalorder %s14, 0
    %p91 = por %p89, %p90
    %p92 = scmp.ne.s32.totalorder %s80, %s81
    %p93 = scmp.eq.s32.totalorder %s15, 3
    %p94 = por %p92, %p93
    %p96 = scmp.ne.s32.totalorder %s81, %s95
    %p97 = scmp.eq.s32.totalorder %s15, 0
    %p98 = por %p96, %p97
    %s99 = ssub.s32 %s16, %s28
    %s100 = ssub.s32 %s17, %s24
    %s101 = sor.u32 %s99, %s100
    %p102 = scmp.eq.s32.totalorder %s101, 0
    %s104 = sadd.s32 %s103, 1
    %s105 = scalar_select %p102, %s103, %s104
    %p108 = pneg %p102
    %p109 = scmp.eq.s32.totalorder %s9, 3
    %p110 = por %p108, %p109
    %p111 = scmp.ne.s32.totalorder %s103, %s106
    %p112 = scmp.eq.s32.totalorder %s9, 0
    %p113 = por %p111, %p112
    %p114 = scmp.ne.s32.totalorder %s103, %s106
    %p115 = scmp.eq.s32.totalorder %s14, 3
    %p116 = por %p114, %p115
    %p117 = scmp.ne.s32.totalorder %s106, %s107
    %p118 = scmp.eq.s32.totalorder %s14, 0
    %p119 = por %p117, %p118
    %p120 = scmp.ne.s32.totalorder %s106, %s107
    %p121 = scmp.eq.s32.totalorder %s15, 3
    %p122 = por %p120, %p121
    %p124 = scmp.ne.s32.totalorder %s107, %s123
    %p125 = scmp.eq.s32.totalorder %s15, 0
    %p126 = por %p124, %p125
    %p127 = scmp.le.s32.totalorder 1, %s9
    %p128 = scmp.lt.s32.totalorder %s9, 5
    %p129 = pnand %p127, %p128
    %p130 = pneg %p129
    // Predicated region
    $region9: #{up_forward.3} parent=5 // pred_check
      _
    $region10: #{up_forward.3} parent=5 // pred_check_branch
      %132 = sbr.rel (%p129) target = $region12
    $region11: #{up_forward.3} parent=5 // pred_region
      %s133 = ssub.s32 %s9, 1
      // Predicated region
      $region13: #{up_forward.3} parent=11 // pred_check
        %p134 = pneg %p70
      $region14: #{up_forward.3} parent=11 // pred_check_branch
        %136 = sbr.rel (%p134) target = $region16
      $region15: #{up_forward.3} parent=11 // pred_region
        _
      $region16: #{up_forward.3} parent=11 // pred_fallthru
        _
      // Predicated region
      $region17: #{up_forward.3} parent=11 // pred_check
        %p137 = pneg %p91
      $region18: #{up_forward.3} parent=11 // pred_check_branch
        %139 = sbr.rel (%p137) target = $region20
      $region19: #{up_forward.3} parent=11 // pred_region
        _
      $region20: #{up_forward.3} parent=11 // pred_fallthru
        _
    $region12: #{up_forward.3} parent=5 // pred_fallthru
      _
    %p140 = scmp.lt.s32.totalorder %s9, 4
    // Predicated region
    $region21: #{up_forward.3} parent=5 // pred_check
      %p141 = pneg %p140
    $region22: #{up_forward.3} parent=5 // pred_check_branch
      %143 = sbr.rel (%p141) target = $region24
    $region23: #{up_forward.3} parent=5 // pred_region
      // Predicated region
      $region25: #{up_forward.3} parent=23 // pred_check
        %p144 = pneg %p43
      $region26: #{up_forward.3} parent=23 // pred_check_branch
        %146 = sbr.rel (%p144) target = $region28
      $region27: #{up_forward.3} parent=23 // pred_region
        %s147 = smul.u32 8, %s17
        %p148 = scmp.lt.s32.totalorder %s16, 1
        %s149 = scalar_select %p148, %s16, 1
        %p150 = scmp.lt.s32.totalorder %s147, 15
        %s151 = scalar_select %p150, %s147, 15
        %s152 = smul.addr %s151, 2
        %s153 = smul.addr %s149, 32
        %s154 = sadd.s32 %s152, %s153
        %s155 = smul.addr %s154, 8
        %s156 = scalar_lea.vmem %s0, %s155
        %s157 = smul.u32 8, %s17
      $region28: #{up_forward.3} parent=23 // pred_fallthru
        _
    $region24: #{up_forward.3} parent=5 // pred_fallthru
      _
    %p158 = scmp.le.s32.totalorder 1, %s9
    %p159 = scmp.lt.s32.totalorder %s9, 5
    %p160 = pnand %p158, %p159
    %p161 = pneg %p160
    // Predicated region
    $region29: #{up_forward.3} parent=5 // pred_check
      _
    $region30: #{up_forward.3} parent=5 // pred_check_branch
      %163 = sbr.rel (%p160) target = $region32
    $region31: #{up_forward.3} parent=5 // pred_region
      %s164 = ssub.s32 %s9, 1
      %s165 = smul.u32 8, %s19
      %p166 = scmp.lt.s32.totalorder %s18, 1
      %s167 = scalar_select %p166, %s18, 1
      %p168 = scmp.lt.s32.totalorder %s165, 15
      %s169 = scalar_select %p168, %s165, 15
      %s170 = smul.addr %s169, 2
      %s171 = smul.addr %s167, 32
      %s172 = sadd.s32 %s170, %s171
      %s173 = smul.addr %s172, 8
      %s174 = scalar_lea.vmem %s0, %s173
      %p175 = pneg %p49
      %p176 = pneg %p46
      %p177 = pneg %p70
      %p178 = pneg %p67
      %p179 = pneg %p91
      %p180 = pneg %p88
      %p181 = pneg %p119
      %p182 = pneg %p116
      %s183 = smul.u32 8, %s19
      %p184 = scmp.lt.s32.totalorder %s18, 1
      %s185 = scalar_select %p184, %s18, 1
      %p186 = scmp.lt.s32.totalorder %s183, 15
      %s187 = scalar_select %p186, %s183, 15
      %s188 = smul.addr %s187, 4
      %s189 = smul.addr %s185, 64
      %s190 = sadd.s32 %s188, %s189
      %s191 = smul.addr %s190, 8
      %s192 = scalar_lea.vmem %s3, %s191
      %s193 = smul.u32 8, %s19
      %p194 = scmp.lt.s32.totalorder %s18, 1
      %s195 = scalar_select %p194, %s18, 1
      %p196 = scmp.lt.s32.totalorder %s193, 15
      %s197 = scalar_select %p196, %s193, 15
      %s198 = smul.addr %s197, 2
      %s199 = smul.addr %s195, 32
      %s200 = sadd.s32 %s198, %s199
      %s201 = smul.addr %s200, 8
      %s202 = scalar_lea.vmem %s0, %s201
      %s203 = smul.u32 8, %s19
      %s204 = smul.u32 8, %s19
      %p205 = scmp.lt.s32.totalorder %s18, 1
      %s206 = scalar_select %p205, %s18, 1
      %p207 = scmp.lt.s32.totalorder %s204, 15
      %s208 = scalar_select %p207, %s204, 15
      %s209 = smul.addr %s208, 4
      %s210 = smul.addr %s206, 64
      %s211 = sadd.s32 %s209, %s210
      %s212 = smul.addr %s211, 8
      %s213 = scalar_lea.vmem %s3, %s212
      %s214 = smul.u32 8, %s19
      %v215 = vld [vmem:[%s202] sm:$0xff]
      %v216 = vld [vmem:[%s202 + $0x8] sm:$0xff]
      %v217 = vld [vmem:[%s202 + $0x10] sm:$0xff]
      %v218 = vld [vmem:[%s202 + $0x18] sm:$0xff]
      %v219 = vld [vmem:[%s202 + $0x20] sm:$0xff]
      %v220 = vld [vmem:[%s202 + $0x28] sm:$0xff]
      %v221 = vld [vmem:[%s202 + $0x30] sm:$0xff]
      %v222 = vld [vmem:[%s202 + $0x38] sm:$0xff]
      %v223 = vld [vmem:[%s202 + $0x40] sm:$0xff]
      %v224 = vld [vmem:[%s202 + $0x48] sm:$0xff]
      %v225 = vld [vmem:[%s202 + $0x50] sm:$0xff]
      %v226 = vld [vmem:[%s202 + $0x58] sm:$0xff]
      %v227 = vld [vmem:[%s202 + $0x60] sm:$0xff]
      %v228 = vld [vmem:[%s202 + $0x68] sm:$0xff]
      %v229 = vld [vmem:[%s202 + $0x70] sm:$0xff]
      %v230 = vld [vmem:[%s202 + $0x78] sm:$0xff]
      %v231 = vld [vmem:[%s1] sm:$0xf]
      %v232 = vld [vmem:[%s2] sm:$0x1]
      %v234 = vlaneseq
      %v235 = vshrl.u32 %v234, 7
      %v236 = vsub.s32 0, %v235
      %v237 = vrot.slane %v232, %v236
      %vm239 = vcmask 31744
      %v241 = vsel %vm239, %v215, 0
      %v244 = vsel %vm239, %v216, 0
      %v247 = vsel %vm239, %v217, 0
      %v250 = vsel %vm239, %v218, 0
      %v253 = vsel %vm239, %v219, 0
      %v256 = vsel %vm239, %v220, 0
      %v259 = vsel %vm239, %v221, 0
      %v262 = vsel %vm239, %v222, 0
      %v265 = vsel %vm239, %v223, 0
      %v268 = vsel %vm239, %v224, 0
      %v271 = vsel %vm239, %v225, 0
      %v274 = vsel %vm239, %v226, 0
      %v277 = vsel %vm239, %v227, 0
      %v280 = vsel %vm239, %v228, 0
      %v283 = vsel %vm239, %v229, 0
      %v286 = vsel %vm239, %v230, 0
      %vm288 = vcmask 1043456
      %v290 = vsel %vm288, %v231, 0
      %292 = vmatprep.subr.mxu0 0.0
      %293 = vmatpush1.msra.mxu0 %v290
      %294 = vmatprep.subr.mxu0 0.0
      %295 = vmatpush1.msra.mxu0 0.0
      %296 = vmatprep.subr.mxu0 0.0
      %297 = vmatpush1.msra.mxu0 0.0
      %298 = vmatprep.subr.mxu0 0.0
      %299 = vmatpush1.msra.mxu0 0.0
      %300 = vmatprep.subr.mxu0 0.0
      %301 = vmatpush1.msra.mxu0 0.0
      %302 = vmatprep.subr.mxu0 0.0
      %303 = vmatpush1.msra.mxu0 0.0
      %304 = vmatprep.subr.mxu0 0.0
      %305 = vmatpush1.msra.mxu0 0.0
      %306 = vmatprep.subr.mxu0 0.0
      %307 = vmatpush1.msra.mxu0 0.0
      %308 = vmatprep.subr.mxu0 0.0
      %309 = vmatpush1.msra.mxu0 0.0
      %310 = vmatprep.subr.mxu0 0.0
      %311 = vmatpush1.msra.mxu0 0.0
      %312 = vmatprep.subr.mxu0 0.0
      %313 = vmatpush1.msra.mxu0 0.0
      %314 = vmatprep.subr.mxu0 0.0
      %315 = vmatpush1.msra.mxu0 0.0
      %316 = vmatprep.subr.mxu0 0.0
      %317 = vmatpush1.msra.mxu0 0.0
      %318 = vmatprep.subr.mxu0 0.0
      %319 = vmatpush1.msra.mxu0 0.0
      %320 = vmatprep.subr.mxu0 0.0
      %321 = vmatpush1.msra.mxu0 0.0
      %322 = vmatprep.subr.mxu0 0.0
      %323 = vmatpush1.msra.mxu0 0.0
      %324 = vmatprep.subr.mxu0 0.0
      %325 = vmatpush1.msra.mxu0 0.0
      %326 = vmatprep.subr.mxu0 0.0
      %327 = vmatpush1.msra.mxu0 0.0
      %328 = vmatprep.subr.mxu0 0.0
      %329 = vmatpush1.msra.mxu0 0.0
      %330 = vmatprep.subr.mxu0 0.0
      %331 = vmatpush1.msra.mxu0 0.0
      %332 = vmatprep.subr.mxu0 0.0
      %333 = vmatpush1.msra.mxu0 0.0
      %334 = vmatprep.subr.mxu0 0.0
      %335 = vmatpush1.msra.mxu0 0.0
      %336 = vmatprep.subr.mxu0 0.0
      %337 = vmatpush1.msra.mxu0 0.0
      %338 = vmatprep.subr.mxu0 0.0
      %339 = vmatpush1.msra.mxu0 0.0
      %340 = vmatprep.subr.mxu0 0.0
      %341 = vmatpush1.msra.mxu0 0.0
      %342 = vmatprep.subr.mxu0 0.0
      %343 = vmatpush1.msra.mxu0 0.0
      %344 = vmatprep.subr.mxu0 0.0
      %345 = vmatpush1.msra.mxu0 0.0
      %346 = vmatprep.subr.mxu0 0.0
      %347 = vmatpush1.msra.mxu0 0.0
      %348 = vmatprep.subr.mxu0 0.0
      %349 = vmatpush1.msra.mxu0 0.0
      %350 = vmatprep.subr.mxu0 0.0
      %351 = vmatpush1.msra.mxu0 0.0
      %352 = vmatprep.subr.mxu0 0.0
      %353 = vmatpush1.msra.mxu0 0.0
      %354 = vmatprep.subr.mxu0 0.0
      %355 = vmatpush1.msra.mxu0 0.0
      %356 = vmatprep.mubr.f32.mxu0 0.0
      %357 = vmatmul.mubr.f32.gmra.mrb[0].mxu0 %v241
      %v358 = vpop.f32.mrb[0].mxu0
      %v359 = vadd.f32 %v237, %v358
      %v360 = vpop.f32.mrb[0].mxu0
      %361 = vmatprep.mubr.f32.mxu0 0.0
      %362 = vmatmul.mubr.f32.gmra.mrb[0].mxu0 %v244
      %v363 = vpop.f32.mrb[0].mxu0
      %v364 = vadd.f32 %v237, %v363
      %v365 = vpop.f32.mrb[0].mxu0
      %366 = vmatprep.mubr.f32.mxu0 0.0
      %367 = vmatmul.mubr.f32.gmra.mrb[0].mxu0 %v247
      %v368 = vpop.f32.mrb[0].mxu0
      %v369 = vadd.f32 %v237, %v368
      %v370 = vpop.f32.mrb[0].mxu0
      %371 = vmatprep.mubr.f32.mxu0 0.0
      %372 = vmatmul.mubr.f32.gmra.mrb[0].mxu0 %v250
      %v373 = vpop.f32.mrb[0].mxu0
      %v374 = vadd.f32 %v237, %v373
      %v375 = vpop.f32.mrb[0].mxu0
      %376 = vmatprep.mubr.f32.mxu0 0.0
      %377 = vmatmul.mubr.f32.gmra.mrb[0].mxu0 %v253
      %v378 = vpop.f32.mrb[0].mxu0
      %v379 = vadd.f32 %v237, %v378
      %v380 = vpop.f32.mrb[0].mxu0
      %381 = vmatprep.mubr.f32.mxu0 0.0
      %382 = vmatmul.mubr.f32.gmra.mrb[0].mxu0 %v256
      %v383 = vpop.f32.mrb[0].mxu0
      %v384 = vadd.f32 %v237, %v383
      %v385 = vpop.f32.mrb[0].mxu0
      %386 = vmatprep.mubr.f32.mxu0 0.0
      %387 = vmatmul.mubr.f32.gmra.mrb[0].mxu0 %v259
      %v388 = vpop.f32.mrb[0].mxu0
      %v389 = vadd.f32 %v237, %v388
      %v390 = vpop.f32.mrb[0].mxu0
      %391 = vmatprep.mubr.f32.mxu0 0.0
      %392 = vmatmul.mubr.f32.gmra.mrb[0].mxu0 %v262
      %v393 = vpop.f32.mrb[0].mxu0
      %v394 = vadd.f32 %v237, %v393
      %v395 = vpop.f32.mrb[0].mxu0
      %396 = vmatprep.mubr.f32.mxu0 0.0
      %397 = vmatmul.mubr.f32.gmra.mrb[0].mxu0 %v265
      %v398 = vpop.f32.mrb[0].mxu0
      %v399 = vadd.f32 %v237, %v398
      %v400 = vpop.f32.mrb[0].mxu0
      %401 = vmatprep.mubr.f32.mxu0 0.0
      %402 = vmatmul.mubr.f32.gmra.mrb[0].mxu0 %v268
      %v403 = vpop.f32.mrb[0].mxu0
      %v404 = vadd.f32 %v237, %v403
      %v405 = vpop.f32.mrb[0].mxu0
      %406 = vmatprep.mubr.f32.mxu0 0.0
      %407 = vmatmul.mubr.f32.gmra.mrb[0].mxu0 %v271
      %v408 = vpop.f32.mrb[0].mxu0
      %v409 = vadd.f32 %v237, %v408
      %v410 = vpop.f32.mrb[0].mxu0
      %411 = vmatprep.mubr.f32.mxu0 0.0
      %412 = vmatmul.mubr.f32.gmra.mrb[0].mxu0 %v274
      %v413 = vpop.f32.mrb[0].mxu0
      %v414 = vadd.f32 %v237, %v413
      %v415 = vpop.f32.mrb[0].mxu0
      %416 = vmatprep.mubr.f32.mxu0 0.0
      %417 = vmatmul.mubr.f32.gmra.mrb[0].mxu0 %v277
      %v418 = vpop.f32.mrb[0].mxu0
      %v419 = vadd.f32 %v237, %v418
      %v420 = vpop.f32.mrb[0].mxu0
      %421 = vmatprep.mubr.f32.mxu0 0.0
      %422 = vmatmul.mubr.f32.gmra.mrb[0].mxu0 %v280
      %v423 = vpop.f32.mrb[0].mxu0
      %v424 = vadd.f32 %v237, %v423
      %v425 = vpop.f32.mrb[0].mxu0
      %426 = vmatprep.mubr.f32.mxu0 0.0
      %427 = vmatmul.mubr.f32.gmra.mrb[0].mxu0 %v283
      %v428 = vpop.f32.mrb[0].mxu0
      %v429 = vadd.f32 %v237, %v428
      %v430 = vpop.f32.mrb[0].mxu0
      %431 = vmatprep.mubr.f32.mxu0 0.0
      %432 = vmatmul.mubr.f32.gmra.mrb[0].mxu0 %v286
      %v433 = vpop.f32.mrb[0].mxu0
      %v434 = vadd.f32 %v237, %v433
      %v435 = vpop.f32.mrb[0].mxu0
      %436 = vdwg.mxu0
      %437 = vst.msk [vmem:[%s213] sm:$0xff] %vm239, %v359
      %438 = vst.msk [vmem:[%s213 + $0x8] sm:$0xff] %vm239, %v364
      %439 = vst.msk [vmem:[%s213 + $0x20] sm:$0xff] %vm239, %v369
      %440 = vst.msk [vmem:[%s213 + $0x28] sm:$0xff] %vm239, %v374
      %441 = vst.msk [vmem:[%s213 + $0x40] sm:$0xff] %vm239, %v379
      %442 = vst.msk [vmem:[%s213 + $0x48] sm:$0xff] %vm239, %v384
      %443 = vst.msk [vmem:[%s213 + $0x60] sm:$0xff] %vm239, %v389
      %444 = vst.msk [vmem:[%s213 + $0x68] sm:$0xff] %vm239, %v394
      %445 = vst.msk [vmem:[%s213 + $0x80] sm:$0xff] %vm239, %v399
      %446 = vst.msk [vmem:[%s213 + $0x88] sm:$0xff] %vm239, %v404
      %447 = vst.msk [vmem:[%s213 + $0xa0] sm:$0xff] %vm239, %v409
      %448 = vst.msk [vmem:[%s213 + $0xa8] sm:$0xff] %vm239, %v414
      %449 = vst.msk [vmem:[%s213 + $0xc0] sm:$0xff] %vm239, %v419
      %450 = vst.msk [vmem:[%s213 + $0xc8] sm:$0xff] %vm239, %v424
      %451 = vst.msk [vmem:[%s213 + $0xe0] sm:$0xff] %vm239, %v429
      %452 = vst.msk [vmem:[%s213 + $0xe8] sm:$0xff] %vm239, %v434
      %s453 = scalar_lea.vmem %s1, 4
      %v454 = vld [vmem:[%s453] sm:$0xf]
      %v455 = vld [vmem:[%s2] sm:$0x1]
      %v457 = vlaneseq
      %v458 = vshrl.u32 %v457, 7
      %v459 = vsub.s32 0, %v458
      %v460 = vrot.slane %v455, %v459
      %v463 = vsel %vm288, %v454, 0
      %465 = vmatprep.subr.mxu0 0.0
      %466 = vmatpush1.msra.mxu0 %v463
      %467 = vmatprep.subr.mxu0 0.0
      %468 = vmatpush1.msra.mxu0 0.0
      %469 = vmatprep.subr.mxu0 0.0
      %470 = vmatpush1.msra.mxu0 0.0
      %471 = vmatprep.subr.mxu0 0.0
      %472 = vmatpush1.msra.mxu0 0.0
      %473 = vmatprep.subr.mxu0 0.0
      %474 = vmatpush1.msra.mxu0 0.0
      %475 = vmatprep.subr.mxu0 0.0
      %476 = vmatpush1.msra.mxu0 0.0
      %477 = vmatprep.subr.mxu0 0.0
      %478 = vmatpush1.msra.mxu0 0.0
      %479 = vmatprep.subr.mxu0 0.0
      %480 = vmatpush1.msra.mxu0 0.0
      %481 = vmatprep.subr.mxu0 0.0
      %482 = vmatpush1.msra.mxu0 0.0
      %483 = vmatprep.subr.mxu0 0.0
      %484 = vmatpush1.msra.mxu0 0.0
      %485 = vmatprep.subr.mxu0 0.0
      %486 = vmatpush1.msra.mxu0 0.0
      %487 = vmatprep.subr.mxu0 0.0
      %488 = vmatpush1.msra.mxu0 0.0
      %489 = vmatprep.subr.mxu0 0.0
      %490 = vmatpush1.msra.mxu0 0.0
      %491 = vmatprep.subr.mxu0 0.0
      %492 = vmatpush1.msra.mxu0 0.0
      %493 = vmatprep.subr.mxu0 0.0
      %494 = vmatpush1.msra.mxu0 0.0
      %495 = vmatprep.subr.mxu0 0.0
      %496 = vmatpush1.msra.mxu0 0.0
      %497 = vmatprep.subr.mxu0 0.0
      %498 = vmatpush1.msra.mxu0 0.0
      %499 = vmatprep.subr.mxu0 0.0
      %500 = vmatpush1.msra.mxu0 0.0
      %501 = vmatprep.subr.mxu0 0.0
      %502 = vmatpush1.msra.mxu0 0.0
      %503 = vmatprep.subr.mxu0 0.0
      %504 = vmatpush1.msra.mxu0 0.0
      %505 = vmatprep.subr.mxu0 0.0
      %506 = vmatpush1.msra.mxu0 0.0
      %507 = vmatprep.subr.mxu0 0.0
      %508 = vmatpush1.msra.mxu0 0.0
      %509 = vmatprep.subr.mxu0 0.0
      %510 = vmatpush1.msra.mxu0 0.0
      %511 = vmatprep.subr.mxu0 0.0
      %512 = vmatpush1.msra.mxu0 0.0
      %513 = vmatprep.subr.mxu0 0.0
      %514 = vmatpush1.msra.mxu0 0.0
      %515 = vmatprep.subr.mxu0 0.0
      %516 = vmatpush1.msra.mxu0 0.0
      %517 = vmatprep.subr.mxu0 0.0
      %518 = vmatpush1.msra.mxu0 0.0
      %519 = vmatprep.subr.mxu0 0.0
      %520 = vmatpush1.msra.mxu0 0.0
      %521 = vmatprep.subr.mxu0 0.0
      %522 = vmatpush1.msra.mxu0 0.0
      %523 = vmatprep.subr.mxu0 0.0
      %524 = vmatpush1.msra.mxu0 0.0
      %525 = vmatprep.subr.mxu0 0.0
      %526 = vmatpush1.msra.mxu0 0.0
      %527 = vmatprep.subr.mxu0 0.0
      %528 = vmatpush1.msra.mxu0 0.0
      %529 = vmatprep.mubr.f32.mxu0 0.0
      %530 = vmatmul.mubr.f32.gmra.mrb[0].mxu0 %v241
      %v531 = vpop.f32.mrb[0].mxu0
      %v532 = vadd.f32 %v460, %v531
      %v533 = vpop.f32.mrb[0].mxu0
      %534 = vmatprep.mubr.f32.mxu0 0.0
      %535 = vmatmul.mubr.f32.gmra.mrb[0].mxu0 %v244
      %v536 = vpop.f32.mrb[0].mxu0
      %v537 = vadd.f32 %v460, %v536
      %v538 = vpop.f32.mrb[0].mxu0
      %539 = vmatprep.mubr.f32.mxu0 0.0
      %540 = vmatmul.mubr.f32.gmra.mrb[0].mxu0 %v247
      %v541 = vpop.f32.mrb[0].mxu0
      %v542 = vadd.f32 %v460, %v541
      %v543 = vpop.f32.mrb[0].mxu0
      %544 = vmatprep.mubr.f32.mxu0 0.0
      %545 = vmatmul.mubr.f32.gmra.mrb[0].mxu0 %v250
      %v546 = vpop.f32.mrb[0].mxu0
      %v547 = vadd.f32 %v460, %v546
      %v548 = vpop.f32.mrb[0].mxu0
      %549 = vmatprep.mubr.f32.mxu0 0.0
      %550 = vmatmul.mubr.f32.gmra.mrb[0].mxu0 %v253
      %v551 = vpop.f32.mrb[0].mxu0
      %v552 = vadd.f32 %v460, %v551
      %v553 = vpop.f32.mrb[0].mxu0
      %554 = vmatprep.mubr.f32.mxu0 0.0
      %555 = vmatmul.mubr.f32.gmra.mrb[0].mxu0 %v256
      %v556 = vpop.f32.mrb[0].mxu0
      %v557 = vadd.f32 %v460, %v556
      %v558 = vpop.f32.mrb[0].mxu0
      %559 = vmatprep.mubr.f32.mxu0 0.0
      %560 = vmatmul.mubr.f32.gmra.mrb[0].mxu0 %v259
      %v561 = vpop.f32.mrb[0].mxu0
      %v562 = vadd.f32 %v460, %v561
      %v563 = vpop.f32.mrb[0].mxu0
      %564 = vmatprep.mubr.f32.mxu0 0.0
      %565 = vmatmul.mubr.f32.gmra.mrb[0].mxu0 %v262
      %v566 = vpop.f32.mrb[0].mxu0
      %v567 = vadd.f32 %v460, %v566
      %v568 = vpop.f32.mrb[0].mxu0
      %569 = vmatprep.mubr.f32.mxu0 0.0
      %570 = vmatmul.mubr.f32.gmra.mrb[0].mxu0 %v265
      %v571 = vpop.f32.mrb[0].mxu0
      %v572 = vadd.f32 %v460, %v571
      %v573 = vpop.f32.mrb[0].mxu0
      %574 = vmatprep.mubr.f32.mxu0 0.0
      %575 = vmatmul.mubr.f32.gmra.mrb[0].mxu0 %v268
      %v576 = vpop.f32.mrb[0].mxu0
      %v577 = vadd.f32 %v460, %v576
      %v578 = vpop.f32.mrb[0].mxu0
      %579 = vmatprep.mubr.f32.mxu0 0.0
      %580 = vmatmul.mubr.f32.gmra.mrb[0].mxu0 %v271
      %v581 = vpop.f32.mrb[0].mxu0
      %v582 = vadd.f32 %v460, %v581
      %v583 = vpop.f32.mrb[0].mxu0
      %584 = vmatprep.mubr.f32.mxu0 0.0
      %585 = vmatmul.mubr.f32.gmra.mrb[0].mxu0 %v274
      %v586 = vpop.f32.mrb[0].mxu0
      %v587 = vadd.f32 %v460, %v586
      %v588 = vpop.f32.mrb[0].mxu0
      %589 = vmatprep.mubr.f32.mxu0 0.0
      %590 = vmatmul.mubr.f32.gmra.mrb[0].mxu0 %v277
      %v591 = vpop.f32.mrb[0].mxu0
      %v592 = vadd.f32 %v460, %v591
      %v593 = vpop.f32.mrb[0].mxu0
      %594 = vmatprep.mubr.f32.mxu0 0.0
      %595 = vmatmul.mubr.f32.gmra.mrb[0].mxu0 %v280
      %v596 = vpop.f32.mrb[0].mxu0
      %v597 = vadd.f32 %v460, %v596
      %v598 = vpop.f32.mrb[0].mxu0
      %599 = vmatprep.mubr.f32.mxu0 0.0
      %600 = vmatmul.mubr.f32.gmra.mrb[0].mxu0 %v283
      %v601 = vpop.f32.mrb[0].mxu0
      %v602 = vadd.f32 %v460, %v601
      %v603 = vpop.f32.mrb[0].mxu0
      %604 = vmatprep.mubr.f32.mxu0 0.0
      %605 = vmatmul.mubr.f32.gmra.mrb[0].mxu0 %v286
      %v606 = vpop.f32.mrb[0].mxu0
      %v607 = vadd.f32 %v460, %v606
      %v608 = vpop.f32.mrb[0].mxu0
      %609 = vdwg.mxu0
      %s610 = scalar_lea.vmem %s213, 16
      %611 = vst.msk [vmem:[%s610] sm:$0xff] %vm239, %v532
      %612 = vst.msk [vmem:[%s610 + $0x8] sm:$0xff] %vm239, %v537
      %613 = vst.msk [vmem:[%s610 + $0x20] sm:$0xff] %vm239, %v542
      %614 = vst.msk [vmem:[%s610 + $0x28] sm:$0xff] %vm239, %v547
      %615 = vst.msk [vmem:[%s610 + $0x40] sm:$0xff] %vm239, %v552
      %616 = vst.msk [vmem:[%s610 + $0x48] sm:$0xff] %vm239, %v557
      %617 = vst.msk [vmem:[%s610 + $0x60] sm:$0xff] %vm239, %v562
      %618 = vst.msk [vmem:[%s610 + $0x68] sm:$0xff] %vm239, %v567
      %619 = vst.msk [vmem:[%s610 + $0x80] sm:$0xff] %vm239, %v572
      %620 = vst.msk [vmem:[%s610 + $0x88] sm:$0xff] %vm239, %v577
      %621 = vst.msk [vmem:[%s610 + $0xa0] sm:$0xff] %vm239, %v582
      %622 = vst.msk [vmem:[%s610 + $0xa8] sm:$0xff] %vm239, %v587
      %623 = vst.msk [vmem:[%s610 + $0xc0] sm:$0xff] %vm239, %v592
      %624 = vst.msk [vmem:[%s610 + $0xc8] sm:$0xff] %vm239, %v597
      %625 = vst.msk [vmem:[%s610 + $0xe0] sm:$0xff] %vm239, %v602
      %626 = vst.msk [vmem:[%s610 + $0xe8] sm:$0xff] %vm239, %v607
      %s627 = smul.u32 8, %s19
      %p628 = scmp.lt.s32.totalorder %s18, 1
      %s629 = scalar_select %p628, %s18, 1
      %p630 = scmp.lt.s32.totalorder %s627, 15
      %s631 = scalar_select %p630, %s627, 15
      %s632 = smul.addr %s631, 4
      %s633 = smul.addr %s629, 64
      %s634 = sadd.s32 %s632, %s633
      %s635 = smul.addr %s634, 8
      %s636 = scalar_lea.vmem %s3, %s635
      // Predicated region
      $region33: #{up_forward.3} parent=31 // pred_check
        %p637 = pneg %p116
      $region34: #{up_forward.3} parent=31 // pred_check_branch
        %639 = sbr.rel (%p637) target = $region36
      $region35: #{up_forward.3} parent=31 // pred_region
        %s640 = smul.u32 8, %s19
      $region36: #{up_forward.3} parent=31 // pred_fallthru
        _
    $region32: #{up_forward.3} parent=5 // pred_fallthru
      _
    %p641 = scmp.le.s32.totalorder 2, %s9
    // Predicated region
    $region37: #{up_forward.3} parent=5 // pred_check
      %p642 = pneg %p641
    $region38: #{up_forward.3} parent=5 // pred_check_branch
      %644 = sbr.rel (%p642) target = $region40
    $region39: #{up_forward.3} parent=5 // pred_region
      %s645 = ssub.s32 %s9, 2
      // Predicated region
      $region41: #{up_forward.3} parent=39 // pred_check
        %p646 = pneg %p122
      $region42: #{up_forward.3} parent=39 // pred_check_branch
        %648 = sbr.rel (%p646) target = $region44
      $region43: #{up_forward.3} parent=39 // pred_region
        %s649 = smul.u32 8, %s21
        %p650 = scmp.lt.s32.totalorder %s20, 1
        %s651 = scalar_select %p650, %s20, 1
        %p652 = scmp.lt.s32.totalorder %s649, 15
        %s653 = scalar_select %p652, %s649, 15
        %s654 = smul.addr %s653, 4
        %s655 = smul.addr %s651, 64
        %s656 = sadd.s32 %s654, %s655
        %s657 = smul.addr %s656, 8
        %s658 = scalar_lea.vmem %s3, %s657
      $region44: #{up_forward.3} parent=39 // pred_fallthru
        _
    $region40: #{up_forward.3} parent=5 // pred_fallthru
      _
  $region6: #{up_forward.3} parent=0 // loop_footer
    %s13 = sadd.s32 1, %s9
  $region7: #{up_forward.3} parent=0 // loop_footer_branch
    %8 = sbr.rel target = $region3
  $region8: #{up_forward.3} parent=0 // loop_exit
    _

// kernel: up_forward.4
$region0: #{up_forward.4}
  #allocation0 [shape = 'u32[]', space=smem, size = 0x4, offset = 0x4, fixed_abs, tag = 'smem constant byte address 0x4 - core index']
  #allocation1 [shape = 'u32[144,128]{1,0:T(1,128)}', space=vmem, size = 0x12000, scoped, tag = 'internal scratch']
  %s0 = inlined_call_operand.vmem [shape: f32[2,34,34,2], index: 0, kind: input, shape index: {}]
  %s1 = inlined_call_operand.vmem [shape: f32[2,4,2,34,2], index: 1, kind: input, shape index: {}]
  %s2 = inlined_call_operand.vmem [shape: f32[2,34,34,2], index: 2, kind: input, shape index: {}]
  %s3 = inlined_call_operand.vmem [shape: f32[2,4,2,34,2], index: 3, kind: input, shape index: {}]
  %s4 = inlined_call_operand.vmem [shape: f32[3,6,4], index: 4, kind: input, shape index: {}]
  %s5 = inlined_call_operand.vmem [shape: f32[3,6,4], index: 5, kind: input, shape index: {}]
  %s6 = inlined_call_operand.vmem [shape: f32[1,4], index: 6, kind: input, shape index: {}]
  %s7 = inlined_call_operand.vmem [shape: f32[2,1024,4], index: 7, kind: output, shape index: {}]
  %s8 = sld [smem:[#allocation0]]
  $region61: #{up_forward.4} parent=0
    _
  %s10 = ssub.s32 1, %s8
  %s11 = scalar_select 0, %s10, %s8
  loop: start=0, step=1, limit=10
  $region2: #{up_forward.4} parent=0 // loop_pre_header
    _
  $region3: #{up_forward.4} parent=0 // loop_header
    %s13 = sphi 0, %s17
    %p14 = scmp.ge.s32.totalorder %s13, 10
    %s20 = sphi 0, %s32
    %s21 = sphi 0, %s28
    %s22 = sphi 0, %s20
    %s23 = sphi 0, %s21
    %s24 = sphi 0, %s22
    %s25 = sphi 0, %s23
    %s37 = sphi 0, %s39
    %s40 = sphi 0, %s37
    %s41 = sphi 0, %s40
    %s57 = sphi 0, %s41
    %s65 = sphi 0, %s67
    %s68 = sphi 0, %s65
    %s69 = sphi 0, %s68
    %s85 = sphi 0, %s69
    %s93 = sphi 0, %s95
    %s96 = sphi 0, %s93
    %s97 = sphi 0, %s96
    %s113 = sphi 0, %s97
    %s121 = sphi 0, %s123
    %s124 = sphi 0, %s121
    %s125 = sphi 0, %s124
    %s141 = sphi 0, %s125
    %s145 = sphi 0, %s145
    %s147 = sphi 0, %s145
    %s148 = sphi 0, %s147
    %s162 = sphi 0, %s148
    %s166 = sphi 0, %s166
    %s168 = sphi 0, %s166
    %s169 = sphi 0, %s168
    %s183 = sphi 0, %s169
    %s187 = sphi 0, %s187
    %s189 = sphi 0, %s187
    %s190 = sphi 0, %s189
    %s204 = sphi 0, %s190
    %s212 = sphi 0, %s214
    %s215 = sphi 0, %s212
    %s216 = sphi 0, %s215
    %s232 = sphi 0, %s216
  $region4: #{up_forward.4} parent=0 // loop_header_branch
    %16 = sbr.rel (%p14) target = $region8
  $region5: #{up_forward.4} parent=0 // loop_body
    %s18 = ssub.s32 %s13, 1
    %s19 = ssub.s32 %s13, 2
    %s26 = sadd.s32 1, %s21
    %p27 = scmp.ge.s32.totalorder %s26, 4
    %s28 = scalar_select %p27, 0, %s26
    %s29 = sadd.s32 1, %s20
    %s30 = scalar_select %p27, %s29, %s20
    %p31 = scmp.ge.s32.totalorder %s30, 2
    %s32 = scalar_select %p31, 0, %s30
    %s33 = ssub.s32 %s20, %s32
    %s34 = ssub.s32 %s21, %s28
    %s35 = sor.u32 %s33, %s34
    %p36 = scmp.eq.s32.totalorder %s35, 0
    %s38 = sadd.s32 %s37, 1
    %s39 = scalar_select %p36, %s37, %s38
    %p42 = pneg %p36
    %p43 = scmp.eq.s32.totalorder %s13, 7
    %p44 = por %p42, %p43
    %p45 = scmp.ne.s32.totalorder %s37, %s40
    %p46 = scmp.eq.s32.totalorder %s13, 0
    %p47 = por %p45, %p46
    %p48 = scmp.ne.s32.totalorder %s37, %s40
    %p49 = scmp.eq.s32.totalorder %s18, 7
    %p50 = por %p48, %p49
    %p51 = scmp.ne.s32.totalorder %s40, %s41
    %p52 = scmp.eq.s32.totalorder %s18, 0
    %p53 = por %p51, %p52
    %p54 = scmp.ne.s32.totalorder %s40, %s41
    %p55 = scmp.eq.s32.totalorder %s19, 7
    %p56 = por %p54, %p55
    %p58 = scmp.ne.s32.totalorder %s41, %s57
    %p59 = scmp.eq.s32.totalorder %s19, 0
    %p60 = por %p58, %p59
    %s61 = ssub.s32 %s20, %s32
    %s62 = ssub.s32 %s21, %s28
    %s63 = sor.u32 %s61, %s62
    %p64 = scmp.eq.s32.totalorder %s63, 0
    %s66 = sadd.s32 %s65, 1
    %s67 = scalar_select %p64, %s65, %s66
    %p70 = pneg %p64
    %p71 = scmp.eq.s32.totalorder %s13, 7
    %p72 = por %p70, %p71
    %p73 = scmp.ne.s32.totalorder %s65, %s68
    %p74 = scmp.eq.s32.totalorder %s13, 0
    %p75 = por %p73, %p74
    %p76 = scmp.ne.s32.totalorder %s65, %s68
    %p77 = scmp.eq.s32.totalorder %s18, 7
    %p78 = por %p76, %p77
    %p79 = scmp.ne.s32.totalorder %s68, %s69
    %p80 = scmp.eq.s32.totalorder %s18, 0
    %p81 = por %p79, %p80
    %p82 = scmp.ne.s32.totalorder %s68, %s69
    %p83 = scmp.eq.s32.totalorder %s19, 7
    %p84 = por %p82, %p83
    %p86 = scmp.ne.s32.totalorder %s69, %s85
    %p87 = scmp.eq.s32.totalorder %s19, 0
    %p88 = por %p86, %p87
    %s89 = ssub.s32 %s20, %s32
    %s90 = ssub.s32 %s21, %s28
    %s91 = sor.u32 %s89, %s90
    %p92 = scmp.eq.s32.totalorder %s91, 0
    %s94 = sadd.s32 %s93, 1
    %s95 = scalar_select %p92, %s93, %s94
    %p98 = pneg %p92
    %p99 = scmp.eq.s32.totalorder %s13, 7
    %p100 = por %p98, %p99
    %p101 = scmp.ne.s32.totalorder %s93, %s96
    %p102 = scmp.eq.s32.totalorder %s13, 0
    %p103 = por %p101, %p102
    %p104 = scmp.ne.s32.totalorder %s93, %s96
    %p105 = scmp.eq.s32.totalorder %s18, 7
    %p106 = por %p104, %p105
    %p107 = scmp.ne.s32.totalorder %s96, %s97
    %p108 = scmp.eq.s32.totalorder %s18, 0
    %p109 = por %p107, %p108
    %p110 = scmp.ne.s32.totalorder %s96, %s97
    %p111 = scmp.eq.s32.totalorder %s19, 7
    %p112 = por %p110, %p111
    %p114 = scmp.ne.s32.totalorder %s97, %s113
    %p115 = scmp.eq.s32.totalorder %s19, 0
    %p116 = por %p114, %p115
    %s117 = ssub.s32 %s20, %s32
    %s118 = ssub.s32 %s21, %s28
    %s119 = sor.u32 %s117, %s118
    %p120 = scmp.eq.s32.totalorder %s119, 0
    %s122 = sadd.s32 %s121, 1
    %s123 = scalar_select %p120, %s121, %s122
    %p126 = pneg %p120
    %p127 = scmp.eq.s32.totalorder %s13, 7
    %p128 = por %p126, %p127
    %p129 = scmp.ne.s32.totalorder %s121, %s124
    %p130 = scmp.eq.s32.totalorder %s13, 0
    %p131 = por %p129, %p130
    %p132 = scmp.ne.s32.totalorder %s121, %s124
    %p133 = scmp.eq.s32.totalorder %s18, 7
    %p134 = por %p132, %p133
    %p135 = scmp.ne.s32.totalorder %s124, %s125
    %p136 = scmp.eq.s32.totalorder %s18, 0
    %p137 = por %p135, %p136
    %p138 = scmp.ne.s32.totalorder %s124, %s125
    %p139 = scmp.eq.s32.totalorder %s19, 7
    %p140 = por %p138, %p139
    %p142 = scmp.ne.s32.totalorder %s125, %s141
    %p143 = scmp.eq.s32.totalorder %s19, 0
    %p144 = por %p142, %p143
    %s146 = sadd.s32 %s145, 1
    %p149 = scmp.eq.s32.totalorder %s13, 7
    %p150 = scmp.ne.s32.totalorder %s145, %s147
    %p151 = scmp.eq.s32.totalorder %s13, 0
    %p152 = por %p150, %p151
    %p153 = scmp.ne.s32.totalorder %s145, %s147
    %p154 = scmp.eq.s32.totalorder %s18, 7
    %p155 = por %p153, %p154
    %p156 = scmp.ne.s32.totalorder %s147, %s148
    %p157 = scmp.eq.s32.totalorder %s18, 0
    %p158 = por %p156, %p157
    %p159 = scmp.ne.s32.totalorder %s147, %s148
    %p160 = scmp.eq.s32.totalorder %s19, 7
    %p161 = por %p159, %p160
    %p163 = scmp.ne.s32.totalorder %s148, %s162
    %p164 = scmp.eq.s32.totalorder %s19, 0
    %p165 = por %p163, %p164
    %s167 = sadd.s32 %s166, 1
    %p170 = scmp.eq.s32.totalorder %s13, 7
    %p171 = scmp.ne.s32.totalorder %s166, %s168
    %p172 = scmp.eq.s32.totalorder %s13, 0
    %p173 = por %p171, %p172
    %p174 = scmp.ne.s32.totalorder %s166, %s168
    %p175 = scmp.eq.s32.totalorder %s18, 7
    %p176 = por %p174, %p175
    %p177 = scmp.ne.s32.totalorder %s168, %s169
    %p178 = scmp.eq.s32.totalorder %s18, 0
    %p179 = por %p177, %p178
    %p180 = scmp.ne.s32.totalorder %s168, %s169
    %p181 = scmp.eq.s32.totalorder %s19, 7
    %p182 = por %p180, %p181
    %p184 = scmp.ne.s32.totalorder %s169, %s183
    %p185 = scmp.eq.s32.totalorder %s19, 0
    %p186 = por %p184, %p185
    %s188 = sadd.s32 %s187, 1
    %p191 = scmp.eq.s32.totalorder %s13, 7
    %p192 = scmp.ne.s32.totalorder %s187, %s189
    %p193 = scmp.eq.s32.totalorder %s13, 0
    %p194 = por %p192, %p193
    %p195 = scmp.ne.s32.totalorder %s187, %s189
    %p196 = scmp.eq.s32.totalorder %s18, 7
    %p197 = por %p195, %p196
    %p198 = scmp.ne.s32.totalorder %s189, %s190
    %p199 = scmp.eq.s32.totalorder %s18, 0
    %p200 = por %p198, %p199
    %p201 = scmp.ne.s32.totalorder %s189, %s190
    %p202 = scmp.eq.s32.totalorder %s19, 7
    %p203 = por %p201, %p202
    %p205 = scmp.ne.s32.totalorder %s190, %s204
    %p206 = scmp.eq.s32.totalorder %s19, 0
    %p207 = por %p205, %p206
    %s208 = ssub.s32 %s20, %s32
    %s209 = ssub.s32 %s21, %s28
    %s210 = sor.u32 %s208, %s209
    %p211 = scmp.eq.s32.totalorder %s210, 0
    %s213 = sadd.s32 %s212, 1
    %s214 = scalar_select %p211, %s212, %s213
    %p217 = pneg %p211
    %p218 = scmp.eq.s32.totalorder %s13, 7
    %p219 = por %p217, %p218
    %p220 = scmp.ne.s32.totalorder %s212, %s215
    %p221 = scmp.eq.s32.totalorder %s13, 0
    %p222 = por %p220, %p221
    %p223 = scmp.ne.s32.totalorder %s212, %s215
    %p224 = scmp.eq.s32.totalorder %s18, 7
    %p225 = por %p223, %p224
    %p226 = scmp.ne.s32.totalorder %s215, %s216
    %p227 = scmp.eq.s32.totalorder %s18, 0
    %p228 = por %p226, %p227
    %p229 = scmp.ne.s32.totalorder %s215, %s216
    %p230 = scmp.eq.s32.totalorder %s19, 7
    %p231 = por %p229, %p230
    %p233 = scmp.ne.s32.totalorder %s216, %s232
    %p234 = scmp.eq.s32.totalorder %s19, 0
    %p235 = por %p233, %p234
    %p236 = scmp.le.s32.totalorder 1, %s13
    %p237 = scmp.lt.s32.totalorder %s13, 9
    %p238 = pnand %p236, %p237
    %p239 = pneg %p238
    // Predicated region
    $region9: #{up_forward.4} parent=5 // pred_check
      _
    $region10: #{up_forward.4} parent=5 // pred_check_branch
      %241 = sbr.rel (%p238) target = $region12
    $region11: #{up_forward.4} parent=5 // pred_region
      %s242 = ssub.s32 %s13, 1
      // Predicated region
      $region13: #{up_forward.4} parent=11 // pred_check
        %p243 = pneg %p158
      $region14: #{up_forward.4} parent=11 // pred_check_branch
        %245 = sbr.rel (%p243) target = $region16
      $region15: #{up_forward.4} parent=11 // pred_region
        _
      $region16: #{up_forward.4} parent=11 // pred_fallthru
        _
      // Predicated region
      $region17: #{up_forward.4} parent=11 // pred_check
        %p246 = pneg %p179
      $region18: #{up_forward.4} parent=11 // pred_check_branch
        %248 = sbr.rel (%p246) target = $region20
      $region19: #{up_forward.4} parent=11 // pred_region
        _
      $region20: #{up_forward.4} parent=11 // pred_fallthru
        _
      // Predicated region
      $region21: #{up_forward.4} parent=11 // pred_check
        %p249 = pneg %p200
      $region22: #{up_forward.4} parent=11 // pred_check_branch
        %251 = sbr.rel (%p249) target = $region24
      $region23: #{up_forward.4} parent=11 // pred_region
        _
      $region24: #{up_forward.4} parent=11 // pred_fallthru
        _
    $region12: #{up_forward.4} parent=5 // pred_fallthru
      _
    %p252 = scmp.lt.s32.totalorder %s13, 8
    // Predicated region
    $region25: #{up_forward.4} parent=5 // pred_check
      %p253 = pneg %p252
    $region26: #{up_forward.4} parent=5 // pred_check_branch
      %255 = sbr.rel (%p253) target = $region28
    $region27: #{up_forward.4} parent=5 // pred_region
      // Predicated region
      $region29: #{up_forward.4} parent=27 // pred_check
        %p256 = pneg %p47
      $region30: #{up_forward.4} parent=27 // pred_check_branch
        %258 = sbr.rel (%p256) target = $region32
      $region31: #{up_forward.4} parent=27 // pred_region
        %s259 = smul.u32 8, %s21
        %s260 = ssub.s32 34, %s259
        %p261 = scmp.lt.s32.totalorder %s260, 8
        %s262 = scalar_select %p261, %s260, 8
        %s263 = smul.u32 128, %s262
        %s264 = smul.u32 %s263, 5
        %p265 = scmp.lt.s32.totalorder %s20, 1
        %s266 = scalar_select %p265, %s20, 1
        %p267 = scmp.lt.s32.totalorder %s259, 33
        %s268 = scalar_select %p267, %s259, 33
        %s269 = smul.addr %s268, 5
        %s270 = smul.addr %s266, 170
        %s271 = sadd.s32 %s269, %s270
        %s272 = smul.addr %s271, 8
        %s273 = scalar_lea.vmem %s0, %s272
        %s274 = smul.u32 8, %s21
        %s275 = ssub.s32 34, %s274
        %p276 = scmp.lt.s32.totalorder %s275, 8
        %s277 = scalar_select %p276, %s275, 8
        %s278 = smul.u32 128, %s277
        %s279 = smul.u32 %s278, 5
      $region32: #{up_forward.4} parent=27 // pred_fallthru
        _
      // Predicated region
      $region33: #{up_forward.4} parent=27 // pred_check
        %p280 = pneg %p75
      $region34: #{up_forward.4} parent=27 // pred_check_branch
        %282 = sbr.rel (%p280) target = $region36
      $region35: #{up_forward.4} parent=27 // pred_region
        %p283 = scmp.lt.s32.totalorder %s20, 1
        %s284 = scalar_select %p283, %s20, 1
        %p285 = scmp.lt.s32.totalorder %s21, 3
        %s286 = scalar_select %p285, %s21, 3
        %s287 = smul.addr %s286, 10
        %s288 = smul.addr %s284, 40
        %s289 = sadd.s32 %s287, %s288
        %s290 = smul.addr %s289, 8
        %s291 = scalar_lea.vmem %s1, %s290
      $region36: #{up_forward.4} parent=27 // pred_fallthru
        _
      // Predicated region
      $region37: #{up_forward.4} parent=27 // pred_check
        %p292 = pneg %p103
      $region38: #{up_forward.4} parent=27 // pred_check_branch
        %294 = sbr.rel (%p292) target = $region40
      $region39: #{up_forward.4} parent=27 // pred_region
        %s295 = smul.u32 8, %s21
        %s296 = ssub.s32 34, %s295
        %p297 = scmp.lt.s32.totalorder %s296, 8
        %s298 = scalar_select %p297, %s296, 8
        %s299 = smul.u32 128, %s298
        %s300 = smul.u32 %s299, 5
        %p301 = scmp.lt.s32.totalorder %s20, 1
        %s302 = scalar_select %p301, %s20, 1
        %p303 = scmp.lt.s32.totalorder %s295, 33
        %s304 = scalar_select %p303, %s295, 33
        %s305 = smul.addr %s304, 5
        %s306 = smul.addr %s302, 170
        %s307 = sadd.s32 %s305, %s306
        %s308 = smul.addr %s307, 8
        %s309 = scalar_lea.vmem %s2, %s308
        %s310 = smul.u32 8, %s21
        %s311 = ssub.s32 34, %s310
        %p312 = scmp.lt.s32.totalorder %s311, 8
        %s313 = scalar_select %p312, %s311, 8
        %s314 = smul.u32 128, %s313
        %s315 = smul.u32 %s314, 5
      $region40: #{up_forward.4} parent=27 // pred_fallthru
        _
      // Predicated region
      $region41: #{up_forward.4} parent=27 // pred_check
        %p316 = pneg %p131
      $region42: #{up_forward.4} parent=27 // pred_check_branch
        %318 = sbr.rel (%p316) target = $region44
      $region43: #{up_forward.4} parent=27 // pred_region
        %p319 = scmp.lt.s32.totalorder %s20, 1
        %s320 = scalar_select %p319, %s20, 1
        %p321 = scmp.lt.s32.totalorder %s21, 3
        %s322 = scalar_select %p321, %s21, 3
        %s323 = smul.addr %s322, 10
        %s324 = smul.addr %s320, 40
        %s325 = sadd.s32 %s323, %s324
        %s326 = smul.addr %s325, 8
        %s327 = scalar_lea.vmem %s3, %s326
      $region44: #{up_forward.4} parent=27 // pred_fallthru
        _
    $region28: #{up_forward.4} parent=5 // pred_fallthru
      _
    %p328 = scmp.le.s32.totalorder 1, %s13
    %p329 = scmp.lt.s32.totalorder %s13, 9
    %p330 = pnand %p328, %p329
    %p331 = pneg %p330
    // Predicated region
    $region45: #{up_forward.4} parent=5 // pred_check
      _
    $region46: #{up_forward.4} parent=5 // pred_check_branch
      %333 = sbr.rel (%p330) target = $region48
    $region47: #{up_forward.4} parent=5 // pred_region
      %s334 = ssub.s32 %s13, 1
      %s335 = smul.u32 8, %s23
      %s336 = ssub.s32 34, %s335
      %p337 = scmp.lt.s32.totalorder %s336, 8
      %s338 = scalar_select %p337, %s336, 8
      %s339 = smul.u32 128, %s338
      %s340 = smul.u32 %s339, 5
      %p341 = scmp.lt.s32.totalorder %s22, 1
      %s342 = scalar_select %p341, %s22, 1
      %p343 = scmp.lt.s32.totalorder %s335, 33
      %s344 = scalar_select %p343, %s335, 33
      %s345 = smul.addr %s344, 5
      %s346 = smul.addr %s342, 170
      %s347 = sadd.s32 %s345, %s346
      %s348 = smul.addr %s347, 8
      %s349 = scalar_lea.vmem %s0, %s348
      %p350 = pneg %p53
      %p351 = pneg %p50
      %p352 = scmp.lt.s32.totalorder %s22, 1
      %s353 = scalar_select %p352, %s22, 1
      %p354 = scmp.lt.s32.totalorder %s23, 3
      %s355 = scalar_select %p354, %s23, 3
      %s356 = smul.addr %s355, 10
      %s357 = smul.addr %s353, 40
      %s358 = sadd.s32 %s356, %s357
      %s359 = smul.addr %s358, 8
      %s360 = scalar_lea.vmem %s1, %s359
      %p361 = pneg %p81
      %p362 = pneg %p78
      %s363 = smul.u32 8, %s23
      %s364 = ssub.s32 34, %s363
      %p365 = scmp.lt.s32.totalorder %s364, 8
      %s366 = scalar_select %p365, %s364, 8
      %s367 = smul.u32 128, %s366
      %s368 = smul.u32 %s367, 5
      %p369 = scmp.lt.s32.totalorder %s22, 1
      %s370 = scalar_select %p369, %s22, 1
      %p371 = scmp.lt.s32.totalorder %s363, 33
      %s372 = scalar_select %p371, %s363, 33
      %s373 = smul.addr %s372, 5
      %s374 = smul.addr %s370, 170
      %s375 = sadd.s32 %s373, %s374
      %s376 = smul.addr %s375, 8
      %s377 = scalar_lea.vmem %s2, %s376
      %p378 = pneg %p109
      %p379 = pneg %p106
      %p380 = scmp.lt.s32.totalorder %s22, 1
      %s381 = scalar_select %p380, %s22, 1
      %p382 = scmp.lt.s32.totalorder %s23, 3
      %s383 = scalar_select %p382, %s23, 3
      %s384 = smul.addr %s383, 10
      %s385 = smul.addr %s381, 40
      %s386 = sadd.s32 %s384, %s385
      %s387 = smul.addr %s386, 8
      %s388 = scalar_lea.vmem %s3, %s387
      %p389 = pneg %p137
      %p390 = pneg %p134
      %p391 = pneg %p158
      %p392 = pneg %p155
      %p393 = pneg %p179
      %p394 = pneg %p176
      %p395 = pneg %p200
      %p396 = pneg %p197
      %p397 = pneg %p228
      %p398 = pneg %p225
      %s399 = smul.u32 32, %s23
      %p400 = scmp.lt.s32.totalorder %s22, 1
      %s401 = scalar_select %p400, %s22, 1
      %p402 = scmp.lt.s32.totalorder %s399, 127
      %s403 = scalar_select %p402, %s399, 127
      %s404 = smul.addr %s401, 128
      %s405 = sadd.s32 %s403, %s404
      %s406 = smul.addr %s405, 8
      %s407 = scalar_lea.vmem %s7, %s406
      %s408 = smul.u32 8, %s23
      %s409 = ssub.s32 34, %s408
      %p410 = scmp.lt.s32.totalorder %s409, 8
      %s411 = scalar_select %p410, %s409, 8
      %s412 = smul.u32 128, %s411
      %s413 = smul.u32 %s412, 5
      %p414 = scmp.lt.s32.totalorder %s22, 1
      %s415 = scalar_select %p414, %s22, 1
      %p416 = scmp.lt.s32.totalorder %s408, 33
      %s417 = scalar_select %p416, %s408, 33
      %s418 = smul.addr %s417, 5
      %s419 = smul.addr %s415, 170
      %s420 = sadd.s32 %s418, %s419
      %s421 = smul.addr %s420, 8
      %s422 = scalar_lea.vmem %s0, %s421
      %s423 = smul.u32 8, %s23
      %s424 = ssub.s32 34, %s423
      %p425 = scmp.lt.s32.totalorder %s424, 8
      %s426 = scalar_select %p425, %s424, 8
      %s427 = smul.u32 128, %s426
      %s428 = smul.u32 %s427, 5
      %p429 = scmp.lt.s32.totalorder %s22, 1
      %s430 = scalar_select %p429, %s22, 1
      %p431 = scmp.lt.s32.totalorder %s23, 3
      %s432 = scalar_select %p431, %s23, 3
      %s433 = smul.addr %s432, 10
      %s434 = smul.addr %s430, 40
      %s435 = sadd.s32 %s433, %s434
      %s436 = smul.addr %s435, 8
      %s437 = scalar_lea.vmem %s1, %s436
      %s438 = smul.u32 8, %s23
      %s439 = ssub.s32 34, %s438
      %p440 = scmp.lt.s32.totalorder %s439, 8
      %s441 = scalar_select %p440, %s439, 8
      %s442 = smul.u32 128, %s441
      %s443 = smul.u32 %s442, 5
      %p444 = scmp.lt.s32.totalorder %s22, 1
      %s445 = scalar_select %p444, %s22, 1
      %p446 = scmp.lt.s32.totalorder %s438, 33
      %s447 = scalar_select %p446, %s438, 33
      %s448 = smul.addr %s447, 5
      %s449 = smul.addr %s445, 170
      %s450 = sadd.s32 %s448, %s449
      %s451 = smul.addr %s450, 8
      %s452 = scalar_lea.vmem %s2, %s451
      %s453 = smul.u32 8, %s23
      %s454 = ssub.s32 34, %s453
      %p455 = scmp.lt.s32.totalorder %s454, 8
      %s456 = scalar_select %p455, %s454, 8
      %s457 = smul.u32 128, %s456
      %s458 = smul.u32 %s457, 5
      %p459 = scmp.lt.s32.totalorder %s22, 1
      %s460 = scalar_select %p459, %s22, 1
      %p461 = scmp.lt.s32.totalorder %s23, 3
      %s462 = scalar_select %p461, %s23, 3
      %s463 = smul.addr %s462, 10
      %s464 = smul.addr %s460, 40
      %s465 = sadd.s32 %s463, %s464
      %s466 = smul.addr %s465, 8
      %s467 = scalar_lea.vmem %s3, %s466
      %s468 = smul.u32 32, %s23
      %p469 = scmp.lt.s32.totalorder %s22, 1
      %s470 = scalar_select %p469, %s22, 1
      %p471 = scmp.lt.s32.totalorder %s468, 127
      %s472 = scalar_select %p471, %s468, 127
      %s473 = smul.addr %s470, 128
      %s474 = sadd.s32 %s472, %s473
      %s475 = smul.addr %s474, 8
      %s476 = scalar_lea.vmem %s7, %s475
      %s477 = smul.u32 32, %s23
      %v478 = vld [vmem:[%s6] sm:$0x1]
      %v480 = vlaneseq
      %v481 = vshrl.u32 %v480, 7
      %v482 = vsub.s32 0, %v481
      %v483 = vrot.slane %v478, %v482
      %v485 = vld [vmem:[%s422] sm:$0xff]
      %v486 = vld [vmem:[%s422 + $0x8] sm:$0xff]
      %v487 = vld [vmem:[%s422 + $0x10] sm:$0xff]
      %v488 = vld [vmem:[%s422 + $0x18] sm:$0xff]
      %v489 = vld [vmem:[%s422 + $0x20] sm:$0x3]
      %v490 = vld [vmem:[%s422 + $0x28] sm:$0xff]
      %v491 = vld [vmem:[%s422 + $0x30] sm:$0xff]
      %v492 = vld [vmem:[%s422 + $0x38] sm:$0xff]
      %v493 = vld [vmem:[%s422 + $0x40] sm:$0xff]
      %v494 = vld [vmem:[%s422 + $0x48] sm:$0x3]
      %v495 = vld [vmem:[%s422 + $0x50] sm:$0xff]
      %v496 = vld [vmem:[%s422 + $0x58] sm:$0xff]
      %v497 = vld [vmem:[%s422 + $0x60] sm:$0xff]
      %v498 = vld [vmem:[%s422 + $0x68] sm:$0xff]
      %v499 = vld [vmem:[%s422 + $0x70] sm:$0x3]
      %v500 = vld [vmem:[%s422 + $0x78] sm:$0xff]
      %v501 = vld [vmem:[%s422 + $0x80] sm:$0xff]
      %v502 = vld [vmem:[%s422 + $0x88] sm:$0xff]
      %v503 = vld [vmem:[%s422 + $0x90] sm:$0xff]
      %v504 = vld [vmem:[%s422 + $0x98] sm:$0x3]
      %v505 = vld [vmem:[%s422 + $0xa0] sm:$0xff]
      %v506 = vld [vmem:[%s422 + $0xa8] sm:$0xff]
      %v507 = vld [vmem:[%s422 + $0xb0] sm:$0xff]
      %v508 = vld [vmem:[%s422 + $0xb8] sm:$0xff]
      %v509 = vld [vmem:[%s422 + $0xc0] sm:$0x3]
      %v510 = vld [vmem:[%s422 + $0xc8] sm:$0xff]
      %v511 = vld [vmem:[%s422 + $0xd0] sm:$0xff]
      %v512 = vld [vmem:[%s422 + $0xd8] sm:$0xff]
      %v513 = vld [vmem:[%s422 + $0xe0] sm:$0xff]
      %v514 = vld [vmem:[%s422 + $0xe8] sm:$0x3]
      %v515 = vld [vmem:[%s422 + $0xf0] sm:$0xff]
      %v516 = vld [vmem:[%s422 + $0xf8] sm:$0xff]
      %v517 = vld [vmem:[%s422 + $0x100] sm:$0xff]
      %v518 = vld [vmem:[%s422 + $0x108] sm:$0xff]
      %v519 = vld [vmem:[%s422 + $0x110] sm:$0x3]
      %v520 = vld [vmem:[%s422 + $0x118] sm:$0xff]
      %v521 = vld [vmem:[%s422 + $0x120] sm:$0xff]
      %v522 = vld [vmem:[%s422 + $0x128] sm:$0xff]
      %v523 = vld [vmem:[%s422 + $0x130] sm:$0xff]
      %v524 = vld [vmem:[%s422 + $0x138] sm:$0x3]
      %v525 = vld [vmem:[%s437] sm:$0xff]
      %v526 = vld [vmem:[%s437 + $0x8] sm:$0xff]
      %v527 = vld [vmem:[%s437 + $0x10] sm:$0xff]
      %v528 = vld [vmem:[%s437 + $0x18] sm:$0xff]
      %v529 = vld [vmem:[%s437 + $0x20] sm:$0x3]
      %v530 = vld [vmem:[%s437 + $0x28] sm:$0xff]
      %v531 = vld [vmem:[%s437 + $0x30] sm:$0xff]
      %v532 = vld [vmem:[%s437 + $0x38] sm:$0xff]
      %v533 = vld [vmem:[%s437 + $0x40] sm:$0xff]
      %v534 = vld [vmem:[%s437 + $0x48] sm:$0x3]
      %vm575 = vcmask 1046528
      %v576 = vrot.slane %v485, 1
      %v577 = vrot.slane %v486, 1
      %v578 = vsel %vm575, %v576, %v577
      %v579 = vrot.slane %v487, 1
      %v580 = vsel %vm575, %v577, %v579
      %v581 = vrot.slane %v488, 1
      %v582 = vsel %vm575, %v579, %v581
      %v583 = vrot.slane %v489, 1
      %v584 = vsel %vm575, %v581, %v583
      %v585 = vrot.slane %v490, 1
      %v586 = vrot.slane %v491, 1
      %v587 = vsel %vm575, %v585, %v586
      %v588 = vrot.slane %v492, 1
      %v589 = vsel %vm575, %v586, %v588
      %v590 = vrot.slane %v493, 1
      %v591 = vsel %vm575, %v588, %v590
      %v592 = vrot.slane %v494, 1
      %v593 = vsel %vm575, %v590, %v592
      %v594 = vrot.slane %v495, 1
      %v595 = vrot.slane %v496, 1
      %v596 = vsel %vm575, %v594, %v595
      %v597 = vrot.slane %v497, 1
      %v598 = vsel %vm575, %v595, %v597
      %v599 = vrot.slane %v498, 1
      %v600 = vsel %vm575, %v597, %v599
      %v601 = vrot.slane %v499, 1
      %v602 = vsel %vm575, %v599, %v601
      %v603 = vrot.slane %v500, 1
      %v604 = vrot.slane %v501, 1
      %v605 = vsel %vm575, %v603, %v604
      %v606 = vrot.slane %v502, 1
      %v607 = vsel %vm575, %v604, %v606
      %v608 = vrot.slane %v503, 1
      %v609 = vsel %vm575, %v606, %v608
      %v610 = vrot.slane %v504, 1
      %v611 = vsel %vm575, %v608, %v610
      %v612 = vrot.slane %v505, 1
      %v613 = vrot.slane %v506, 1
      %v614 = vsel %vm575, %v612, %v613
      %v615 = vrot.slane %v507, 1
      %v616 = vsel %vm575, %v613, %v615
      %v617 = vrot.slane %v508, 1
      %v618 = vsel %vm575, %v615, %v617
      %v619 = vrot.slane %v509, 1
      %v620 = vsel %vm575, %v617, %v619
      %v621 = vrot.slane %v510, 1
      %v622 = vrot.slane %v511, 1
      %v623 = vsel %vm575, %v621, %v622
      %v624 = vrot.slane %v512, 1
      %v625 = vsel %vm575, %v622, %v624
      %v626 = vrot.slane %v513, 1
      %v627 = vsel %vm575, %v624, %v626
      %v628 = vrot.slane %v514, 1
      %v629 = vsel %vm575, %v626, %v628
      %v630 = vrot.slane %v515, 1
      %v631 = vrot.slane %v516, 1
      %v632 = vsel %vm575, %v630, %v631
      %v633 = vrot.slane %v517, 1
      %v634 = vsel %vm575, %v631, %v633
      %v635 = vrot.slane %v518, 1
      %v636 = vsel %vm575, %v633, %v635
      %v637 = vrot.slane %v519, 1
      %v638 = vsel %vm575, %v635, %v637
      %v639 = vrot.slane %v520, 1
      %v640 = vrot.slane %v521, 1
      %v641 = vsel %vm575, %v639, %v640
      %v642 = vrot.slane %v522, 1
      %v643 = vsel %vm575, %v640, %v642
      %v644 = vrot.slane %v523, 1
      %v645 = vsel %vm575, %v642, %v644
      %v646 = vrot.slane %v524, 1
      %v647 = vsel %vm575, %v644, %v646
      %648 = vrot.lane.b32.xlu0 %v578, 2
      %v649 = vpop.permute.xlu0 %648
      %650 = vrot.lane.b32.xlu0 %v580, 2
      %v651 = vpop.permute.xlu0 %650
      %652 = vrot.lane.b32.xlu0 %v582, 2
      %v653 = vpop.permute.xlu0 %652
      %654 = vrot.lane.b32.xlu0 %v584, 2
      %v655 = vpop.permute.xlu0 %654
      %656 = vrot.lane.b32.xlu0 %v587, 2
      %v657 = vpop.permute.xlu0 %656
      %658 = vrot.lane.b32.xlu0 %v589, 2
      %v659 = vpop.permute.xlu0 %658
      %660 = vrot.lane.b32.xlu0 %v591, 2
      %v661 = vpop.permute.xlu0 %660
      %662 = vrot.lane.b32.xlu0 %v593, 2
      %v663 = vpop.permute.xlu0 %662
      %664 = vrot.lane.b32.xlu0 %v596, 2
      %v665 = vpop.permute.xlu0 %664
      %666 = vrot.lane.b32.xlu0 %v598, 2
      %v667 = vpop.permute.xlu0 %666
      %668 = vrot.lane.b32.xlu0 %v600, 2
      %v669 = vpop.permute.xlu0 %668
      %670 = vrot.lane.b32.xlu0 %v602, 2
      %v671 = vpop.permute.xlu0 %670
      %672 = vrot.lane.b32.xlu0 %v605, 2
      %v673 = vpop.permute.xlu0 %672
      %674 = vrot.lane.b32.xlu0 %v607, 2
      %v675 = vpop.permute.xlu0 %674
      %676 = vrot.lane.b32.xlu0 %v609, 2
      %v677 = vpop.permute.xlu0 %676
      %678 = vrot.lane.b32.xlu0 %v611, 2
      %v679 = vpop.permute.xlu0 %678
      %680 = vrot.lane.b32.xlu0 %v614, 2
      %v681 = vpop.permute.xlu0 %680
      %682 = vrot.lane.b32.xlu0 %v616, 2
      %v683 = vpop.permute.xlu0 %682
      %684 = vrot.lane.b32.xlu0 %v618, 2
      %v685 = vpop.permute.xlu0 %684
      %686 = vrot.lane.b32.xlu0 %v620, 2
      %v687 = vpop.permute.xlu0 %686
      %688 = vrot.lane.b32.xlu0 %v623, 2
      %v689 = vpop.permute.xlu0 %688
      %690 = vrot.lane.b32.xlu0 %v625, 2
      %v691 = vpop.permute.xlu0 %690
      %692 = vrot.lane.b32.xlu0 %v627, 2
      %v693 = vpop.permute.xlu0 %692
      %694 = vrot.lane.b32.xlu0 %v629, 2
      %v695 = vpop.permute.xlu0 %694
      %696 = vrot.lane.b32.xlu0 %v632, 2
      %v697 = vpop.permute.xlu0 %696
      %698 = vrot.lane.b32.xlu0 %v634, 2
      %v699 = vpop.permute.xlu0 %698
      %700 = vrot.lane.b32.xlu0 %v636, 2
      %v701 = vpop.permute.xlu0 %700
      %702 = vrot.lane.b32.xlu0 %v638, 2
      %v703 = vpop.permute.xlu0 %702
      %704 = vrot.lane.b32.xlu0 %v641, 2
      %v705 = vpop.permute.xlu0 %704
      %706 = vrot.lane.b32.xlu0 %v643, 2
      %v707 = vpop.permute.xlu0 %706
      %708 = vrot.lane.b32.xlu0 %v645, 2
      %v709 = vpop.permute.xlu0 %708
      %710 = vrot.lane.b32.xlu0 %v647, 2
      %v711 = vpop.permute.xlu0 %710
      %vm744 = vcmask 1045504
      %v745 = vrot.slane %v485, 2
      %v746 = vrot.slane %v486, 2
      %v747 = vsel %vm744, %v745, %v746
      %v748 = vrot.slane %v487, 2
      %v749 = vsel %vm744, %v746, %v748
      %v750 = vrot.slane %v488, 2
      %v751 = vsel %vm744, %v748, %v750
      %v752 = vrot.slane %v489, 2
      %v753 = vsel %vm744, %v750, %v752
      %v754 = vrot.slane %v490, 2
      %v755 = vrot.slane %v491, 2
      %v756 = vsel %vm744, %v754, %v755
      %v757 = vrot.slane %v492, 2
      %v758 = vsel %vm744, %v755, %v757
      %v759 = vrot.slane %v493, 2
      %v760 = vsel %vm744, %v757, %v759
      %v761 = vrot.slane %v494, 2
      %v762 = vsel %vm744, %v759, %v761
      %v763 = vrot.slane %v495, 2
      %v764 = vrot.slane %v496, 2
      %v765 = vsel %vm744, %v763, %v764
      %v766 = vrot.slane %v497, 2
      %v767 = vsel %vm744, %v764, %v766
      %v768 = vrot.slane %v498, 2
      %v769 = vsel %vm744, %v766, %v768
      %v770 = vrot.slane %v499, 2
      %v771 = vsel %vm744, %v768, %v770
      %v772 = vrot.slane %v500, 2
      %v773 = vrot.slane %v501, 2
      %v774 = vsel %vm744, %v772, %v773
      %v775 = vrot.slane %v502, 2
      %v776 = vsel %vm744, %v773, %v775
      %v777 = vrot.slane %v503, 2
      %v778 = vsel %vm744, %v775, %v777
      %v779 = vrot.slane %v504, 2
      %v780 = vsel %vm744, %v777, %v779
      %v781 = vrot.slane %v505, 2
      %v782 = vrot.slane %v506, 2
      %v783 = vsel %vm744, %v781, %v782
      %v784 = vrot.slane %v507, 2
      %v785 = vsel %vm744, %v782, %v784
      %v786 = vrot.slane %v508, 2
      %v787 = vsel %vm744, %v784, %v786
      %v788 = vrot.slane %v509, 2
      %v789 = vsel %vm744, %v786, %v788
      %v790 = vrot.slane %v510, 2
      %v791 = vrot.slane %v511, 2
      %v792 = vsel %vm744, %v790, %v791
      %v793 = vrot.slane %v512, 2
      %v794 = vsel %vm744, %v791, %v793
      %v795 = vrot.slane %v513, 2
      %v796 = vsel %vm744, %v793, %v795
      %v797 = vrot.slane %v514, 2
      %v798 = vsel %vm744, %v795, %v797
      %v799 = vrot.slane %v515, 2
      %v800 = vrot.slane %v516, 2
      %v801 = vsel %vm744, %v799, %v800
      %v802 = vrot.slane %v517, 2
      %v803 = vsel %vm744, %v800, %v802
      %v804 = vrot.slane %v518, 2
      %v805 = vsel %vm744, %v802, %v804
      %v806 = vrot.slane %v519, 2
      %v807 = vsel %vm744, %v804, %v806
      %v808 = vrot.slane %v520, 2
      %v809 = vrot.slane %v521, 2
      %v810 = vsel %vm744, %v808, %v809
      %v811 = vrot.slane %v522, 2
      %v812 = vsel %vm744, %v809, %v811
      %v813 = vrot.slane %v523, 2
      %v814 = vsel %vm744, %v811, %v813
      %v815 = vrot.slane %v524, 2
      %v816 = vsel %vm744, %v813, %v815
      %817 = vrot.lane.b32.xlu0 %v747, 4
      %v818 = vpop.permute.xlu0 %817
      %819 = vrot.lane.b32.xlu0 %v749, 4
      %v820 = vpop.permute.xlu0 %819
      %821 = vrot.lane.b32.xlu0 %v751, 4
      %v822 = vpop.permute.xlu0 %821
      %823 = vrot.lane.b32.xlu0 %v753, 4
      %v824 = vpop.permute.xlu0 %823
      %825 = vrot.lane.b32.xlu0 %v756, 4
      %v826 = vpop.permute.xlu0 %825
      %827 = vrot.lane.b32.xlu0 %v758, 4
      %v828 = vpop.permute.xlu0 %827
      %829 = vrot.lane.b32.xlu0 %v760, 4
      %v830 = vpop.permute.xlu0 %829
      %831 = vrot.lane.b32.xlu0 %v762, 4
      %v832 = vpop.permute.xlu0 %831
      %833 = vrot.lane.b32.xlu0 %v765, 4
      %v834 = vpop.permute.xlu0 %833
      %835 = vrot.lane.b32.xlu0 %v767, 4
      %v836 = vpop.permute.xlu0 %835
      %837 = vrot.lane.b32.xlu0 %v769, 4
      %v838 = vpop.permute.xlu0 %837
      %839 = vrot.lane.b32.xlu0 %v771, 4
      %v840 = vpop.permute.xlu0 %839
      %841 = vrot.lane.b32.xlu0 %v774, 4
      %v842 = vpop.permute.xlu0 %841
      %843 = vrot.lane.b32.xlu0 %v776, 4
      %v844 = vpop.permute.xlu0 %843
      %845 = vrot.lane.b32.xlu0 %v778, 4
      %v846 = vpop.permute.xlu0 %845
      %847 = vrot.lane.b32.xlu0 %v780, 4
      %v848 = vpop.permute.xlu0 %847
      %849 = vrot.lane.b32.xlu0 %v783, 4
      %v850 = vpop.permute.xlu0 %849
      %851 = vrot.lane.b32.xlu0 %v785, 4
      %v852 = vpop.permute.xlu0 %851
      %853 = vrot.lane.b32.xlu0 %v787, 4
      %v854 = vpop.permute.xlu0 %853
      %855 = vrot.lane.b32.xlu0 %v789, 4
      %v856 = vpop.permute.xlu0 %855
      %857 = vrot.lane.b32.xlu0 %v792, 4
      %v858 = vpop.permute.xlu0 %857
      %859 = vrot.lane.b32.xlu0 %v794, 4
      %v860 = vpop.permute.xlu0 %859
      %861 = vrot.lane.b32.xlu0 %v796, 4
      %v862 = vpop.permute.xlu0 %861
      %863 = vrot.lane.b32.xlu0 %v798, 4
      %v864 = vpop.permute.xlu0 %863
      %865 = vrot.lane.b32.xlu0 %v801, 4
      %v866 = vpop.permute.xlu0 %865
      %867 = vrot.lane.b32.xlu0 %v803, 4
      %v868 = vpop.permute.xlu0 %867
      %869 = vrot.lane.b32.xlu0 %v805, 4
      %v870 = vpop.permute.xlu0 %869
      %871 = vrot.lane.b32.xlu0 %v807, 4
      %v872 = vpop.permute.xlu0 %871
      %873 = vrot.lane.b32.xlu0 %v810, 4
      %v874 = vpop.permute.xlu0 %873
      %875 = vrot.lane.b32.xlu0 %v812, 4
      %v876 = vpop.permute.xlu0 %875
      %877 = vrot.lane.b32.xlu0 %v814, 4
      %v878 = vpop.permute.xlu0 %877
      %879 = vrot.lane.b32.xlu0 %v816, 4
      %v880 = vpop.permute.xlu0 %879
      %vm913 = vcmask 15360
      %v914 = vsel %vm913, %v485, %v649
      %v915 = vsel %vm913, %v486, %v651
      %v916 = vsel %vm913, %v487, %v653
      %v917 = vsel %vm913, %v488, %v655
      %v918 = vsel %vm913, %v490, %v657
      %v919 = vsel %vm913, %v491, %v659
      %v920 = vsel %vm913, %v492, %v661
      %v921 = vsel %vm913, %v493, %v663
      %v922 = vsel %vm913, %v495, %v665
      %v923 = vsel %vm913, %v496, %v667
      %v924 = vsel %vm913, %v497, %v669
      %v925 = vsel %vm913, %v498, %v671
      %v926 = vsel %vm913, %v500, %v673
      %v927 = vsel %vm913, %v501, %v675
      %v928 = vsel %vm913, %v502, %v677
      %v929 = vsel %vm913, %v503, %v679
      %v930 = vsel %vm913, %v505, %v681
      %v931 = vsel %vm913, %v506, %v683
      %v932 = vsel %vm913, %v507, %v685
      %v933 = vsel %vm913, %v508, %v687
      %v934 = vsel %vm913, %v510, %v689
      %v935 = vsel %vm913, %v511, %v691
      %v936 = vsel %vm913, %v512, %v693
      %v937 = vsel %vm913, %v513, %v695
      %v938 = vsel %vm913, %v515, %v697
      %v939 = vsel %vm913, %v516, %v699
      %v940 = vsel %vm913, %v517, %v701
      %v941 = vsel %vm913, %v518, %v703
      %v942 = vsel %vm913, %v520, %v705
      %v943 = vsel %vm913, %v521, %v707
      %v944 = vsel %vm913, %v522, %v709
      %v945 = vsel %vm913, %v523, %v711
      %vm946 = vcmask 31744
      %v947 = vsel %vm946, %v914, %v818
      %v948 = vsel %vm946, %v915, %v820
      %v949 = vsel %vm946, %v916, %v822
      %v950 = vsel %vm946, %v917, %v824
      %v951 = vsel %vm946, %v918, %v826
      %v952 = vsel %vm946, %v919, %v828
      %v953 = vsel %vm946, %v920, %v830
      %v954 = vsel %vm946, %v921, %v832
      %v955 = vsel %vm946, %v922, %v834
      %v956 = vsel %vm946, %v923, %v836
      %v957 = vsel %vm946, %v924, %v838
      %v958 = vsel %vm946, %v925, %v840
      %v959 = vsel %vm946, %v926, %v842
      %v960 = vsel %vm946, %v927, %v844
      %v961 = vsel %vm946, %v928, %v846
      %v962 = vsel %vm946, %v929, %v848
      %v963 = vsel %vm946, %v930, %v850
      %v964 = vsel %vm946, %v931, %v852
      %v965 = vsel %vm946, %v932, %v854
      %v966 = vsel %vm946, %v933, %v856
      %v967 = vsel %vm946, %v934, %v858
      %v968 = vsel %vm946, %v935, %v860
      %v969 = vsel %vm946, %v936, %v862
      %v970 = vsel %vm946, %v937, %v864
      %v971 = vsel %vm946, %v938, %v866
      %v972 = vsel %vm946, %v939, %v868
      %v973 = vsel %vm946, %v940, %v870
      %v974 = vsel %vm946, %v941, %v872
      %v975 = vsel %vm946, %v942, %v874
      %v976 = vsel %vm946, %v943, %v876
      %v977 = vsel %vm946, %v944, %v878
      %v978 = vsel %vm946, %v945, %v880
      %v979 = vld [vmem:[%s4] sm:$0x3f]
      %vm980 = vcmask 48128
      %v982 = vsel %vm980, %v947, 0
      %v985 = vsel %vm980, %v948, 0
      %v988 = vsel %vm980, %v949, 0
      %v991 = vsel %vm980, %v950, 0
      %v994 = vsel %vm980, %v951, 0
      %v997 = vsel %vm980, %v952, 0
      %v1000 = vsel %vm980, %v953, 0
      %v1003 = vsel %vm980, %v954, 0
      %v1006 = vsel %vm980, %v955, 0
      %v1009 = vsel %vm980, %v956, 0
      %v1012 = vsel %vm980, %v957, 0
      %v1015 = vsel %vm980, %v958, 0
      %v1018 = vsel %vm980, %v959, 0
      %v1021 = vsel %vm980, %v960, 0
      %v1024 = vsel %vm980, %v961, 0
      %v1027 = vsel %vm980, %v962, 0
      %v1030 = vsel %vm980, %v963, 0
      %v1033 = vsel %vm980, %v964, 0
      %v1036 = vsel %vm980, %v965, 0
      %v1039 = vsel %vm980, %v966, 0
      %v1042 = vsel %vm980, %v967, 0
      %v1045 = vsel %vm980, %v968, 0
      %v1048 = vsel %vm980, %v969, 0
      %v1051 = vsel %vm980, %v970, 0
      %v1054 = vsel %vm980, %v971, 0
      %v1057 = vsel %vm980, %v972, 0
      %v1060 = vsel %vm980, %v973, 0
      %v1063 = vsel %vm980, %v974, 0
      %v1066 = vsel %vm980, %v975, 0
      %v1069 = vsel %vm980, %v976, 0
      %v1072 = vsel %vm980, %v977, 0
      %v1075 = vsel %vm980, %v978, 0
      %v1078 = vsel %vm744, %v979, 0
      %1080 = vmatprep.subr.mxu0 0.0
      %1081 = vmatpush1.msra.mxu0 %v1078
      %1082 = vmatprep.subr.mxu0 0.0
      %1083 = vmatpush1.msra.mxu0 0.0
      %1084 = vmatprep.subr.mxu0 0.0
      %1085 = vmatpush1.msra.mxu0 0.0
      %1086 = vmatprep.subr.mxu0 0.0
      %1087 = vmatpush1.msra.mxu0 0.0
      %1088 = vmatprep.subr.mxu0 0.0
      %1089 = vmatpush1.msra.mxu0 0.0
      %1090 = vmatprep.subr.mxu0 0.0
      %1091 = vmatpush1.msra.mxu0 0.0
      %1092 = vmatprep.subr.mxu0 0.0
      %1093 = vmatpush1.msra.mxu0 0.0
      %1094 = vmatprep.subr.mxu0 0.0
      %1095 = vmatpush1.msra.mxu0 0.0
      %1096 = vmatprep.subr.mxu0 0.0
      %1097 = vmatpush1.msra.mxu0 0.0
      %1098 = vmatprep.subr.mxu0 0.0
      %1099 = vmatpush1.msra.mxu0 0.0
      %1100 = vmatprep.subr.mxu0 0.0
      %1101 = vmatpush1.msra.mxu0 0.0
      %1102 = vmatprep.subr.mxu0 0.0
      %1103 = vmatpush1.msra.mxu0 0.0
      %1104 = vmatprep.subr.mxu0 0.0
      %1105 = vmatpush1.msra.mxu0 0.0
      %1106 = vmatprep.subr.mxu0 0.0
      %1107 = vmatpush1.msra.mxu0 0.0
      %1108 = vmatprep.subr.mxu0 0.0
      %1109 = vmatpush1.msra.mxu0 0.0
      %1110 = vmatprep.subr.mxu0 0.0
      %1111 = vmatpush1.msra.mxu0 0.0
      %1112 = vmatprep.subr.mxu0 0.0
      %1113 = vmatpush1.msra.mxu0 0.0
      %1114 = vmatprep.subr.mxu0 0.0
      %1115 = vmatpush1.msra.mxu0 0.0
      %1116 = vmatprep.subr.mxu0 0.0
      %1117 = vmatpush1.msra.mxu0 0.0
      %1118 = vmatprep.subr.mxu0 0.0
      %1119 = vmatpush1.msra.mxu0 0.0
      %1120 = vmatprep.subr.mxu0 0.0
      %1121 = vmatpush1.msra.mxu0 0.0
      %1122 = vmatprep.subr.mxu0 0.0
      %1123 = vmatpush1.msra.mxu0 0.0
      %1124 = vmatprep.subr.mxu0 0.0
      %1125 = vmatpush1.msra.mxu0 0.0
      %1126 = vmatprep.subr.mxu0 0.0
      %1127 = vmatpush1.msra.mxu0 0.0
      %1128 = vmatprep.subr.mxu0 0.0
      %1129 = vmatpush1.msra.mxu0 0.0
      %1130 = vmatprep.subr.mxu0 0.0
      %1131 = vmatpush1.msra.mxu0 0.0
      %1132 = vmatprep.subr.mxu0 0.0
      %1133 = vmatpush1.msra.mxu0 0.0
      %1134 = vmatprep.subr.mxu0 0.0
      %1135 = vmatpush1.msra.mxu0 0.0
      %1136 = vmatprep.subr.mxu0 0.0
      %1137 = vmatpush1.msra.mxu0 0.0
      %1138 = vmatprep.subr.mxu0 0.0
      %1139 = vmatpush1.msra.mxu0 0.0
      %1140 = vmatprep.subr.mxu0 0.0
      %1141 = vmatpush1.msra.mxu0 0.0
      %1142 = vmatprep.subr.mxu0 0.0
      %1143 = vmatpush1.msra.mxu0 0.0
      %1144 = vmatprep.mubr.f32.mxu0 0.0
      %1145 = vmatmul.mubr.f32.gmra.mrb[0].mxu0 %v982
      %v1146 = vpop.f32.mrb[0].mxu0
      %v1147 = vadd.f32 0.0, %v1146
      %v1148 = vpop.f32.mrb[0].mxu0
      %1149 = vmatprep.mubr.f32.mxu0 0.0
      %1150 = vmatmul.mubr.f32.gmra.mrb[0].mxu0 %v985
      %v1151 = vpop.f32.mrb[0].mxu0
      %v1152 = vadd.f32 0.0, %v1151
      %v1153 = vpop.f32.mrb[0].mxu0
      %1154 = vmatprep.mubr.f32.mxu0 0.0
      %1155 = vmatmul.mubr.f32.gmra.mrb[0].mxu0 %v988
      %v1156 = vpop.f32.mrb[0].mxu0
      %v1157 = vadd.f32 0.0, %v1156
      %v1158 = vpop.f32.mrb[0].mxu0
      %1159 = vmatprep.mubr.f32.mxu0 0.0
      %1160 = vmatmul.mubr.f32.gmra.mrb[0].mxu0 %v991
      %v1161 = vpop.f32.mrb[0].mxu0
      %v1162 = vadd.f32 0.0, %v1161
      %v1163 = vpop.f32.mrb[0].mxu0
      %1164 = vmatprep.mubr.f32.mxu0 0.0
      %1165 = vmatmul.mubr.f32.gmra.mrb[0].mxu0 %v994
      %v1166 = vpop.f32.mrb[0].mxu0
      %v1167 = vadd.f32 0.0, %v1166
      %v1168 = vpop.f32.mrb[0].mxu0
      %1169 = vmatprep.mubr.f32.mxu0 0.0
      %1170 = vmatmul.mubr.f32.gmra.mrb[0].mxu0 %v997
      %v1171 = vpop.f32.mrb[0].mxu0
      %v1172 = vadd.f32 0.0, %v1171
      %v1173 = vpop.f32.mrb[0].mxu0
      %1174 = vmatprep.mubr.f32.mxu0 0.0
      %1175 = vmatmul.mubr.f32.gmra.mrb[0].mxu0 %v1000
      %v1176 = vpop.f32.mrb[0].mxu0
      %v1177 = vadd.f32 0.0, %v1176
      %v1178 = vpop.f32.mrb[0].mxu0
      %1179 = vmatprep.mubr.f32.mxu0 0.0
      %1180 = vmatmul.mubr.f32.gmra.mrb[0].mxu0 %v1003
      %v1181 = vpop.f32.mrb[0].mxu0
      %v1182 = vadd.f32 0.0, %v1181
      %v1183 = vpop.f32.mrb[0].mxu0
      %1184 = vmatprep.mubr.f32.mxu0 0.0
      %1185 = vmatmul.mubr.f32.gmra.mrb[0].mxu0 %v1006
      %v1186 = vpop.f32.mrb[0].mxu0
      %v1187 = vadd.f32 0.0, %v1186
      %v1188 = vpop.f32.mrb[0].mxu0
      %1189 = vmatprep.mubr.f32.mxu0 0.0
      %1190 = vmatmul.mubr.f32.gmra.mrb[0].mxu0 %v1009
      %v1191 = vpop.f32.mrb[0].mxu0
      %v1192 = vadd.f32 0.0, %v1191
      %v1193 = vpop.f32.mrb[0].mxu0
      %1194 = vmatprep.mubr.f32.mxu0 0.0
      %1195 = vmatmul.mubr.f32.gmra.mrb[0].mxu0 %v1012
      %v1196 = vpop.f32.mrb[0].mxu0
      %v1197 = vadd.f32 0.0, %v1196
      %v1198 = vpop.f32.mrb[0].mxu0
      %1199 = vmatprep.mubr.f32.mxu0 0.0
      %1200 = vmatmul.mubr.f32.gmra.mrb[0].mxu0 %v1015
      %v1201 = vpop.f32.mrb[0].mxu0
      %v1202 = vadd.f32 0.0, %v1201
      %v1203 = vpop.f32.mrb[0].mxu0
      %1204 = vmatprep.mubr.f32.mxu0 0.0
      %1205 = vmatmul.mubr.f32.gmra.mrb[0].mxu0 %v1018
      %v1206 = vpop.f32.mrb[0].mxu0
      %v1207 = vadd.f32 0.0, %v1206
      %v1208 = vpop.f32.mrb[0].mxu0
      %1209 = vmatprep.mubr.f32.mxu0 0.0
      %1210 = vmatmul.mubr.f32.gmra.mrb[0].mxu0 %v1021
      %v1211 = vpop.f32.mrb[0].mxu0
      %v1212 = vadd.f32 0.0, %v1211
      %v1213 = vpop.f32.mrb[0].mxu0
      %1214 = vmatprep.mubr.f32.mxu0 0.0
      %1215 = vmatmul.mubr.f32.gmra.mrb[0].mxu0 %v1024
      %v1216 = vpop.f32.mrb[0].mxu0
      %v1217 = vadd.f32 0.0, %v1216
      %v1218 = vpop.f32.mrb[0].mxu0
      %1219 = vmatprep.mubr.f32.mxu0 0.0
      %1220 = vmatmul.mubr.f32.gmra.mrb[0].mxu0 %v1027
      %v1221 = vpop.f32.mrb[0].mxu0
      %v1222 = vadd.f32 0.0, %v1221
      %v1223 = vpop.f32.mrb[0].mxu0
      %1224 = vmatprep.mubr.f32.mxu0 0.0
      %1225 = vmatmul.mubr.f32.gmra.mrb[0].mxu0 %v1030
      %v1226 = vpop.f32.mrb[0].mxu0
      %v1227 = vadd.f32 0.0, %v1226
      %v1228 = vpop.f32.mrb[0].mxu0
      %1229 = vmatprep.mubr.f32.mxu0 0.0
      %1230 = vmatmul.mubr.f32.gmra.mrb[0].mxu0 %v1033
      %v1231 = vpop.f32.mrb[0].mxu0
      %v1232 = vadd.f32 0.0, %v1231
      %v1233 = vpop.f32.mrb[0].mxu0
      %1234 = vmatprep.mubr.f32.mxu0 0.0
      %1235 = vmatmul.mubr.f32.gmra.mrb[0].mxu0 %v1036
      %v1236 = vpop.f32.mrb[0].mxu0
      %v1237 = vadd.f32 0.0, %v1236
      %v1238 = vpop.f32.mrb[0].mxu0
      %1239 = vmatprep.mubr.f32.mxu0 0.0
      %1240 = vmatmul.mubr.f32.gmra.mrb[0].mxu0 %v1039
      %v1241 = vpop.f32.mrb[0].mxu0
      %v1242 = vadd.f32 0.0, %v1241
      %v1243 = vpop.f32.mrb[0].mxu0
      %1244 = vmatprep.mubr.f32.mxu0 0.0
      %1245 = vmatmul.mubr.f32.gmra.mrb[0].mxu0 %v1042
      %v1246 = vpop.f32.mrb[0].mxu0
      %v1247 = vadd.f32 0.0, %v1246
      %v1248 = vpop.f32.mrb[0].mxu0
      %1249 = vmatprep.mubr.f32.mxu0 0.0
      %1250 = vmatmul.mubr.f32.gmra.mrb[0].mxu0 %v1045
      %v1251 = vpop.f32.mrb[0].mxu0
      %v1252 = vadd.f32 0.0, %v1251
      %v1253 = vpop.f32.mrb[0].mxu0
      %1254 = vmatprep.mubr.f32.mxu0 0.0
      %1255 = vmatmul.mubr.f32.gmra.mrb[0].mxu0 %v1048
      %v1256 = vpop.f32.mrb[0].mxu0
      %v1257 = vadd.f32 0.0, %v1256
      %v1258 = vpop.f32.mrb[0].mxu0
      %1259 = vmatprep.mubr.f32.mxu0 0.0
      %1260 = vmatmul.mubr.f32.gmra.mrb[0].mxu0 %v1051
      %v1261 = vpop.f32.mrb[0].mxu0
      %v1262 = vadd.f32 0.0, %v1261
      %v1263 = vpop.f32.mrb[0].mxu0
      %1264 = vmatprep.mubr.f32.mxu0 0.0
      %1265 = vmatmul.mubr.f32.gmra.mrb[0].mxu0 %v1054
      %v1266 = vpop.f32.mrb[0].mxu0
      %v1267 = vadd.f32 0.0, %v1266
      %v1268 = vpop.f32.mrb[0].mxu0
      %1269 = vmatprep.mubr.f32.mxu0 0.0
      %1270 = vmatmul.mubr.f32.gmra.mrb[0].mxu0 %v1057
      %v1271 = vpop.f32.mrb[0].mxu0
      %v1272 = vadd.f32 0.0, %v1271
      %v1273 = vpop.f32.mrb[0].mxu0
      %1274 = vmatprep.mubr.f32.mxu0 0.0
      %1275 = vmatmul.mubr.f32.gmra.mrb[0].mxu0 %v1060
      %v1276 = vpop.f32.mrb[0].mxu0
      %v1277 = vadd.f32 0.0, %v1276
      %v1278 = vpop.f32.mrb[0].mxu0
      %1279 = vmatprep.mubr.f32.mxu0 0.0
      %1280 = vmatmul.mubr.f32.gmra.mrb[0].mxu0 %v1063
      %v1281 = vpop.f32.mrb[0].mxu0
      %v1282 = vadd.f32 0.0, %v1281
      %v1283 = vpop.f32.mrb[0].mxu0
      %1284 = vmatprep.mubr.f32.mxu0 0.0
      %1285 = vmatmul.mubr.f32.gmra.mrb[0].mxu0 %v1066
      %v1286 = vpop.f32.mrb[0].mxu0
      %v1287 = vadd.f32 0.0, %v1286
      %v1288 = vpop.f32.mrb[0].mxu0
      %1289 = vmatprep.mubr.f32.mxu0 0.0
      %1290 = vmatmul.mubr.f32.gmra.mrb[0].mxu0 %v1069
      %v1291 = vpop.f32.mrb[0].mxu0
      %v1292 = vadd.f32 0.0, %v1291
      %v1293 = vpop.f32.mrb[0].mxu0
      %1294 = vmatprep.mubr.f32.mxu0 0.0
      %1295 = vmatmul.mubr.f32.gmra.mrb[0].mxu0 %v1072
      %v1296 = vpop.f32.mrb[0].mxu0
      %v1297 = vadd.f32 0.0, %v1296
      %v1298 = vpop.f32.mrb[0].mxu0
      %1299 = vmatprep.mubr.f32.mxu0 0.0
      %1300 = vmatmul.mubr.f32.gmra.mrb[0].mxu0 %v1075
      %v1301 = vpop.f32.mrb[0].mxu0
      %v1302 = vadd.f32 0.0, %v1301
      %v1303 = vpop.f32.mrb[0].mxu0
      %1304 = vdwg.mxu0
      %v1305 = vadd.f32 %v483, %v1147
      %v1306 = vadd.f32 %v483, %v1152
      %v1307 = vadd.f32 %v483, %v1157
      %v1308 = vadd.f32 %v483, %v1162
      %v1309 = vadd.f32 %v483, %v1167
      %v1310 = vadd.f32 %v483, %v1172
      %v1311 = vadd.f32 %v483, %v1177
      %v1312 = vadd.f32 %v483, %v1182
      %v1313 = vadd.f32 %v483, %v1187
      %v1314 = vadd.f32 %v483, %v1192
      %v1315 = vadd.f32 %v483, %v1197
      %v1316 = vadd.f32 %v483, %v1202
      %v1317 = vadd.f32 %v483, %v1207
      %v1318 = vadd.f32 %v483, %v1212
      %v1319 = vadd.f32 %v483, %v1217
      %v1320 = vadd.f32 %v483, %v1222
      %v1321 = vadd.f32 %v483, %v1227
      %v1322 = vadd.f32 %v483, %v1232
      %v1323 = vadd.f32 %v483, %v1237
      %v1324 = vadd.f32 %v483, %v1242
      %v1325 = vadd.f32 %v483, %v1247
      %v1326 = vadd.f32 %v483, %v1252
      %v1327 = vadd.f32 %v483, %v1257
      %v1328 = vadd.f32 %v483, %v1262
      %v1329 = vadd.f32 %v483, %v1267
      %v1330 = vadd.f32 %v483, %v1272
      %v1331 = vadd.f32 %v483, %v1277
      %v1332 = vadd.f32 %v483, %v1282
      %v1333 = vadd.f32 %v483, %v1287
      %v1334 = vadd.f32 %v483, %v1292
      %v1335 = vadd.f32 %v483, %v1297
      %v1336 = vadd.f32 %v483, %v1302
      %v1342 = vrot.slane %v525, 1
      %v1343 = vrot.slane %v526, 1
      %v1344 = vsel %vm575, %v1342, %v1343
      %v1345 = vrot.slane %v527, 1
      %v1346 = vsel %vm575, %v1343, %v1345
      %v1347 = vrot.slane %v528, 1
      %v1348 = vsel %vm575, %v1345, %v1347
      %v1349 = vrot.slane %v529, 1
      %v1350 = vsel %vm575, %v1347, %v1349
      %1351 = vrot.lane.b32.xlu0 %v1344, 2
      %v1352 = vpop.permute.xlu0 %1351
      %1353 = vrot.lane.b32.xlu0 %v1346, 2
      %v1354 = vpop.permute.xlu0 %1353
      %1355 = vrot.lane.b32.xlu0 %v1348, 2
      %v1356 = vpop.permute.xlu0 %1355
      %1357 = vrot.lane.b32.xlu0 %v1350, 2
      %v1358 = vpop.permute.xlu0 %1357
      %v1363 = vrot.slane %v525, 2
      %v1364 = vrot.slane %v526, 2
      %v1365 = vsel %vm744, %v1363, %v1364
      %v1366 = vrot.slane %v527, 2
      %v1367 = vsel %vm744, %v1364, %v1366
      %v1368 = vrot.slane %v528, 2
      %v1369 = vsel %vm744, %v1366, %v1368
      %v1370 = vrot.slane %v529, 2
      %v1371 = vsel %vm744, %v1368, %v1370
      %1372 = vrot.lane.b32.xlu0 %v1365, 4
      %v1373 = vpop.permute.xlu0 %1372
      %1374 = vrot.lane.b32.xlu0 %v1367, 4
      %v1375 = vpop.permute.xlu0 %1374
      %1376 = vrot.lane.b32.xlu0 %v1369, 4
      %v1377 = vpop.permute.xlu0 %1376
      %1378 = vrot.lane.b32.xlu0 %v1371, 4
      %v1379 = vpop.permute.xlu0 %1378
      %v1384 = vsel %vm913, %v525, %v1352
      %v1385 = vsel %vm913, %v526, %v1354
      %v1386 = vsel %vm913, %v527, %v1356
      %v1387 = vsel %vm913, %v528, %v1358
      %v1388 = vsel %vm946, %v1384, %v1373
      %v1389 = vsel %vm946, %v1385, %v1375
      %v1390 = vsel %vm946, %v1386, %v1377
      %v1391 = vsel %vm946, %v1387, %v1379
      %s1392 = scalar_lea.vmem %s4, 8
      %v1393 = vld [vmem:[%s1392] sm:$0x3f]
      %v1395 = vsel %vm980, %v1388, 0
      %v1398 = vsel %vm980, %v1389, 0
      %v1401 = vsel %vm980, %v1390, 0
      %v1404 = vsel %vm980, %v1391, 0
      %v1407 = vsel %vm744, %v1393, 0
      %1409 = vmatprep.subr.mxu0 0.0
      %1410 = vmatpush1.msra.mxu0 %v1407
      %1411 = vmatprep.subr.mxu0 0.0
      %1412 = vmatpush1.msra.mxu0 0.0
      %1413 = vmatprep.subr.mxu0 0.0
      %1414 = vmatpush1.msra.mxu0 0.0
      %1415 = vmatprep.subr.mxu0 0.0
      %1416 = vmatpush1.msra.mxu0 0.0
      %1417 = vmatprep.subr.mxu0 0.0
      %1418 = vmatpush1.msra.mxu0 0.0
      %1419 = vmatprep.subr.mxu0 0.0
      %1420 = vmatpush1.msra.mxu0 0.0
      %1421 = vmatprep.subr.mxu0 0.0
      %1422 = vmatpush1.msra.mxu0 0.0
      %1423 = vmatprep.subr.mxu0 0.0
      %1424 = vmatpush1.msra.mxu0 0.0
      %1425 = vmatprep.subr.mxu0 0.0
      %1426 = vmatpush1.msra.mxu0 0.0
      %1427 = vmatprep.subr.mxu0 0.0
      %1428 = vmatpush1.msra.mxu0 0.0
      %1429 = vmatprep.subr.mxu0 0.0
      %1430 = vmatpush1.msra.mxu0 0.0
      %1431 = vmatprep.subr.mxu0 0.0
      %1432 = vmatpush1.msra.mxu0 0.0
      %1433 = vmatprep.subr.mxu0 0.0
      %1434 = vmatpush1.msra.mxu0 0.0
      %1435 = vmatprep.subr.mxu0 0.0
      %1436 = vmatpush1.msra.mxu0 0.0
      %1437 = vmatprep.subr.mxu0 0.0
      %1438 = vmatpush1.msra.mxu0 0.0
      %1439 = vmatprep.subr.mxu0 0.0
      %1440 = vmatpush1.msra.mxu0 0.0
      %1441 = vmatprep.subr.mxu0 0.0
      %1442 = vmatpush1.msra.mxu0 0.0
      %1443 = vmatprep.subr.mxu0 0.0
      %1444 = vmatpush1.msra.mxu0 0.0
      %1445 = vmatprep.subr.mxu0 0.0
      %1446 = vmatpush1.msra.mxu0 0.0
      %1447 = vmatprep.subr.mxu0 0.0
      %1448 = vmatpush1.msra.mxu0 0.0
      %1449 = vmatprep.subr.mxu0 0.0
      %1450 = vmatpush1.msra.mxu0 0.0
      %1451 = vmatprep.subr.mxu0 0.0
      %1452 = vmatpush1.msra.mxu0 0.0
      %1453 = vmatprep.subr.mxu0 0.0
      %1454 = vmatpush1.msra.mxu0 0.0
      %1455 = vmatprep.subr.mxu0 0.0
      %1456 = vmatpush1.msra.mxu0 0.0
      %1457 = vmatprep.subr.mxu0 0.0
      %1458 = vmatpush1.msra.mxu0 0.0
      %1459 = vmatprep.subr.mxu0 0.0
      %1460 = vmatpush1.msra.mxu0 0.0
      %1461 = vmatprep.subr.mxu0 0.0
      %1462 = vmatpush1.msra.mxu0 0.0
      %1463 = vmatprep.subr.mxu0 0.0
      %1464 = vmatpush1.msra.mxu0 0.0
      %1465 = vmatprep.subr.mxu0 0.0
      %1466 = vmatpush1.msra.mxu0 0.0
      %1467 = vmatprep.subr.mxu0 0.0
      %1468 = vmatpush1.msra.mxu0 0.0
      %1469 = vmatprep.subr.mxu0 0.0
      %1470 = vmatpush1.msra.mxu0 0.0
      %1471 = vmatprep.subr.mxu0 0.0
      %1472 = vmatpush1.msra.mxu0 0.0
      %1473 = vmatprep.mubr.f32.mxu0 0.0
      %1474 = vmatmul.mubr.f32.gmra.mrb[0].mxu0 %v994
      %v1475 = vpop.f32.mrb[0].mxu0
      %v1476 = vadd.f32 0.0, %v1475
      %v1477 = vpop.f32.mrb[0].mxu0
      %1478 = vmatprep.mubr.f32.mxu0 0.0
      %1479 = vmatmul.mubr.f32.gmra.mrb[0].mxu0 %v997
      %v1480 = vpop.f32.mrb[0].mxu0
      %v1481 = vadd.f32 0.0, %v1480
      %v1482 = vpop.f32.mrb[0].mxu0
      %1483 = vmatprep.mubr.f32.mxu0 0.0
      %1484 = vmatmul.mubr.f32.gmra.mrb[0].mxu0 %v1000
      %v1485 = vpop.f32.mrb[0].mxu0
      %v1486 = vadd.f32 0.0, %v1485
      %v1487 = vpop.f32.mrb[0].mxu0
      %1488 = vmatprep.mubr.f32.mxu0 0.0
      %1489 = vmatmul.mubr.f32.gmra.mrb[0].mxu0 %v1003
      %v1490 = vpop.f32.mrb[0].mxu0
      %v1491 = vadd.f32 0.0, %v1490
      %v1492 = vpop.f32.mrb[0].mxu0
      %1493 = vmatprep.mubr.f32.mxu0 0.0
      %1494 = vmatmul.mubr.f32.gmra.mrb[0].mxu0 %v1006
      %v1495 = vpop.f32.mrb[0].mxu0
      %v1496 = vadd.f32 0.0, %v1495
      %v1497 = vpop.f32.mrb[0].mxu0
      %1498 = vmatprep.mubr.f32.mxu0 0.0
      %1499 = vmatmul.mubr.f32.gmra.mrb[0].mxu0 %v1009
      %v1500 = vpop.f32.mrb[0].mxu0
      %v1501 = vadd.f32 0.0, %v1500
      %v1502 = vpop.f32.mrb[0].mxu0
      %1503 = vmatprep.mubr.f32.mxu0 0.0
      %1504 = vmatmul.mubr.f32.gmra.mrb[0].mxu0 %v1012
      %v1505 = vpop.f32.mrb[0].mxu0
      %v1506 = vadd.f32 0.0, %v1505
      %v1507 = vpop.f32.mrb[0].mxu0
      %1508 = vmatprep.mubr.f32.mxu0 0.0
      %1509 = vmatmul.mubr.f32.gmra.mrb[0].mxu0 %v1015
      %v1510 = vpop.f32.mrb[0].mxu0
      %v1511 = vadd.f32 0.0, %v1510
      %v1512 = vpop.f32.mrb[0].mxu0
      %1513 = vmatprep.mubr.f32.mxu0 0.0
      %1514 = vmatmul.mubr.f32.gmra.mrb[0].mxu0 %v1018
      %v1515 = vpop.f32.mrb[0].mxu0
      %v1516 = vadd.f32 0.0, %v1515
      %v1517 = vpop.f32.mrb[0].mxu0
      %1518 = vmatprep.mubr.f32.mxu0 0.0
      %1519 = vmatmul.mubr.f32.gmra.mrb[0].mxu0 %v1021
      %v1520 = vpop.f32.mrb[0].mxu0
      %v1521 = vadd.f32 0.0, %v1520
      %v1522 = vpop.f32.mrb[0].mxu0
      %1523 = vmatprep.mubr.f32.mxu0 0.0
      %1524 = vmatmul.mubr.f32.gmra.mrb[0].mxu0 %v1024
      %v1525 = vpop.f32.mrb[0].mxu0
      %v1526 = vadd.f32 0.0, %v1525
      %v1527 = vpop.f32.mrb[0].mxu0
      %1528 = vmatprep.mubr.f32.mxu0 0.0
      %1529 = vmatmul.mubr.f32.gmra.mrb[0].mxu0 %v1027
      %v1530 = vpop.f32.mrb[0].mxu0
      %v1531 = vadd.f32 0.0, %v1530
      %v1532 = vpop.f32.mrb[0].mxu0
      %1533 = vmatprep.mubr.f32.mxu0 0.0
      %1534 = vmatmul.mubr.f32.gmra.mrb[0].mxu0 %v1030
      %v1535 = vpop.f32.mrb[0].mxu0
      %v1536 = vadd.f32 0.0, %v1535
      %v1537 = vpop.f32.mrb[0].mxu0
      %1538 = vmatprep.mubr.f32.mxu0 0.0
      %1539 = vmatmul.mubr.f32.gmra.mrb[0].mxu0 %v1033
      %v1540 = vpop.f32.mrb[0].mxu0
      %v1541 = vadd.f32 0.0, %v1540
      %v1542 = vpop.f32.mrb[0].mxu0
      %1543 = vmatprep.mubr.f32.mxu0 0.0
      %1544 = vmatmul.mubr.f32.gmra.mrb[0].mxu0 %v1036
      %v1545 = vpop.f32.mrb[0].mxu0
      %v1546 = vadd.f32 0.0, %v1545
      %v1547 = vpop.f32.mrb[0].mxu0
      %1548 = vmatprep.mubr.f32.mxu0 0.0
      %1549 = vmatmul.mubr.f32.gmra.mrb[0].mxu0 %v1039
      %v1550 = vpop.f32.mrb[0].mxu0
      %v1551 = vadd.f32 0.0, %v1550
      %v1552 = vpop.f32.mrb[0].mxu0
      %1553 = vmatprep.mubr.f32.mxu0 0.0
      %1554 = vmatmul.mubr.f32.gmra.mrb[0].mxu0 %v1042
      %v1555 = vpop.f32.mrb[0].mxu0
      %v1556 = vadd.f32 0.0, %v1555
      %v1557 = vpop.f32.mrb[0].mxu0
      %1558 = vmatprep.mubr.f32.mxu0 0.0
      %1559 = vmatmul.mubr.f32.gmra.mrb[0].mxu0 %v1045
      %v1560 = vpop.f32.mrb[0].mxu0
      %v1561 = vadd.f32 0.0, %v1560
      %v1562 = vpop.f32.mrb[0].mxu0
      %1563 = vmatprep.mubr.f32.mxu0 0.0
      %1564 = vmatmul.mubr.f32.gmra.mrb[0].mxu0 %v1048
      %v1565 = vpop.f32.mrb[0].mxu0
      %v1566 = vadd.f32 0.0, %v1565
      %v1567 = vpop.f32.mrb[0].mxu0
      %1568 = vmatprep.mubr.f32.mxu0 0.0
      %1569 = vmatmul.mubr.f32.gmra.mrb[0].mxu0 %v1051
      %v1570 = vpop.f32.mrb[0].mxu0
      %v1571 = vadd.f32 0.0, %v1570
      %v1572 = vpop.f32.mrb[0].mxu0
      %1573 = vmatprep.mubr.f32.mxu0 0.0
      %1574 = vmatmul.mubr.f32.gmra.mrb[0].mxu0 %v1054
      %v1575 = vpop.f32.mrb[0].mxu0
      %v1576 = vadd.f32 0.0, %v1575
      %v1577 = vpop.f32.mrb[0].mxu0
      %1578 = vmatprep.mubr.f32.mxu0 0.0
      %1579 = vmatmul.mubr.f32.gmra.mrb[0].mxu0 %v1057
      %v1580 = vpop.f32.mrb[0].mxu0
      %v1581 = vadd.f32 0.0, %v1580
      %v1582 = vpop.f32.mrb[0].mxu0
      %1583 = vmatprep.mubr.f32.mxu0 0.0
      %1584 = vmatmul.mubr.f32.gmra.mrb[0].mxu0 %v1060
      %v1585 = vpop.f32.mrb[0].mxu0
      %v1586 = vadd.f32 0.0, %v1585
      %v1587 = vpop.f32.mrb[0].mxu0
      %1588 = vmatprep.mubr.f32.mxu0 0.0
      %1589 = vmatmul.mubr.f32.gmra.mrb[0].mxu0 %v1063
      %v1590 = vpop.f32.mrb[0].mxu0
      %v1591 = vadd.f32 0.0, %v1590
      %v1592 = vpop.f32.mrb[0].mxu0
      %1593 = vmatprep.mubr.f32.mxu0 0.0
      %1594 = vmatmul.mubr.f32.gmra.mrb[0].mxu0 %v1066
      %v1595 = vpop.f32.mrb[0].mxu0
      %v1596 = vadd.f32 0.0, %v1595
      %v1597 = vpop.f32.mrb[0].mxu0
      %1598 = vmatprep.mubr.f32.mxu0 0.0
      %1599 = vmatmul.mubr.f32.gmra.mrb[0].mxu0 %v1069
      %v1600 = vpop.f32.mrb[0].mxu0
      %v1601 = vadd.f32 0.0, %v1600
      %v1602 = vpop.f32.mrb[0].mxu0
      %1603 = vmatprep.mubr.f32.mxu0 0.0
      %1604 = vmatmul.mubr.f32.gmra.mrb[0].mxu0 %v1072
      %v1605 = vpop.f32.mrb[0].mxu0
      %v1606 = vadd.f32 0.0, %v1605
      %v1607 = vpop.f32.mrb[0].mxu0
      %1608 = vmatprep.mubr.f32.mxu0 0.0
      %1609 = vmatmul.mubr.f32.gmra.mrb[0].mxu0 %v1075
      %v1610 = vpop.f32.mrb[0].mxu0
      %v1611 = vadd.f32 0.0, %v1610
      %v1612 = vpop.f32.mrb[0].mxu0
      %1613 = vmatprep.mubr.f32.mxu0 0.0
      %1614 = vmatmul.mubr.f32.gmra.mrb[0].mxu0 %v1395
      %v1615 = vpop.f32.mrb[0].mxu0
      %v1616 = vadd.f32 0.0, %v1615
      %v1617 = vpop.f32.mrb[0].mxu0
      %1618 = vmatprep.mubr.f32.mxu0 0.0
      %1619 = vmatmul.mubr.f32.gmra.mrb[0].mxu0 %v1398
      %v1620 = vpop.f32.mrb[0].mxu0
      %v1621 = vadd.f32 0.0, %v1620
      %v1622 = vpop.f32.mrb[0].mxu0
      %1623 = vmatprep.mubr.f32.mxu0 0.0
      %1624 = vmatmul.mubr.f32.gmra.mrb[0].mxu0 %v1401
      %v1625 = vpop.f32.mrb[0].mxu0
      %v1626 = vadd.f32 0.0, %v1625
      %v1627 = vpop.f32.mrb[0].mxu0
      %1628 = vmatprep.mubr.f32.mxu0 0.0
      %1629 = vmatmul.mubr.f32.gmra.mrb[0].mxu0 %v1404
      %v1630 = vpop.f32.mrb[0].mxu0
      %v1631 = vadd.f32 0.0, %v1630
      %v1632 = vpop.f32.mrb[0].mxu0
      %1633 = vdwg.mxu0
      %v1634 = vadd.f32 %v1305, %v1476
      %v1635 = vadd.f32 %v1306, %v1481
      %v1636 = vadd.f32 %v1307, %v1486
      %v1637 = vadd.f32 %v1308, %v1491
      %v1638 = vadd.f32 %v1309, %v1496
      %v1639 = vadd.f32 %v1310, %v1501
      %v1640 = vadd.f32 %v1311, %v1506
      %v1641 = vadd.f32 %v1312, %v1511
      %v1642 = vadd.f32 %v1313, %v1516
      %v1643 = vadd.f32 %v1314, %v1521
      %v1644 = vadd.f32 %v1315, %v1526
      %v1645 = vadd.f32 %v1316, %v1531
      %v1646 = vadd.f32 %v1317, %v1536
      %v1647 = vadd.f32 %v1318, %v1541
      %v1648 = vadd.f32 %v1319, %v1546
      %v1649 = vadd.f32 %v1320, %v1551
      %v1650 = vadd.f32 %v1321, %v1556
      %v1651 = vadd.f32 %v1322, %v1561
      %v1652 = vadd.f32 %v1323, %v1566
      %v1653 = vadd.f32 %v1324, %v1571
      %v1654 = vadd.f32 %v1325, %v1576
      %v1655 = vadd.f32 %v1326, %v1581
      %v1656 = vadd.f32 %v1327, %v1586
      %v1657 = vadd.f32 %v1328, %v1591
      %v1658 = vadd.f32 %v1329, %v1596
      %v1659 = vadd.f32 %v1330, %v1601
      %v1660 = vadd.f32 %v1331, %v1606
      %v1661 = vadd.f32 %v1332, %v1611
      %v1662 = vadd.f32 %v1333, %v1616
      %v1663 = vadd.f32 %v1334, %v1621
      %v1664 = vadd.f32 %v1335, %v1626
      %v1665 = vadd.f32 %v1336, %v1631
      %v1671 = vrot.slane %v530, 1
      %v1672 = vrot.slane %v531, 1
      %v1673 = vsel %vm575, %v1671, %v1672
      %v1674 = vrot.slane %v532, 1
      %v1675 = vsel %vm575, %v1672, %v1674
      %v1676 = vrot.slane %v533, 1
      %v1677 = vsel %vm575, %v1674, %v1676
      %v1678 = vrot.slane %v534, 1
      %v1679 = vsel %vm575, %v1676, %v1678
      %1680 = vrot.lane.b32.xlu0 %v1673, 2
      %v1681 = vpop.permute.xlu0 %1680
      %1682 = vrot.lane.b32.xlu0 %v1675, 2
      %v1683 = vpop.permute.xlu0 %1682
      %1684 = vrot.lane.b32.xlu0 %v1677, 2
      %v1685 = vpop.permute.xlu0 %1684
      %1686 = vrot.lane.b32.xlu0 %v1679, 2
      %v1687 = vpop.permute.xlu0 %1686
      %v1692 = vrot.slane %v530, 2
      %v1693 = vrot.slane %v531, 2
      %v1694 = vsel %vm744, %v1692, %v1693
      %v1695 = vrot.slane %v532, 2
      %v1696 = vsel %vm744, %v1693, %v1695
      %v1697 = vrot.slane %v533, 2
      %v1698 = vsel %vm744, %v1695, %v1697
      %v1699 = vrot.slane %v534, 2
      %v1700 = vsel %vm744, %v1697, %v1699
      %1701 = vrot.lane.b32.xlu0 %v1694, 4
      %v1702 = vpop.permute.xlu0 %1701
      %1703 = vrot.lane.b32.xlu0 %v1696, 4
      %v1704 = vpop.permute.xlu0 %1703
      %1705 = vrot.lane.b32.xlu0 %v1698, 4
      %v1706 = vpop.permute.xlu0 %1705
      %1707 = vrot.lane.b32.xlu0 %v1700, 4
      %v1708 = vpop.permute.xlu0 %1707
      %v1713 = vsel %vm913, %v530, %v1681
      %v1714 = vsel %vm913, %v531, %v1683
      %v1715 = vsel %vm913, %v532, %v1685
      %v1716 = vsel %vm913, %v533, %v1687
      %v1717 = vsel %vm946, %v1713, %v1702
      %v1718 = vsel %vm946, %v1714, %v1704
      %v1719 = vsel %vm946, %v1715, %v1706
      %v1720 = vsel %vm946, %v1716, %v1708
      %s1721 = scalar_lea.vmem %s4, 16
      %v1722 = vld [vmem:[%s1721] sm:$0x3f]
      %v1724 = vsel %vm980, %v1717, 0
      %v1727 = vsel %vm980, %v1718, 0
      %v1730 = vsel %vm980, %v1719, 0
      %v1733 = vsel %vm980, %v1720, 0
      %v1736 = vsel %vm744, %v1722, 0
      %1738 = vmatprep.subr.mxu0 0.0
      %1739 = vmatpush1.msra.mxu0 %v1736
      %1740 = vmatprep.subr.mxu0 0.0
      %1741 = vmatpush1.msra.mxu0 0.0
      %1742 = vmatprep.subr.mxu0 0.0
      %1743 = vmatpush1.msra.mxu0 0.0
      %1744 = vmatprep.subr.mxu0 0.0
      %1745 = vmatpush1.msra.mxu0 0.0
      %1746 = vmatprep.subr.mxu0 0.0
      %1747 = vmatpush1.msra.mxu0 0.0
      %1748 = vmatprep.subr.mxu0 0.0
      %1749 = vmatpush1.msra.mxu0 0.0
      %1750 = vmatprep.subr.mxu0 0.0
      %1751 = vmatpush1.msra.mxu0 0.0
      %1752 = vmatprep.subr.mxu0 0.0
      %1753 = vmatpush1.msra.mxu0 0.0
      %1754 = vmatprep.subr.mxu0 0.0
      %1755 = vmatpush1.msra.mxu0 0.0
      %1756 = vmatprep.subr.mxu0 0.0
      %1757 = vmatpush1.msra.mxu0 0.0
      %1758 = vmatprep.subr.mxu0 0.0
      %1759 = vmatpush1.msra.mxu0 0.0
      %1760 = vmatprep.subr.mxu0 0.0
      %1761 = vmatpush1.msra.mxu0 0.0
      %1762 = vmatprep.subr.mxu0 0.0
      %1763 = vmatpush1.msra.mxu0 0.0
      %1764 = vmatprep.subr.mxu0 0.0
      %1765 = vmatpush1.msra.mxu0 0.0
      %1766 = vmatprep.subr.mxu0 0.0
      %1767 = vmatpush1.msra.mxu0 0.0
      %1768 = vmatprep.subr.mxu0 0.0
      %1769 = vmatpush1.msra.mxu0 0.0
      %1770 = vmatprep.subr.mxu0 0.0
      %1771 = vmatpush1.msra.mxu0 0.0
      %1772 = vmatprep.subr.mxu0 0.0
      %1773 = vmatpush1.msra.mxu0 0.0
      %1774 = vmatprep.subr.mxu0 0.0
      %1775 = vmatpush1.msra.mxu0 0.0
      %1776 = vmatprep.subr.mxu0 0.0
      %1777 = vmatpush1.msra.mxu0 0.0
      %1778 = vmatprep.subr.mxu0 0.0
      %1779 = vmatpush1.msra.mxu0 0.0
      %1780 = vmatprep.subr.mxu0 0.0
      %1781 = vmatpush1.msra.mxu0 0.0
      %1782 = vmatprep.subr.mxu0 0.0
      %1783 = vmatpush1.msra.mxu0 0.0
      %1784 = vmatprep.subr.mxu0 0.0
      %1785 = vmatpush1.msra.mxu0 0.0
      %1786 = vmatprep.subr.mxu0 0.0
      %1787 = vmatpush1.msra.mxu0 0.0
      %1788 = vmatprep.subr.mxu0 0.0
      %1789 = vmatpush1.msra.mxu0 0.0
      %1790 = vmatprep.subr.mxu0 0.0
      %1791 = vmatpush1.msra.mxu0 0.0
      %1792 = vmatprep.subr.mxu0 0.0
      %1793 = vmatpush1.msra.mxu0 0.0
      %1794 = vmatprep.subr.mxu0 0.0
      %1795 = vmatpush1.msra.mxu0 0.0
      %1796 = vmatprep.subr.mxu0 0.0
      %1797 = vmatpush1.msra.mxu0 0.0
      %1798 = vmatprep.subr.mxu0 0.0
      %1799 = vmatpush1.msra.mxu0 0.0
      %1800 = vmatprep.subr.mxu0 0.0
      %1801 = vmatpush1.msra.mxu0 0.0
      %1802 = vmatprep.mubr.f32.mxu0 0.0
      %1803 = vmatmul.mubr.f32.gmra.mrb[0].mxu0 %v1006
      %v1804 = vpop.f32.mrb[0].mxu0
      %v1805 = vadd.f32 0.0, %v1804
      %v1806 = vpop.f32.mrb[0].mxu0
      %1807 = vmatprep.mubr.f32.mxu0 0.0
      %1808 = vmatmul.mubr.f32.gmra.mrb[0].mxu0 %v1009
      %v1809 = vpop.f32.mrb[0].mxu0
      %v1810 = vadd.f32 0.0, %v1809
      %v1811 = vpop.f32.mrb[0].mxu0
      %1812 = vmatprep.mubr.f32.mxu0 0.0
      %1813 = vmatmul.mubr.f32.gmra.mrb[0].mxu0 %v1012
      %v1814 = vpop.f32.mrb[0].mxu0
      %v1815 = vadd.f32 0.0, %v1814
      %v1816 = vpop.f32.mrb[0].mxu0
      %1817 = vmatprep.mubr.f32.mxu0 0.0
      %1818 = vmatmul.mubr.f32.gmra.mrb[0].mxu0 %v1015
      %v1819 = vpop.f32.mrb[0].mxu0
      %v1820 = vadd.f32 0.0, %v1819
      %v1821 = vpop.f32.mrb[0].mxu0
      %1822 = vmatprep.mubr.f32.mxu0 0.0
      %1823 = vmatmul.mubr.f32.gmra.mrb[0].mxu0 %v1018
      %v1824 = vpop.f32.mrb[0].mxu0
      %v1825 = vadd.f32 0.0, %v1824
      %v1826 = vpop.f32.mrb[0].mxu0
      %1827 = vmatprep.mubr.f32.mxu0 0.0
      %1828 = vmatmul.mubr.f32.gmra.mrb[0].mxu0 %v1021
      %v1829 = vpop.f32.mrb[0].mxu0
      %v1830 = vadd.f32 0.0, %v1829
      %v1831 = vpop.f32.mrb[0].mxu0
      %1832 = vmatprep.mubr.f32.mxu0 0.0
      %1833 = vmatmul.mubr.f32.gmra.mrb[0].mxu0 %v1024
      %v1834 = vpop.f32.mrb[0].mxu0
      %v1835 = vadd.f32 0.0, %v1834
      %v1836 = vpop.f32.mrb[0].mxu0
      %1837 = vmatprep.mubr.f32.mxu0 0.0
      %1838 = vmatmul.mubr.f32.gmra.mrb[0].mxu0 %v1027
      %v1839 = vpop.f32.mrb[0].mxu0
      %v1840 = vadd.f32 0.0, %v1839
      %v1841 = vpop.f32.mrb[0].mxu0
      %1842 = vmatprep.mubr.f32.mxu0 0.0
      %1843 = vmatmul.mubr.f32.gmra.mrb[0].mxu0 %v1030
      %v1844 = vpop.f32.mrb[0].mxu0
      %v1845 = vadd.f32 0.0, %v1844
      %v1846 = vpop.f32.mrb[0].mxu0
      %1847 = vmatprep.mubr.f32.mxu0 0.0
      %1848 = vmatmul.mubr.f32.gmra.mrb[0].mxu0 %v1033
      %v1849 = vpop.f32.mrb[0].mxu0
      %v1850 = vadd.f32 0.0, %v1849
      %v1851 = vpop.f32.mrb[0].mxu0
      %1852 = vmatprep.mubr.f32.mxu0 0.0
      %1853 = vmatmul.mubr.f32.gmra.mrb[0].mxu0 %v1036
      %v1854 = vpop.f32.mrb[0].mxu0
      %v1855 = vadd.f32 0.0, %v1854
      %v1856 = vpop.f32.mrb[0].mxu0
      %1857 = vmatprep.mubr.f32.mxu0 0.0
      %1858 = vmatmul.mubr.f32.gmra.mrb[0].mxu0 %v1039
      %v1859 = vpop.f32.mrb[0].mxu0
      %v1860 = vadd.f32 0.0, %v1859
      %v1861 = vpop.f32.mrb[0].mxu0
      %1862 = vmatprep.mubr.f32.mxu0 0.0
      %1863 = vmatmul.mubr.f32.gmra.mrb[0].mxu0 %v1042
      %v1864 = vpop.f32.mrb[0].mxu0
      %v1865 = vadd.f32 0.0, %v1864
      %v1866 = vpop.f32.mrb[0].mxu0
      %1867 = vmatprep.mubr.f32.mxu0 0.0
      %1868 = vmatmul.mubr.f32.gmra.mrb[0].mxu0 %v1045
      %v1869 = vpop.f32.mrb[0].mxu0
      %v1870 = vadd.f32 0.0, %v1869
      %v1871 = vpop.f32.mrb[0].mxu0
      %1872 = vmatprep.mubr.f32.mxu0 0.0
      %1873 = vmatmul.mubr.f32.gmra.mrb[0].mxu0 %v1048
      %v1874 = vpop.f32.mrb[0].mxu0
      %v1875 = vadd.f32 0.0, %v1874
      %v1876 = vpop.f32.mrb[0].mxu0
      %1877 = vmatprep.mubr.f32.mxu0 0.0
      %1878 = vmatmul.mubr.f32.gmra.mrb[0].mxu0 %v1051
      %v1879 = vpop.f32.mrb[0].mxu0
      %v1880 = vadd.f32 0.0, %v1879
      %v1881 = vpop.f32.mrb[0].mxu0
      %1882 = vmatprep.mubr.f32.mxu0 0.0
      %1883 = vmatmul.mubr.f32.gmra.mrb[0].mxu0 %v1054
      %v1884 = vpop.f32.mrb[0].mxu0
      %v1885 = vadd.f32 0.0, %v1884
      %v1886 = vpop.f32.mrb[0].mxu0
      %1887 = vmatprep.mubr.f32.mxu0 0.0
      %1888 = vmatmul.mubr.f32.gmra.mrb[0].mxu0 %v1057
      %v1889 = vpop.f32.mrb[0].mxu0
      %v1890 = vadd.f32 0.0, %v1889
      %v1891 = vpop.f32.mrb[0].mxu0
      %1892 = vmatprep.mubr.f32.mxu0 0.0
      %1893 = vmatmul.mubr.f32.gmra.mrb[0].mxu0 %v1060
      %v1894 = vpop.f32.mrb[0].mxu0
      %v1895 = vadd.f32 0.0, %v1894
      %v1896 = vpop.f32.mrb[0].mxu0
      %1897 = vmatprep.mubr.f32.mxu0 0.0
      %1898 = vmatmul.mubr.f32.gmra.mrb[0].mxu0 %v1063
      %v1899 = vpop.f32.mrb[0].mxu0
      %v1900 = vadd.f32 0.0, %v1899
      %v1901 = vpop.f32.mrb[0].mxu0
      %1902 = vmatprep.mubr.f32.mxu0 0.0
      %1903 = vmatmul.mubr.f32.gmra.mrb[0].mxu0 %v1066
      %v1904 = vpop.f32.mrb[0].mxu0
      %v1905 = vadd.f32 0.0, %v1904
      %v1906 = vpop.f32.mrb[0].mxu0
      %1907 = vmatprep.mubr.f32.mxu0 0.0
      %1908 = vmatmul.mubr.f32.gmra.mrb[0].mxu0 %v1069
      %v1909 = vpop.f32.mrb[0].mxu0
      %v1910 = vadd.f32 0.0, %v1909
      %v1911 = vpop.f32.mrb[0].mxu0
      %1912 = vmatprep.mubr.f32.mxu0 0.0
      %1913 = vmatmul.mubr.f32.gmra.mrb[0].mxu0 %v1072
      %v1914 = vpop.f32.mrb[0].mxu0
      %v1915 = vadd.f32 0.0, %v1914
      %v1916 = vpop.f32.mrb[0].mxu0
      %1917 = vmatprep.mubr.f32.mxu0 0.0
      %1918 = vmatmul.mubr.f32.gmra.mrb[0].mxu0 %v1075
      %v1919 = vpop.f32.mrb[0].mxu0
      %v1920 = vadd.f32 0.0, %v1919
      %v1921 = vpop.f32.mrb[0].mxu0
      %1922 = vmatprep.mubr.f32.mxu0 0.0
      %1923 = vmatmul.mubr.f32.gmra.mrb[0].mxu0 %v1395
      %v1924 = vpop.f32.mrb[0].mxu0
      %v1925 = vadd.f32 0.0, %v1924
      %v1926 = vpop.f32.mrb[0].mxu0
      %1927 = vmatprep.mubr.f32.mxu0 0.0
      %1928 = vmatmul.mubr.f32.gmra.mrb[0].mxu0 %v1398
      %v1929 = vpop.f32.mrb[0].mxu0
      %v1930 = vadd.f32 0.0, %v1929
      %v1931 = vpop.f32.mrb[0].mxu0
      %1932 = vmatprep.mubr.f32.mxu0 0.0
      %1933 = vmatmul.mubr.f32.gmra.mrb[0].mxu0 %v1401
      %v1934 = vpop.f32.mrb[0].mxu0
      %v1935 = vadd.f32 0.0, %v1934
      %v1936 = vpop.f32.mrb[0].mxu0
      %1937 = vmatprep.mubr.f32.mxu0 0.0
      %1938 = vmatmul.mubr.f32.gmra.mrb[0].mxu0 %v1404
      %v1939 = vpop.f32.mrb[0].mxu0
      %v1940 = vadd.f32 0.0, %v1939
      %v1941 = vpop.f32.mrb[0].mxu0
      %1942 = vmatprep.mubr.f32.mxu0 0.0
      %1943 = vmatmul.mubr.f32.gmra.mrb[0].mxu0 %v1724
      %v1944 = vpop.f32.mrb[0].mxu0
      %v1945 = vadd.f32 0.0, %v1944
      %v1946 = vpop.f32.mrb[0].mxu0
      %1947 = vmatprep.mubr.f32.mxu0 0.0
      %1948 = vmatmul.mubr.f32.gmra.mrb[0].mxu0 %v1727
      %v1949 = vpop.f32.mrb[0].mxu0
      %v1950 = vadd.f32 0.0, %v1949
      %v1951 = vpop.f32.mrb[0].mxu0
      %1952 = vmatprep.mubr.f32.mxu0 0.0
      %1953 = vmatmul.mubr.f32.gmra.mrb[0].mxu0 %v1730
      %v1954 = vpop.f32.mrb[0].mxu0
      %v1955 = vadd.f32 0.0, %v1954
      %v1956 = vpop.f32.mrb[0].mxu0
      %1957 = vmatprep.mubr.f32.mxu0 0.0
      %1958 = vmatmul.mubr.f32.gmra.mrb[0].mxu0 %v1733
      %v1959 = vpop.f32.mrb[0].mxu0
      %v1960 = vadd.f32 0.0, %v1959
      %v1961 = vpop.f32.mrb[0].mxu0
      %1962 = vdwg.mxu0
      %v1963 = vadd.f32 %v1634, %v1805
      %v1964 = vadd.f32 %v1635, %v1810
      %v1965 = vadd.f32 %v1636, %v1815
      %v1966 = vadd.f32 %v1637, %v1820
      %v1967 = vadd.f32 %v1638, %v1825
      %v1968 = vadd.f32 %v1639, %v1830
      %v1969 = vadd.f32 %v1640, %v1835
      %v1970 = vadd.f32 %v1641, %v1840
      %v1971 = vadd.f32 %v1642, %v1845
      %v1972 = vadd.f32 %v1643, %v1850
      %v1973 = vadd.f32 %v1644, %v1855
      %v1974 = vadd.f32 %v1645, %v1860
      %v1975 = vadd.f32 %v1646, %v1865
      %v1976 = vadd.f32 %v1647, %v1870
      %v1977 = vadd.f32 %v1648, %v1875
      %v1978 = vadd.f32 %v1649, %v1880
      %v1979 = vadd.f32 %v1650, %v1885
      %v1980 = vadd.f32 %v1651, %v1890
      %v1981 = vadd.f32 %v1652, %v1895
      %v1982 = vadd.f32 %v1653, %v1900
      %v1983 = vadd.f32 %v1654, %v1905
      %v1984 = vadd.f32 %v1655, %v1910
      %v1985 = vadd.f32 %v1656, %v1915
      %v1986 = vadd.f32 %v1657, %v1920
      %v1987 = vadd.f32 %v1658, %v1925
      %v1988 = vadd.f32 %v1659, %v1930
      %v1989 = vadd.f32 %v1660, %v1935
      %v1990 = vadd.f32 %v1661, %v1940
      %v1991 = vadd.f32 %v1662, %v1945
      %v1992 = vadd.f32 %v1663, %v1950
      %v1993 = vadd.f32 %v1664, %v1955
      %v1994 = vadd.f32 %v1665, %v1960
      %v1995 = vld [vmem:[%s452] sm:$0xff]
      %v1996 = vld [vmem:[%s452 + $0x8] sm:$0xff]
      %v1997 = vld [vmem:[%s452 + $0x10] sm:$0xff]
      %v1998 = vld [vmem:[%s452 + $0x18] sm:$0xff]
      %v1999 = vld [vmem:[%s452 + $0x20] sm:$0x3]
      %v2000 = vld [vmem:[%s452 + $0x28] sm:$0xff]
      %v2001 = vld [vmem:[%s452 + $0x30] sm:$0xff]
      %v2002 = vld [vmem:[%s452 + $0x38] sm:$0xff]
      %v2003 = vld [vmem:[%s452 + $0x40] sm:$0xff]
      %v2004 = vld [vmem:[%s452 + $0x48] sm:$0x3]
      %v2005 = vld [vmem:[%s452 + $0x50] sm:$0xff]
      %v2006 = vld [vmem:[%s452 + $0x58] sm:$0xff]
      %v2007 = vld [vmem:[%s452 + $0x60] sm:$0xff]
      %v2008 = vld [vmem:[%s452 + $0x68] sm:$0xff]
      %v2009 = vld [vmem:[%s452 + $0x70] sm:$0x3]
      %v2010 = vld [vmem:[%s452 + $0x78] sm:$0xff]
      %v2011 = vld [vmem:[%s452 + $0x80] sm:$0xff]
      %v2012 = vld [vmem:[%s452 + $0x88] sm:$0xff]
      %v2013 = vld [vmem:[%s452 + $0x90] sm:$0xff]
      %v2014 = vld [vmem:[%s452 + $0x98] sm:$0x3]
      %v2015 = vld [vmem:[%s452 + $0xa0] sm:$0xff]
      %v2016 = vld [vmem:[%s452 + $0xa8] sm:$0xff]
      %v2017 = vld [vmem:[%s452 + $0xb0] sm:$0xff]
      %v2018 = vld [vmem:[%s452 + $0xb8] sm:$0xff]
      %v2019 = vld [vmem:[%s452 + $0xc0] sm:$0x3]
      %v2020 = vld [vmem:[%s452 + $0xc8] sm:$0xff]
      %v2021 = vld [vmem:[%s452 + $0xd0] sm:$0xff]
      %v2022 = vld [vmem:[%s452 + $0xd8] sm:$0xff]
      %v2023 = vld [vmem:[%s452 + $0xe0] sm:$0xff]
      %v2024 = vld [vmem:[%s452 + $0xe8] sm:$0x3]
      %v2025 = vld [vmem:[%s452 + $0xf0] sm:$0xff]
      %v2026 = vld [vmem:[%s452 + $0xf8] sm:$0xff]
      %v2027 = vld [vmem:[%s452 + $0x100] sm:$0xff]
      %v2028 = vld [vmem:[%s452 + $0x108] sm:$0xff]
      %v2029 = vld [vmem:[%s452 + $0x110] sm:$0x3]
      %v2030 = vld [vmem:[%s452 + $0x118] sm:$0xff]
      %v2031 = vld [vmem:[%s452 + $0x120] sm:$0xff]
      %v2032 = vld [vmem:[%s452 + $0x128] sm:$0xff]
      %v2033 = vld [vmem:[%s452 + $0x130] sm:$0xff]
      %v2034 = vld [vmem:[%s452 + $0x138] sm:$0x3]
      %v2035 = vld [vmem:[%s467] sm:$0xff]
      %v2036 = vld [vmem:[%s467 + $0x8] sm:$0xff]
      %v2037 = vld [vmem:[%s467 + $0x10] sm:$0xff]
      %v2038 = vld [vmem:[%s467 + $0x18] sm:$0xff]
      %v2039 = vld [vmem:[%s467 + $0x20] sm:$0x3]
      %v2040 = vld [vmem:[%s467 + $0x28] sm:$0xff]
      %v2041 = vld [vmem:[%s467 + $0x30] sm:$0xff]
      %v2042 = vld [vmem:[%s467 + $0x38] sm:$0xff]
      %v2043 = vld [vmem:[%s467 + $0x40] sm:$0xff]
      %v2044 = vld [vmem:[%s467 + $0x48] sm:$0x3]
      %v2085 = vrot.slane %v1995, 1
      %v2086 = vrot.slane %v1996, 1
      %v2087 = vsel %vm575, %v2085, %v2086
      %v2088 = vrot.slane %v1997, 1
      %v2089 = vsel %vm575, %v2086, %v2088
      %v2090 = vrot.slane %v1998, 1
      %v2091 = vsel %vm575, %v2088, %v2090
      %v2092 = vrot.slane %v1999, 1
      %v2093 = vsel %vm575, %v2090, %v2092
      %v2094 = vrot.slane %v2000, 1
      %v2095 = vrot.slane %v2001, 1
      %v2096 = vsel %vm575, %v2094, %v2095
      %v2097 = vrot.slane %v2002, 1
      %v2098 = vsel %vm575, %v2095, %v2097
      %v2099 = vrot.slane %v2003, 1
      %v2100 = vsel %vm575, %v2097, %v2099
      %v2101 = vrot.slane %v2004, 1
      %v2102 = vsel %vm575, %v2099, %v2101
      %v2103 = vrot.slane %v2005, 1
      %v2104 = vrot.slane %v2006, 1
      %v2105 = vsel %vm575, %v2103, %v2104
      %v2106 = vrot.slane %v2007, 1
      %v2107 = vsel %vm575, %v2104, %v2106
      %v2108 = vrot.slane %v2008, 1
      %v2109 = vsel %vm575, %v2106, %v2108
      %v2110 = vrot.slane %v2009, 1
      %v2111 = vsel %vm575, %v2108, %v2110
      %v2112 = vrot.slane %v2010, 1
      %v2113 = vrot.slane %v2011, 1
      %v2114 = vsel %vm575, %v2112, %v2113
      %v2115 = vrot.slane %v2012, 1
      %v2116 = vsel %vm575, %v2113, %v2115
      %v2117 = vrot.slane %v2013, 1
      %v2118 = vsel %vm575, %v2115, %v2117
      %v2119 = vrot.slane %v2014, 1
      %v2120 = vsel %vm575, %v2117, %v2119
      %v2121 = vrot.slane %v2015, 1
      %v2122 = vrot.slane %v2016, 1
      %v2123 = vsel %vm575, %v2121, %v2122
      %v2124 = vrot.slane %v2017, 1
      %v2125 = vsel %vm575, %v2122, %v2124
      %v2126 = vrot.slane %v2018, 1
      %v2127 = vsel %vm575, %v2124, %v2126
      %v2128 = vrot.slane %v2019, 1
      %v2129 = vsel %vm575, %v2126, %v2128
      %v2130 = vrot.slane %v2020, 1
      %v2131 = vrot.slane %v2021, 1
      %v2132 = vsel %vm575, %v2130, %v2131
      %v2133 = vrot.slane %v2022, 1
      %v2134 = vsel %vm575, %v2131, %v2133
      %v2135 = vrot.slane %v2023, 1
      %v2136 = vsel %vm575, %v2133, %v2135
      %v2137 = vrot.slane %v2024, 1
      %v2138 = vsel %vm575, %v2135, %v2137
      %v2139 = vrot.slane %v2025, 1
      %v2140 = vrot.slane %v2026, 1
      %v2141 = vsel %vm575, %v2139, %v2140
      %v2142 = vrot.slane %v2027, 1
      %v2143 = vsel %vm575, %v2140, %v2142
      %v2144 = vrot.slane %v2028, 1
      %v2145 = vsel %vm575, %v2142, %v2144
      %v2146 = vrot.slane %v2029, 1
      %v2147 = vsel %vm575, %v2144, %v2146
      %v2148 = vrot.slane %v2030, 1
      %v2149 = vrot.slane %v2031, 1
      %v2150 = vsel %vm575, %v2148, %v2149
      %v2151 = vrot.slane %v2032, 1
      %v2152 = vsel %vm575, %v2149, %v2151
      %v2153 = vrot.slane %v2033, 1
      %v2154 = vsel %vm575, %v2151, %v2153
      %v2155 = vrot.slane %v2034, 1
      %v2156 = vsel %vm575, %v2153, %v2155
      %2157 = vrot.lane.b32.xlu0 %v2087, 2
      %v2158 = vpop.permute.xlu0 %2157
      %2159 = vrot.lane.b32.xlu0 %v2089, 2
      %v2160 = vpop.permute.xlu0 %2159
      %2161 = vrot.lane.b32.xlu0 %v2091, 2
      %v2162 = vpop.permute.xlu0 %2161
      %2163 = vrot.lane.b32.xlu0 %v2093, 2
      %v2164 = vpop.permute.xlu0 %2163
      %2165 = vrot.lane.b32.xlu0 %v2096, 2
      %v2166 = vpop.permute.xlu0 %2165
      %2167 = vrot.lane.b32.xlu0 %v2098, 2
      %v2168 = vpop.permute.xlu0 %2167
      %2169 = vrot.lane.b32.xlu0 %v2100, 2
      %v2170 = vpop.permute.xlu0 %2169
      %2171 = vrot.lane.b32.xlu0 %v2102, 2
      %v2172 = vpop.permute.xlu0 %2171
      %2173 = vrot.lane.b32.xlu0 %v2105, 2
      %v2174 = vpop.permute.xlu0 %2173
      %2175 = vrot.lane.b32.xlu0 %v2107, 2
      %v2176 = vpop.permute.xlu0 %2175
      %2177 = vrot.lane.b32.xlu0 %v2109, 2
      %v2178 = vpop.permute.xlu0 %2177
      %2179 = vrot.lane.b32.xlu0 %v2111, 2
      %v2180 = vpop.permute.xlu0 %2179
      %2181 = vrot.lane.b32.xlu0 %v2114, 2
      %v2182 = vpop.permute.xlu0 %2181
      %2183 = vrot.lane.b32.xlu0 %v2116, 2
      %v2184 = vpop.permute.xlu0 %2183
      %2185 = vrot.lane.b32.xlu0 %v2118, 2
      %v2186 = vpop.permute.xlu0 %2185
      %2187 = vrot.lane.b32.xlu0 %v2120, 2
      %v2188 = vpop.permute.xlu0 %2187
      %2189 = vrot.lane.b32.xlu0 %v2123, 2
      %v2190 = vpop.permute.xlu0 %2189
      %2191 = vrot.lane.b32.xlu0 %v2125, 2
      %v2192 = vpop.permute.xlu0 %2191
      %2193 = vrot.lane.b32.xlu0 %v2127, 2
      %v2194 = vpop.permute.xlu0 %2193
      %2195 = vrot.lane.b32.xlu0 %v2129, 2
      %v2196 = vpop.permute.xlu0 %2195
      %2197 = vrot.lane.b32.xlu0 %v2132, 2
      %v2198 = vpop.permute.xlu0 %2197
      %2199 = vrot.lane.b32.xlu0 %v2134, 2
      %v2200 = vpop.permute.xlu0 %2199
      %2201 = vrot.lane.b32.xlu0 %v2136, 2
      %v2202 = vpop.permute.xlu0 %2201
      %2203 = vrot.lane.b32.xlu0 %v2138, 2
      %v2204 = vpop.permute.xlu0 %2203
      %2205 = vrot.lane.b32.xlu0 %v2141, 2
      %v2206 = vpop.permute.xlu0 %2205
      %2207 = vrot.lane.b32.xlu0 %v2143, 2
      %v2208 = vpop.permute.xlu0 %2207
      %2209 = vrot.lane.b32.xlu0 %v2145, 2
      %v2210 = vpop.permute.xlu0 %2209
      %2211 = vrot.lane.b32.xlu0 %v2147, 2
      %v2212 = vpop.permute.xlu0 %2211
      %2213 = vrot.lane.b32.xlu0 %v2150, 2
      %v2214 = vpop.permute.xlu0 %2213
      %2215 = vrot.lane.b32.xlu0 %v2152, 2
      %v2216 = vpop.permute.xlu0 %2215
      %2217 = vrot.lane.b32.xlu0 %v2154, 2
      %v2218 = vpop.permute.xlu0 %2217
      %2219 = vrot.lane.b32.xlu0 %v2156, 2
      %v2220 = vpop.permute.xlu0 %2219
      %v2253 = vrot.slane %v1995, 2
      %v2254 = vrot.slane %v1996, 2
      %v2255 = vsel %vm744, %v2253, %v2254
      %v2256 = vrot.slane %v1997, 2
      %v2257 = vsel %vm744, %v2254, %v2256
      %v2258 = vrot.slane %v1998, 2
      %v2259 = vsel %vm744, %v2256, %v2258
      %v2260 = vrot.slane %v1999, 2
      %v2261 = vsel %vm744, %v2258, %v2260
      %v2262 = vrot.slane %v2000, 2
      %v2263 = vrot.slane %v2001, 2
      %v2264 = vsel %vm744, %v2262, %v2263
      %v2265 = vrot.slane %v2002, 2
      %v2266 = vsel %vm744, %v2263, %v2265
      %v2267 = vrot.slane %v2003, 2
      %v2268 = vsel %vm744, %v2265, %v2267
      %v2269 = vrot.slane %v2004, 2
      %v2270 = vsel %vm744, %v2267, %v2269
      %v2271 = vrot.slane %v2005, 2
      %v2272 = vrot.slane %v2006, 2
      %v2273 = vsel %vm744, %v2271, %v2272
      %v2274 = vrot.slane %v2007, 2
      %v2275 = vsel %vm744, %v2272, %v2274
      %v2276 = vrot.slane %v2008, 2
      %v2277 = vsel %vm744, %v2274, %v2276
      %v2278 = vrot.slane %v2009, 2
      %v2279 = vsel %vm744, %v2276, %v2278
      %v2280 = vrot.slane %v2010, 2
      %v2281 = vrot.slane %v2011, 2
      %v2282 = vsel %vm744, %v2280, %v2281
      %v2283 = vrot.slane %v2012, 2
      %v2284 = vsel %vm744, %v2281, %v2283
      %v2285 = vrot.slane %v2013, 2
      %v2286 = vsel %vm744, %v2283, %v2285
      %v2287 = vrot.slane %v2014, 2
      %v2288 = vsel %vm744, %v2285, %v2287
      %v2289 = vrot.slane %v2015, 2
      %v2290 = vrot.slane %v2016, 2
      %v2291 = vsel %vm744, %v2289, %v2290
      %v2292 = vrot.slane %v2017, 2
      %v2293 = vsel %vm744, %v2290, %v2292
      %v2294 = vrot.slane %v2018, 2
      %v2295 = vsel %vm744, %v2292, %v2294
      %v2296 = vrot.slane %v2019, 2
      %v2297 = vsel %vm744, %v2294, %v2296
      %v2298 = vrot.slane %v2020, 2
      %v2299 = vrot.slane %v2021, 2
      %v2300 = vsel %vm744, %v2298, %v2299
      %v2301 = vrot.slane %v2022, 2
      %v2302 = vsel %vm744, %v2299, %v2301
      %v2303 = vrot.slane %v2023, 2
      %v2304 = vsel %vm744, %v2301, %v2303
      %v2305 = vrot.slane %v2024, 2
      %v2306 = vsel %vm744, %v2303, %v2305
      %v2307 = vrot.slane %v2025, 2
      %v2308 = vrot.slane %v2026, 2
      %v2309 = vsel %vm744, %v2307, %v2308
      %v2310 = vrot.slane %v2027, 2
      %v2311 = vsel %vm744, %v2308, %v2310
      %v2312 = vrot.slane %v2028, 2
      %v2313 = vsel %vm744, %v2310, %v2312
      %v2314 = vrot.slane %v2029, 2
      %v2315 = vsel %vm744, %v2312, %v2314
      %v2316 = vrot.slane %v2030, 2
      %v2317 = vrot.slane %v2031, 2
      %v2318 = vsel %vm744, %v2316, %v2317
      %v2319 = vrot.slane %v2032, 2
      %v2320 = vsel %vm744, %v2317, %v2319
      %v2321 = vrot.slane %v2033, 2
      %v2322 = vsel %vm744, %v2319, %v2321
      %v2323 = vrot.slane %v2034, 2
      %v2324 = vsel %vm744, %v2321, %v2323
      %2325 = vrot.lane.b32.xlu0 %v2255, 4
      %v2326 = vpop.permute.xlu0 %2325
      %2327 = vrot.lane.b32.xlu0 %v2257, 4
      %v2328 = vpop.permute.xlu0 %2327
      %2329 = vrot.lane.b32.xlu0 %v2259, 4
      %v2330 = vpop.permute.xlu0 %2329
      %2331 = vrot.lane.b32.xlu0 %v2261, 4
      %v2332 = vpop.permute.xlu0 %2331
      %2333 = vrot.lane.b32.xlu0 %v2264, 4
      %v2334 = vpop.permute.xlu0 %2333
      %2335 = vrot.lane.b32.xlu0 %v2266, 4
      %v2336 = vpop.permute.xlu0 %2335
      %2337 = vrot.lane.b32.xlu0 %v2268, 4
      %v2338 = vpop.permute.xlu0 %2337
      %2339 = vrot.lane.b32.xlu0 %v2270, 4
      %v2340 = vpop.permute.xlu0 %2339
      %2341 = vrot.lane.b32.xlu0 %v2273, 4
      %v2342 = vpop.permute.xlu0 %2341
      %2343 = vrot.lane.b32.xlu0 %v2275, 4
      %v2344 = vpop.permute.xlu0 %2343
      %2345 = vrot.lane.b32.xlu0 %v2277, 4
      %v2346 = vpop.permute.xlu0 %2345
      %2347 = vrot.lane.b32.xlu0 %v2279, 4
      %v2348 = vpop.permute.xlu0 %2347
      %2349 = vrot.lane.b32.xlu0 %v2282, 4
      %v2350 = vpop.permute.xlu0 %2349
      %2351 = vrot.lane.b32.xlu0 %v2284, 4
      %v2352 = vpop.permute.xlu0 %2351
      %2353 = vrot.lane.b32.xlu0 %v2286, 4
      %v2354 = vpop.permute.xlu0 %2353
      %2355 = vrot.lane.b32.xlu0 %v2288, 4
      %v2356 = vpop.permute.xlu0 %2355
      %2357 = vrot.lane.b32.xlu0 %v2291, 4
      %v2358 = vpop.permute.xlu0 %2357
      %2359 = vrot.lane.b32.xlu0 %v2293, 4
      %v2360 = vpop.permute.xlu0 %2359
      %2361 = vrot.lane.b32.xlu0 %v2295, 4
      %v2362 = vpop.permute.xlu0 %2361
      %2363 = vrot.lane.b32.xlu0 %v2297, 4
      %v2364 = vpop.permute.xlu0 %2363
      %2365 = vrot.lane.b32.xlu0 %v2300, 4
      %v2366 = vpop.permute.xlu0 %2365
      %2367 = vrot.lane.b32.xlu0 %v2302, 4
      %v2368 = vpop.permute.xlu0 %2367
      %2369 = vrot.lane.b32.xlu0 %v2304, 4
      %v2370 = vpop.permute.xlu0 %2369
      %2371 = vrot.lane.b32.xlu0 %v2306, 4
      %v2372 = vpop.permute.xlu0 %2371
      %2373 = vrot.lane.b32.xlu0 %v2309, 4
      %v2374 = vpop.permute.xlu0 %2373
      %2375 = vrot.lane.b32.xlu0 %v2311, 4
      %v2376 = vpop.permute.xlu0 %2375
      %2377 = vrot.lane.b32.xlu0 %v2313, 4
      %v2378 = vpop.permute.xlu0 %2377
      %2379 = vrot.lane.b32.xlu0 %v2315, 4
      %v2380 = vpop.permute.xlu0 %2379
      %2381 = vrot.lane.b32.xlu0 %v2318, 4
      %v2382 = vpop.permute.xlu0 %2381
      %2383 = vrot.lane.b32.xlu0 %v2320, 4
      %v2384 = vpop.permute.xlu0 %2383
      %2385 = vrot.lane.b32.xlu0 %v2322, 4
      %v2386 = vpop.permute.xlu0 %2385
      %2387 = vrot.lane.b32.xlu0 %v2324, 4
      %v2388 = vpop.permute.xlu0 %2387
      %v2421 = vsel %vm913, %v1995, %v2158
      %v2422 = vsel %vm913, %v1996, %v2160
      %v2423 = vsel %vm913, %v1997, %v2162
      %v2424 = vsel %vm913, %v1998, %v2164
      %v2425 = vsel %vm913, %v2000, %v2166
      %v2426 = vsel %vm913, %v2001, %v2168
      %v2427 = vsel %vm913, %v2002, %v2170
      %v2428 = vsel %vm913, %v2003, %v2172
      %v2429 = vsel %vm913, %v2005, %v2174
      %v2430 = vsel %vm913, %v2006, %v2176
      %v2431 = vsel %vm913, %v2007, %v2178
      %v2432 = vsel %vm913, %v2008, %v2180
      %v2433 = vsel %vm913, %v2010, %v2182
      %v2434 = vsel %vm913, %v2011, %v2184
      %v2435 = vsel %vm913, %v2012, %v2186
      %v2436 = vsel %vm913, %v2013, %v2188
      %v2437 = vsel %vm913, %v2015, %v2190
      %v2438 = vsel %vm913, %v2016, %v2192
      %v2439 = vsel %vm913, %v2017, %v2194
      %v2440 = vsel %vm913, %v2018, %v2196
      %v2441 = vsel %vm913, %v2020, %v2198
      %v2442 = vsel %vm913, %v2021, %v2200
      %v2443 = vsel %vm913, %v2022, %v2202
      %v2444 = vsel %vm913, %v2023, %v2204
      %v2445 = vsel %vm913, %v2025, %v2206
      %v2446 = vsel %vm913, %v2026, %v2208
      %v2447 = vsel %vm913, %v2027, %v2210
      %v2448 = vsel %vm913, %v2028, %v2212
      %v2449 = vsel %vm913, %v2030, %v2214
      %v2450 = vsel %vm913, %v2031, %v2216
      %v2451 = vsel %vm913, %v2032, %v2218
      %v2452 = vsel %vm913, %v2033, %v2220
      %v2453 = vsel %vm946, %v2421, %v2326
      %v2454 = vsel %vm946, %v2422, %v2328
      %v2455 = vsel %vm946, %v2423, %v2330
      %v2456 = vsel %vm946, %v2424, %v2332
      %v2457 = vsel %vm946, %v2425, %v2334
      %v2458 = vsel %vm946, %v2426, %v2336
      %v2459 = vsel %vm946, %v2427, %v2338
      %v2460 = vsel %vm946, %v2428, %v2340
      %v2461 = vsel %vm946, %v2429, %v2342
      %v2462 = vsel %vm946, %v2430, %v2344
      %v2463 = vsel %vm946, %v2431, %v2346
      %v2464 = vsel %vm946, %v2432, %v2348
      %v2465 = vsel %vm946, %v2433, %v2350
      %v2466 = vsel %vm946, %v2434, %v2352
      %v2467 = vsel %vm946, %v2435, %v2354
      %v2468 = vsel %vm946, %v2436, %v2356
      %v2469 = vsel %vm946, %v2437, %v2358
      %v2470 = vsel %vm946, %v2438, %v2360
      %v2471 = vsel %vm946, %v2439, %v2362
      %v2472 = vsel %vm946, %v2440, %v2364
      %v2473 = vsel %vm946, %v2441, %v2366
      %v2474 = vsel %vm946, %v2442, %v2368
      %v2475 = vsel %vm946, %v2443, %v2370
      %v2476 = vsel %vm946, %v2444, %v2372
      %v2477 = vsel %vm946, %v2445, %v2374
      %v2478 = vsel %vm946, %v2446, %v2376
      %v2479 = vsel %vm946, %v2447, %v2378
      %v2480 = vsel %vm946, %v2448, %v2380
      %v2481 = vsel %vm946, %v2449, %v2382
      %v2482 = vsel %vm946, %v2450, %v2384
      %v2483 = vsel %vm946, %v2451, %v2386
      %v2484 = vsel %vm946, %v2452, %v2388
      %v2485 = vld [vmem:[%s5] sm:$0x3f]
      %v2487 = vsel %vm980, %v2453, 0
      %v2490 = vsel %vm980, %v2454, 0
      %v2493 = vsel %vm980, %v2455, 0
      %v2496 = vsel %vm980, %v2456, 0
      %v2499 = vsel %vm980, %v2457, 0
      %v2502 = vsel %vm980, %v2458, 0
      %v2505 = vsel %vm980, %v2459, 0
      %v2508 = vsel %vm980, %v2460, 0
      %v2511 = vsel %vm980, %v2461, 0
      %v2514 = vsel %vm980, %v2462, 0
      %v2517 = vsel %vm980, %v2463, 0
      %v2520 = vsel %vm980, %v2464, 0
      %v2523 = vsel %vm980, %v2465, 0
      %v2526 = vsel %vm980, %v2466, 0
      %v2529 = vsel %vm980, %v2467, 0
      %v2532 = vsel %vm980, %v2468, 0
      %v2535 = vsel %vm980, %v2469, 0
      %v2538 = vsel %vm980, %v2470, 0
      %v2541 = vsel %vm980, %v2471, 0
      %v2544 = vsel %vm980, %v2472, 0
      %v2547 = vsel %vm980, %v2473, 0
      %v2550 = vsel %vm980, %v2474, 0
      %v2553 = vsel %vm980, %v2475, 0
      %v2556 = vsel %vm980, %v2476, 0
      %v2559 = vsel %vm980, %v2477, 0
      %v2562 = vsel %vm980, %v2478, 0
      %v2565 = vsel %vm980, %v2479, 0
      %v2568 = vsel %vm980, %v2480, 0
      %v2571 = vsel %vm980, %v2481, 0
      %v2574 = vsel %vm980, %v2482, 0
      %v2577 = vsel %vm980, %v2483, 0
      %v2580 = vsel %vm980, %v2484, 0
      %v2583 = vsel %vm744, %v2485, 0
      %2585 = vmatprep.subr.mxu0 0.0
      %2586 = vmatpush1.msra.mxu0 %v2583
      %2587 = vmatprep.subr.mxu0 0.0
      %2588 = vmatpush1.msra.mxu0 0.0
      %2589 = vmatprep.subr.mxu0 0.0
      %2590 = vmatpush1.msra.mxu0 0.0
      %2591 = vmatprep.subr.mxu0 0.0
      %2592 = vmatpush1.msra.mxu0 0.0
      %2593 = vmatprep.subr.mxu0 0.0
      %2594 = vmatpush1.msra.mxu0 0.0
      %2595 = vmatprep.subr.mxu0 0.0
      %2596 = vmatpush1.msra.mxu0 0.0
      %2597 = vmatprep.subr.mxu0 0.0
      %2598 = vmatpush1.msra.mxu0 0.0
      %2599 = vmatprep.subr.mxu0 0.0
      %2600 = vmatpush1.msra.mxu0 0.0
      %2601 = vmatprep.subr.mxu0 0.0
      %2602 = vmatpush1.msra.mxu0 0.0
      %2603 = vmatprep.subr.mxu0 0.0
      %2604 = vmatpush1.msra.mxu0 0.0
      %2605 = vmatprep.subr.mxu0 0.0
      %2606 = vmatpush1.msra.mxu0 0.0
      %2607 = vmatprep.subr.mxu0 0.0
      %2608 = vmatpush1.msra.mxu0 0.0
      %2609 = vmatprep.subr.mxu0 0.0
      %2610 = vmatpush1.msra.mxu0 0.0
      %2611 = vmatprep.subr.mxu0 0.0
      %2612 = vmatpush1.msra.mxu0 0.0
      %2613 = vmatprep.subr.mxu0 0.0
      %2614 = vmatpush1.msra.mxu0 0.0
      %2615 = vmatprep.subr.mxu0 0.0
      %2616 = vmatpush1.msra.mxu0 0.0
      %2617 = vmatprep.subr.mxu0 0.0
      %2618 = vmatpush1.msra.mxu0 0.0
      %2619 = vmatprep.subr.mxu0 0.0
      %2620 = vmatpush1.msra.mxu0 0.0
      %2621 = vmatprep.subr.mxu0 0.0
      %2622 = vmatpush1.msra.mxu0 0.0
      %2623 = vmatprep.subr.mxu0 0.0
      %2624 = vmatpush1.msra.mxu0 0.0
      %2625 = vmatprep.subr.mxu0 0.0
      %2626 = vmatpush1.msra.mxu0 0.0
      %2627 = vmatprep.subr.mxu0 0.0
      %2628 = vmatpush1.msra.mxu0 0.0
      %2629 = vmatprep.subr.mxu0 0.0
      %2630 = vmatpush1.msra.mxu0 0.0
      %2631 = vmatprep.subr.mxu0 0.0
      %2632 = vmatpush1.msra.mxu0 0.0
      %2633 = vmatprep.subr.mxu0 0.0
      %2634 = vmatpush1.msra.mxu0 0.0
      %2635 = vmatprep.subr.mxu0 0.0
      %2636 = vmatpush1.msra.mxu0 0.0
      %2637 = vmatprep.subr.mxu0 0.0
      %2638 = vmatpush1.msra.mxu0 0.0
      %2639 = vmatprep.subr.mxu0 0.0
      %2640 = vmatpush1.msra.mxu0 0.0
      %2641 = vmatprep.subr.mxu0 0.0
      %2642 = vmatpush1.msra.mxu0 0.0
      %2643 = vmatprep.subr.mxu0 0.0
      %2644 = vmatpush1.msra.mxu0 0.0
      %2645 = vmatprep.subr.mxu0 0.0
      %2646 = vmatpush1.msra.mxu0 0.0
      %2647 = vmatprep.subr.mxu0 0.0
      %2648 = vmatpush1.msra.mxu0 0.0
      %2649 = vmatprep.mubr.f32.mxu0 0.0
      %2650 = vmatmul.mubr.f32.gmra.mrb[0].mxu0 %v2487
      %v2651 = vpop.f32.mrb[0].mxu0
      %v2652 = vadd.f32 0.0, %v2651
      %v2653 = vpop.f32.mrb[0].mxu0
      %2654 = vmatprep.mubr.f32.mxu0 0.0
      %2655 = vmatmul.mubr.f32.gmra.mrb[0].mxu0 %v2490
      %v2656 = vpop.f32.mrb[0].mxu0
      %v2657 = vadd.f32 0.0, %v2656
      %v2658 = vpop.f32.mrb[0].mxu0
      %2659 = vmatprep.mubr.f32.mxu0 0.0
      %2660 = vmatmul.mubr.f32.gmra.mrb[0].mxu0 %v2493
      %v2661 = vpop.f32.mrb[0].mxu0
      %v2662 = vadd.f32 0.0, %v2661
      %v2663 = vpop.f32.mrb[0].mxu0
      %2664 = vmatprep.mubr.f32.mxu0 0.0
      %2665 = vmatmul.mubr.f32.gmra.mrb[0].mxu0 %v2496
      %v2666 = vpop.f32.mrb[0].mxu0
      %v2667 = vadd.f32 0.0, %v2666
      %v2668 = vpop.f32.mrb[0].mxu0
      %2669 = vmatprep.mubr.f32.mxu0 0.0
      %2670 = vmatmul.mubr.f32.gmra.mrb[0].mxu0 %v2499
      %v2671 = vpop.f32.mrb[0].mxu0
      %v2672 = vadd.f32 0.0, %v2671
      %v2673 = vpop.f32.mrb[0].mxu0
      %2674 = vmatprep.mubr.f32.mxu0 0.0
      %2675 = vmatmul.mubr.f32.gmra.mrb[0].mxu0 %v2502
      %v2676 = vpop.f32.mrb[0].mxu0
      %v2677 = vadd.f32 0.0, %v2676
      %v2678 = vpop.f32.mrb[0].mxu0
      %2679 = vmatprep.mubr.f32.mxu0 0.0
      %2680 = vmatmul.mubr.f32.gmra.mrb[0].mxu0 %v2505
      %v2681 = vpop.f32.mrb[0].mxu0
      %v2682 = vadd.f32 0.0, %v2681
      %v2683 = vpop.f32.mrb[0].mxu0
      %2684 = vmatprep.mubr.f32.mxu0 0.0
      %2685 = vmatmul.mubr.f32.gmra.mrb[0].mxu0 %v2508
      %v2686 = vpop.f32.mrb[0].mxu0
      %v2687 = vadd.f32 0.0, %v2686
      %v2688 = vpop.f32.mrb[0].mxu0
      %2689 = vmatprep.mubr.f32.mxu0 0.0
      %2690 = vmatmul.mubr.f32.gmra.mrb[0].mxu0 %v2511
      %v2691 = vpop.f32.mrb[0].mxu0
      %v2692 = vadd.f32 0.0, %v2691
      %v2693 = vpop.f32.mrb[0].mxu0
      %2694 = vmatprep.mubr.f32.mxu0 0.0
      %2695 = vmatmul.mubr.f32.gmra.mrb[0].mxu0 %v2514
      %v2696 = vpop.f32.mrb[0].mxu0
      %v2697 = vadd.f32 0.0, %v2696
      %v2698 = vpop.f32.mrb[0].mxu0
      %2699 = vmatprep.mubr.f32.mxu0 0.0
      %2700 = vmatmul.mubr.f32.gmra.mrb[0].mxu0 %v2517
      %v2701 = vpop.f32.mrb[0].mxu0
      %v2702 = vadd.f32 0.0, %v2701
      %v2703 = vpop.f32.mrb[0].mxu0
      %2704 = vmatprep.mubr.f32.mxu0 0.0
      %2705 = vmatmul.mubr.f32.gmra.mrb[0].mxu0 %v2520
      %v2706 = vpop.f32.mrb[0].mxu0
      %v2707 = vadd.f32 0.0, %v2706
      %v2708 = vpop.f32.mrb[0].mxu0
      %2709 = vmatprep.mubr.f32.mxu0 0.0
      %2710 = vmatmul.mubr.f32.gmra.mrb[0].mxu0 %v2523
      %v2711 = vpop.f32.mrb[0].mxu0
      %v2712 = vadd.f32 0.0, %v2711
      %v2713 = vpop.f32.mrb[0].mxu0
      %2714 = vmatprep.mubr.f32.mxu0 0.0
      %2715 = vmatmul.mubr.f32.gmra.mrb[0].mxu0 %v2526
      %v2716 = vpop.f32.mrb[0].mxu0
      %v2717 = vadd.f32 0.0, %v2716
      %v2718 = vpop.f32.mrb[0].mxu0
      %2719 = vmatprep.mubr.f32.mxu0 0.0
      %2720 = vmatmul.mubr.f32.gmra.mrb[0].mxu0 %v2529
      %v2721 = vpop.f32.mrb[0].mxu0
      %v2722 = vadd.f32 0.0, %v2721
      %v2723 = vpop.f32.mrb[0].mxu0
      %2724 = vmatprep.mubr.f32.mxu0 0.0
      %2725 = vmatmul.mubr.f32.gmra.mrb[0].mxu0 %v2532
      %v2726 = vpop.f32.mrb[0].mxu0
      %v2727 = vadd.f32 0.0, %v2726
      %v2728 = vpop.f32.mrb[0].mxu0
      %2729 = vmatprep.mubr.f32.mxu0 0.0
      %2730 = vmatmul.mubr.f32.gmra.mrb[0].mxu0 %v2535
      %v2731 = vpop.f32.mrb[0].mxu0
      %v2732 = vadd.f32 0.0, %v2731
      %v2733 = vpop.f32.mrb[0].mxu0
      %2734 = vmatprep.mubr.f32.mxu0 0.0
      %2735 = vmatmul.mubr.f32.gmra.mrb[0].mxu0 %v2538
      %v2736 = vpop.f32.mrb[0].mxu0
      %v2737 = vadd.f32 0.0, %v2736
      %v2738 = vpop.f32.mrb[0].mxu0
      %2739 = vmatprep.mubr.f32.mxu0 0.0
      %2740 = vmatmul.mubr.f32.gmra.mrb[0].mxu0 %v2541
      %v2741 = vpop.f32.mrb[0].mxu0
      %v2742 = vadd.f32 0.0, %v2741
      %v2743 = vpop.f32.mrb[0].mxu0
      %2744 = vmatprep.mubr.f32.mxu0 0.0
      %2745 = vmatmul.mubr.f32.gmra.mrb[0].mxu0 %v2544
      %v2746 = vpop.f32.mrb[0].mxu0
      %v2747 = vadd.f32 0.0, %v2746
      %v2748 = vpop.f32.mrb[0].mxu0
      %2749 = vmatprep.mubr.f32.mxu0 0.0
      %2750 = vmatmul.mubr.f32.gmra.mrb[0].mxu0 %v2547
      %v2751 = vpop.f32.mrb[0].mxu0
      %v2752 = vadd.f32 0.0, %v2751
      %v2753 = vpop.f32.mrb[0].mxu0
      %2754 = vmatprep.mubr.f32.mxu0 0.0
      %2755 = vmatmul.mubr.f32.gmra.mrb[0].mxu0 %v2550
      %v2756 = vpop.f32.mrb[0].mxu0
      %v2757 = vadd.f32 0.0, %v2756
      %v2758 = vpop.f32.mrb[0].mxu0
      %2759 = vmatprep.mubr.f32.mxu0 0.0
      %2760 = vmatmul.mubr.f32.gmra.mrb[0].mxu0 %v2553
      %v2761 = vpop.f32.mrb[0].mxu0
      %v2762 = vadd.f32 0.0, %v2761
      %v2763 = vpop.f32.mrb[0].mxu0
      %2764 = vmatprep.mubr.f32.mxu0 0.0
      %2765 = vmatmul.mubr.f32.gmra.mrb[0].mxu0 %v2556
      %v2766 = vpop.f32.mrb[0].mxu0
      %v2767 = vadd.f32 0.0, %v2766
      %v2768 = vpop.f32.mrb[0].mxu0
      %2769 = vmatprep.mubr.f32.mxu0 0.0
      %2770 = vmatmul.mubr.f32.gmra.mrb[0].mxu0 %v2559
      %v2771 = vpop.f32.mrb[0].mxu0
      %v2772 = vadd.f32 0.0, %v2771
      %v2773 = vpop.f32.mrb[0].mxu0
      %2774 = vmatprep.mubr.f32.mxu0 0.0
      %2775 = vmatmul.mubr.f32.gmra.mrb[0].mxu0 %v2562
      %v2776 = vpop.f32.mrb[0].mxu0
      %v2777 = vadd.f32 0.0, %v2776
      %v2778 = vpop.f32.mrb[0].mxu0
      %2779 = vmatprep.mubr.f32.mxu0 0.0
      %2780 = vmatmul.mubr.f32.gmra.mrb[0].mxu0 %v2565
      %v2781 = vpop.f32.mrb[0].mxu0
      %v2782 = vadd.f32 0.0, %v2781
      %v2783 = vpop.f32.mrb[0].mxu0
      %2784 = vmatprep.mubr.f32.mxu0 0.0
      %2785 = vmatmul.mubr.f32.gmra.mrb[0].mxu0 %v2568
      %v2786 = vpop.f32.mrb[0].mxu0
      %v2787 = vadd.f32 0.0, %v2786
      %v2788 = vpop.f32.mrb[0].mxu0
      %2789 = vmatprep.mubr.f32.mxu0 0.0
      %2790 = vmatmul.mubr.f32.gmra.mrb[0].mxu0 %v2571
      %v2791 = vpop.f32.mrb[0].mxu0
      %v2792 = vadd.f32 0.0, %v2791
      %v2793 = vpop.f32.mrb[0].mxu0
      %2794 = vmatprep.mubr.f32.mxu0 0.0
      %2795 = vmatmul.mubr.f32.gmra.mrb[0].mxu0 %v2574
      %v2796 = vpop.f32.mrb[0].mxu0
      %v2797 = vadd.f32 0.0, %v2796
      %v2798 = vpop.f32.mrb[0].mxu0
      %2799 = vmatprep.mubr.f32.mxu0 0.0
      %2800 = vmatmul.mubr.f32.gmra.mrb[0].mxu0 %v2577
      %v2801 = vpop.f32.mrb[0].mxu0
      %v2802 = vadd.f32 0.0, %v2801
      %v2803 = vpop.f32.mrb[0].mxu0
      %2804 = vmatprep.mubr.f32.mxu0 0.0
      %2805 = vmatmul.mubr.f32.gmra.mrb[0].mxu0 %v2580
      %v2806 = vpop.f32.mrb[0].mxu0
      %v2807 = vadd.f32 0.0, %v2806
      %v2808 = vpop.f32.mrb[0].mxu0
      %2809 = vdwg.mxu0
      %v2810 = vadd.f32 %v1963, %v2652
      %v2811 = vadd.f32 %v1964, %v2657
      %v2812 = vadd.f32 %v1965, %v2662
      %v2813 = vadd.f32 %v1966, %v2667
      %v2814 = vadd.f32 %v1967, %v2672
      %v2815 = vadd.f32 %v1968, %v2677
      %v2816 = vadd.f32 %v1969, %v2682
      %v2817 = vadd.f32 %v1970, %v2687
      %v2818 = vadd.f32 %v1971, %v2692
      %v2819 = vadd.f32 %v1972, %v2697
      %v2820 = vadd.f32 %v1973, %v2702
      %v2821 = vadd.f32 %v1974, %v2707
      %v2822 = vadd.f32 %v1975, %v2712
      %v2823 = vadd.f32 %v1976, %v2717
      %v2824 = vadd.f32 %v1977, %v2722
      %v2825 = vadd.f32 %v1978, %v2727
      %v2826 = vadd.f32 %v1979, %v2732
      %v2827 = vadd.f32 %v1980, %v2737
      %v2828 = vadd.f32 %v1981, %v2742
      %v2829 = vadd.f32 %v1982, %v2747
      %v2830 = vadd.f32 %v1983, %v2752
      %v2831 = vadd.f32 %v1984, %v2757
      %v2832 = vadd.f32 %v1985, %v2762
      %v2833 = vadd.f32 %v1986, %v2767
      %v2834 = vadd.f32 %v1987, %v2772
      %v2835 = vadd.f32 %v1988, %v2777
      %v2836 = vadd.f32 %v1989, %v2782
      %v2837 = vadd.f32 %v1990, %v2787
      %v2838 = vadd.f32 %v1991, %v2792
      %v2839 = vadd.f32 %v1992, %v2797
      %v2840 = vadd.f32 %v1993, %v2802
      %v2841 = vadd.f32 %v1994, %v2807
      %v2847 = vrot.slane %v2035, 1
      %v2848 = vrot.slane %v2036, 1
      %v2849 = vsel %vm575, %v2847, %v2848
      %v2850 = vrot.slane %v2037, 1
      %v2851 = vsel %vm575, %v2848, %v2850
      %v2852 = vrot.slane %v2038, 1
      %v2853 = vsel %vm575, %v2850, %v2852
      %v2854 = vrot.slane %v2039, 1
      %v2855 = vsel %vm575, %v2852, %v2854
      %2856 = vrot.lane.b32.xlu0 %v2849, 2
      %v2857 = vpop.permute.xlu0 %2856
      %2858 = vrot.lane.b32.xlu0 %v2851, 2
      %v2859 = vpop.permute.xlu0 %2858
      %2860 = vrot.lane.b32.xlu0 %v2853, 2
      %v2861 = vpop.permute.xlu0 %2860
      %2862 = vrot.lane.b32.xlu0 %v2855, 2
      %v2863 = vpop.permute.xlu0 %2862
      %v2868 = vrot.slane %v2035, 2
      %v2869 = vrot.slane %v2036, 2
      %v2870 = vsel %vm744, %v2868, %v2869
      %v2871 = vrot.slane %v2037, 2
      %v2872 = vsel %vm744, %v2869, %v2871
      %v2873 = vrot.slane %v2038, 2
      %v2874 = vsel %vm744, %v2871, %v2873
      %v2875 = vrot.slane %v2039, 2
      %v2876 = vsel %vm744, %v2873, %v2875
      %2877 = vrot.lane.b32.xlu0 %v2870, 4
      %v2878 = vpop.permute.xlu0 %2877
      %2879 = vrot.lane.b32.xlu0 %v2872, 4
      %v2880 = vpop.permute.xlu0 %2879
      %2881 = vrot.lane.b32.xlu0 %v2874, 4
      %v2882 = vpop.permute.xlu0 %2881
      %2883 = vrot.lane.b32.xlu0 %v2876, 4
      %v2884 = vpop.permute.xlu0 %2883
      %v2889 = vsel %vm913, %v2035, %v2857
      %v2890 = vsel %vm913, %v2036, %v2859
      %v2891 = vsel %vm913, %v2037, %v2861
      %v2892 = vsel %vm913, %v2038, %v2863
      %v2893 = vsel %vm946, %v2889, %v2878
      %v2894 = vsel %vm946, %v2890, %v2880
      %v2895 = vsel %vm946, %v2891, %v2882
      %v2896 = vsel %vm946, %v2892, %v2884
      %s2897 = scalar_lea.vmem %s5, 8
      %v2898 = vld [vmem:[%s2897] sm:$0x3f]
      %v2900 = vsel %vm980, %v2893, 0
      %v2903 = vsel %vm980, %v2894, 0
      %v2906 = vsel %vm980, %v2895, 0
      %v2909 = vsel %vm980, %v2896, 0
      %v2912 = vsel %vm744, %v2898, 0
      %2914 = vmatprep.subr.mxu0 0.0
      %2915 = vmatpush1.msra.mxu0 %v2912
      %2916 = vmatprep.subr.mxu0 0.0
      %2917 = vmatpush1.msra.mxu0 0.0
      %2918 = vmatprep.subr.mxu0 0.0
      %2919 = vmatpush1.msra.mxu0 0.0
      %2920 = vmatprep.subr.mxu0 0.0
      %2921 = vmatpush1.msra.mxu0 0.0
      %2922 = vmatprep.subr.mxu0 0.0
      %2923 = vmatpush1.msra.mxu0 0.0
      %2924 = vmatprep.subr.mxu0 0.0
      %2925 = vmatpush1.msra.mxu0 0.0
      %2926 = vmatprep.subr.mxu0 0.0
      %2927 = vmatpush1.msra.mxu0 0.0
      %2928 = vmatprep.subr.mxu0 0.0
      %2929 = vmatpush1.msra.mxu0 0.0
      %2930 = vmatprep.subr.mxu0 0.0
      %2931 = vmatpush1.msra.mxu0 0.0
      %2932 = vmatprep.subr.mxu0 0.0
      %2933 = vmatpush1.msra.mxu0 0.0
      %2934 = vmatprep.subr.mxu0 0.0
      %2935 = vmatpush1.msra.mxu0 0.0
      %2936 = vmatprep.subr.mxu0 0.0
      %2937 = vmatpush1.msra.mxu0 0.0
      %2938 = vmatprep.subr.mxu0 0.0
      %2939 = vmatpush1.msra.mxu0 0.0
      %2940 = vmatprep.subr.mxu0 0.0
      %2941 = vmatpush1.msra.mxu0 0.0
      %2942 = vmatprep.subr.mxu0 0.0
      %2943 = vmatpush1.msra.mxu0 0.0
      %2944 = vmatprep.subr.mxu0 0.0
      %2945 = vmatpush1.msra.mxu0 0.0
      %2946 = vmatprep.subr.mxu0 0.0
      %2947 = vmatpush1.msra.mxu0 0.0
      %2948 = vmatprep.subr.mxu0 0.0
      %2949 = vmatpush1.msra.mxu0 0.0
      %2950 = vmatprep.subr.mxu0 0.0
      %2951 = vmatpush1.msra.mxu0 0.0
      %2952 = vmatprep.subr.mxu0 0.0
      %2953 = vmatpush1.msra.mxu0 0.0
      %2954 = vmatprep.subr.mxu0 0.0
      %2955 = vmatpush1.msra.mxu0 0.0
      %2956 = vmatprep.subr.mxu0 0.0
      %2957 = vmatpush1.msra.mxu0 0.0
      %2958 = vmatprep.subr.mxu0 0.0
      %2959 = vmatpush1.msra.mxu0 0.0
      %2960 = vmatprep.subr.mxu0 0.0
      %2961 = vmatpush1.msra.mxu0 0.0
      %2962 = vmatprep.subr.mxu0 0.0
      %2963 = vmatpush1.msra.mxu0 0.0
      %2964 = vmatprep.subr.mxu0 0.0
      %2965 = vmatpush1.msra.mxu0 0.0
      %2966 = vmatprep.subr.mxu0 0.0
      %2967 = vmatpush1.msra.mxu0 0.0
      %2968 = vmatprep.subr.mxu0 0.0
      %2969 = vmatpush1.msra.mxu0 0.0
      %2970 = vmatprep.subr.mxu0 0.0
      %2971 = vmatpush1.msra.mxu0 0.0
      %2972 = vmatprep.subr.mxu0 0.0
      %2973 = vmatpush1.msra.mxu0 0.0
      %2974 = vmatprep.subr.mxu0 0.0
      %2975 = vmatpush1.msra.mxu0 0.0
      %2976 = vmatprep.subr.mxu0 0.0
      %2977 = vmatpush1.msra.mxu0 0.0
      %2978 = vmatprep.mubr.f32.mxu0 0.0
      %2979 = vmatmul.mubr.f32.gmra.mrb[0].mxu0 %v2499
      %v2980 = vpop.f32.mrb[0].mxu0
      %v2981 = vadd.f32 0.0, %v2980
      %v2982 = vpop.f32.mrb[0].mxu0
      %2983 = vmatprep.mubr.f32.mxu0 0.0
      %2984 = vmatmul.mubr.f32.gmra.mrb[0].mxu0 %v2502
      %v2985 = vpop.f32.mrb[0].mxu0
      %v2986 = vadd.f32 0.0, %v2985
      %v2987 = vpop.f32.mrb[0].mxu0
      %2988 = vmatprep.mubr.f32.mxu0 0.0
      %2989 = vmatmul.mubr.f32.gmra.mrb[0].mxu0 %v2505
      %v2990 = vpop.f32.mrb[0].mxu0
      %v2991 = vadd.f32 0.0, %v2990
      %v2992 = vpop.f32.mrb[0].mxu0
      %2993 = vmatprep.mubr.f32.mxu0 0.0
      %2994 = vmatmul.mubr.f32.gmra.mrb[0].mxu0 %v2508
      %v2995 = vpop.f32.mrb[0].mxu0
      %v2996 = vadd.f32 0.0, %v2995
      %v2997 = vpop.f32.mrb[0].mxu0
      %2998 = vmatprep.mubr.f32.mxu0 0.0
      %2999 = vmatmul.mubr.f32.gmra.mrb[0].mxu0 %v2511
      %v3000 = vpop.f32.mrb[0].mxu0
      %v3001 = vadd.f32 0.0, %v3000
      %v3002 = vpop.f32.mrb[0].mxu0
      %3003 = vmatprep.mubr.f32.mxu0 0.0
      %3004 = vmatmul.mubr.f32.gmra.mrb[0].mxu0 %v2514
      %v3005 = vpop.f32.mrb[0].mxu0
      %v3006 = vadd.f32 0.0, %v3005
      %v3007 = vpop.f32.mrb[0].mxu0
      %3008 = vmatprep.mubr.f32.mxu0 0.0
      %3009 = vmatmul.mubr.f32.gmra.mrb[0].mxu0 %v2517
      %v3010 = vpop.f32.mrb[0].mxu0
      %v3011 = vadd.f32 0.0, %v3010
      %v3012 = vpop.f32.mrb[0].mxu0
      %3013 = vmatprep.mubr.f32.mxu0 0.0
      %3014 = vmatmul.mubr.f32.gmra.mrb[0].mxu0 %v2520
      %v3015 = vpop.f32.mrb[0].mxu0
      %v3016 = vadd.f32 0.0, %v3015
      %v3017 = vpop.f32.mrb[0].mxu0
      %3018 = vmatprep.mubr.f32.mxu0 0.0
      %3019 = vmatmul.mubr.f32.gmra.mrb[0].mxu0 %v2523
      %v3020 = vpop.f32.mrb[0].mxu0
      %v3021 = vadd.f32 0.0, %v3020
      %v3022 = vpop.f32.mrb[0].mxu0
      %3023 = vmatprep.mubr.f32.mxu0 0.0
      %3024 = vmatmul.mubr.f32.gmra.mrb[0].mxu0 %v2526
      %v3025 = vpop.f32.mrb[0].mxu0
      %v3026 = vadd.f32 0.0, %v3025
      %v3027 = vpop.f32.mrb[0].mxu0
      %3028 = vmatprep.mubr.f32.mxu0 0.0
      %3029 = vmatmul.mubr.f32.gmra.mrb[0].mxu0 %v2529
      %v3030 = vpop.f32.mrb[0].mxu0
      %v3031 = vadd.f32 0.0, %v3030
      %v3032 = vpop.f32.mrb[0].mxu0
      %3033 = vmatprep.mubr.f32.mxu0 0.0
      %3034 = vmatmul.mubr.f32.gmra.mrb[0].mxu0 %v2532
      %v3035 = vpop.f32.mrb[0].mxu0
      %v3036 = vadd.f32 0.0, %v3035
      %v3037 = vpop.f32.mrb[0].mxu0
      %3038 = vmatprep.mubr.f32.mxu0 0.0
      %3039 = vmatmul.mubr.f32.gmra.mrb[0].mxu0 %v2535
      %v3040 = vpop.f32.mrb[0].mxu0
      %v3041 = vadd.f32 0.0, %v3040
      %v3042 = vpop.f32.mrb[0].mxu0
      %3043 = vmatprep.mubr.f32.mxu0 0.0
      %3044 = vmatmul.mubr.f32.gmra.mrb[0].mxu0 %v2538
      %v3045 = vpop.f32.mrb[0].mxu0
      %v3046 = vadd.f32 0.0, %v3045
      %v3047 = vpop.f32.mrb[0].mxu0
      %3048 = vmatprep.mubr.f32.mxu0 0.0
      %3049 = vmatmul.mubr.f32.gmra.mrb[0].mxu0 %v2541
      %v3050 = vpop.f32.mrb[0].mxu0
      %v3051 = vadd.f32 0.0, %v3050
      %v3052 = vpop.f32.mrb[0].mxu0
      %3053 = vmatprep.mubr.f32.mxu0 0.0
      %3054 = vmatmul.mubr.f32.gmra.mrb[0].mxu0 %v2544
      %v3055 = vpop.f32.mrb[0].mxu0
      %v3056 = vadd.f32 0.0, %v3055
      %v3057 = vpop.f32.mrb[0].mxu0
      %3058 = vmatprep.mubr.f32.mxu0 0.0
      %3059 = vmatmul.mubr.f32.gmra.mrb[0].mxu0 %v2547
      %v3060 = vpop.f32.mrb[0].mxu0
      %v3061 = vadd.f32 0.0, %v3060
      %v3062 = vpop.f32.mrb[0].mxu0
      %3063 = vmatprep.mubr.f32.mxu0 0.0
      %3064 = vmatmul.mubr.f32.gmra.mrb[0].mxu0 %v2550
      %v3065 = vpop.f32.mrb[0].mxu0
      %v3066 = vadd.f32 0.0, %v3065
      %v3067 = vpop.f32.mrb[0].mxu0
      %3068 = vmatprep.mubr.f32.mxu0 0.0
      %3069 = vmatmul.mubr.f32.gmra.mrb[0].mxu0 %v2553
      %v3070 = vpop.f32.mrb[0].mxu0
      %v3071 = vadd.f32 0.0, %v3070
      %v3072 = vpop.f32.mrb[0].mxu0
      %3073 = vmatprep.mubr.f32.mxu0 0.0
      %3074 = vmatmul.mubr.f32.gmra.mrb[0].mxu0 %v2556
      %v3075 = vpop.f32.mrb[0].mxu0
      %v3076 = vadd.f32 0.0, %v3075
      %v3077 = vpop.f32.mrb[0].mxu0
      %3078 = vmatprep.mubr.f32.mxu0 0.0
      %3079 = vmatmul.mubr.f32.gmra.mrb[0].mxu0 %v2559
      %v3080 = vpop.f32.mrb[0].mxu0
      %v3081 = vadd.f32 0.0, %v3080
      %v3082 = vpop.f32.mrb[0].mxu0
      %3083 = vmatprep.mubr.f32.mxu0 0.0
      %3084 = vmatmul.mubr.f32.gmra.mrb[0].mxu0 %v2562
      %v3085 = vpop.f32.mrb[0].mxu0
      %v3086 = vadd.f32 0.0, %v3085
      %v3087 = vpop.f32.mrb[0].mxu0
      %3088 = vmatprep.mubr.f32.mxu0 0.0
      %3089 = vmatmul.mubr.f32.gmra.mrb[0].mxu0 %v2565
      %v3090 = vpop.f32.mrb[0].mxu0
      %v3091 = vadd.f32 0.0, %v3090
      %v3092 = vpop.f32.mrb[0].mxu0
      %3093 = vmatprep.mubr.f32.mxu0 0.0
      %3094 = vmatmul.mubr.f32.gmra.mrb[0].mxu0 %v2568
      %v3095 = vpop.f32.mrb[0].mxu0
      %v3096 = vadd.f32 0.0, %v3095
      %v3097 = vpop.f32.mrb[0].mxu0
      %3098 = vmatprep.mubr.f32.mxu0 0.0
      %3099 = vmatmul.mubr.f32.gmra.mrb[0].mxu0 %v2571
      %v3100 = vpop.f32.mrb[0].mxu0
      %v3101 = vadd.f32 0.0, %v3100
      %v3102 = vpop.f32.mrb[0].mxu0
      %3103 = vmatprep.mubr.f32.mxu0 0.0
      %3104 = vmatmul.mubr.f32.gmra.mrb[0].mxu0 %v2574
      %v3105 = vpop.f32.mrb[0].mxu0
      %v3106 = vadd.f32 0.0, %v3105
      %v3107 = vpop.f32.mrb[0].mxu0
      %3108 = vmatprep.mubr.f32.mxu0 0.0
      %3109 = vmatmul.mubr.f32.gmra.mrb[0].mxu0 %v2577
      %v3110 = vpop.f32.mrb[0].mxu0
      %v3111 = vadd.f32 0.0, %v3110
      %v3112 = vpop.f32.mrb[0].mxu0
      %3113 = vmatprep.mubr.f32.mxu0 0.0
      %3114 = vmatmul.mubr.f32.gmra.mrb[0].mxu0 %v2580
      %v3115 = vpop.f32.mrb[0].mxu0
      %v3116 = vadd.f32 0.0, %v3115
      %v3117 = vpop.f32.mrb[0].mxu0
      %3118 = vmatprep.mubr.f32.mxu0 0.0
      %3119 = vmatmul.mubr.f32.gmra.mrb[0].mxu0 %v2900
      %v3120 = vpop.f32.mrb[0].mxu0
      %v3121 = vadd.f32 0.0, %v3120
      %v3122 = vpop.f32.mrb[0].mxu0
      %3123 = vmatprep.mubr.f32.mxu0 0.0
      %3124 = vmatmul.mubr.f32.gmra.mrb[0].mxu0 %v2903
      %v3125 = vpop.f32.mrb[0].mxu0
      %v3126 = vadd.f32 0.0, %v3125
      %v3127 = vpop.f32.mrb[0].mxu0
      %3128 = vmatprep.mubr.f32.mxu0 0.0
      %3129 = vmatmul.mubr.f32.gmra.mrb[0].mxu0 %v2906
      %v3130 = vpop.f32.mrb[0].mxu0
      %v3131 = vadd.f32 0.0, %v3130
      %v3132 = vpop.f32.mrb[0].mxu0
      %3133 = vmatprep.mubr.f32.mxu0 0.0
      %3134 = vmatmul.mubr.f32.gmra.mrb[0].mxu0 %v2909
      %v3135 = vpop.f32.mrb[0].mxu0
      %v3136 = vadd.f32 0.0, %v3135
      %v3137 = vpop.f32.mrb[0].mxu0
      %3138 = vdwg.mxu0
      %v3139 = vadd.f32 %v2810, %v2981
      %v3140 = vadd.f32 %v2811, %v2986
      %v3141 = vadd.f32 %v2812, %v2991
      %v3142 = vadd.f32 %v2813, %v2996
      %v3143 = vadd.f32 %v2814, %v3001
      %v3144 = vadd.f32 %v2815, %v3006
      %v3145 = vadd.f32 %v2816, %v3011
      %v3146 = vadd.f32 %v2817, %v3016
      %v3147 = vadd.f32 %v2818, %v3021
      %v3148 = vadd.f32 %v2819, %v3026
      %v3149 = vadd.f32 %v2820, %v3031
      %v3150 = vadd.f32 %v2821, %v3036
      %v3151 = vadd.f32 %v2822, %v3041
      %v3152 = vadd.f32 %v2823, %v3046
      %v3153 = vadd.f32 %v2824, %v3051
      %v3154 = vadd.f32 %v2825, %v3056
      %v3155 = vadd.f32 %v2826, %v3061
      %v3156 = vadd.f32 %v2827, %v3066
      %v3157 = vadd.f32 %v2828, %v3071
      %v3158 = vadd.f32 %v2829, %v3076
      %v3159 = vadd.f32 %v2830, %v3081
      %v3160 = vadd.f32 %v2831, %v3086
      %v3161 = vadd.f32 %v2832, %v3091
      %v3162 = vadd.f32 %v2833, %v3096
      %v3163 = vadd.f32 %v2834, %v3101
      %v3164 = vadd.f32 %v2835, %v3106
      %v3165 = vadd.f32 %v2836, %v3111
      %v3166 = vadd.f32 %v2837, %v3116
      %v3167 = vadd.f32 %v2838, %v3121
      %v3168 = vadd.f32 %v2839, %v3126
      %v3169 = vadd.f32 %v2840, %v3131
      %v3170 = vadd.f32 %v2841, %v3136
      %v3176 = vrot.slane %v2040, 1
      %v3177 = vrot.slane %v2041, 1
      %v3178 = vsel %vm575, %v3176, %v3177
      %v3179 = vrot.slane %v2042, 1
      %v3180 = vsel %vm575, %v3177, %v3179
      %v3181 = vrot.slane %v2043, 1
      %v3182 = vsel %vm575, %v3179, %v3181
      %v3183 = vrot.slane %v2044, 1
      %v3184 = vsel %vm575, %v3181, %v3183
      %3185 = vrot.lane.b32.xlu0 %v3178, 2
      %v3186 = vpop.permute.xlu0 %3185
      %3187 = vrot.lane.b32.xlu0 %v3180, 2
      %v3188 = vpop.permute.xlu0 %3187
      %3189 = vrot.lane.b32.xlu0 %v3182, 2
      %v3190 = vpop.permute.xlu0 %3189
      %3191 = vrot.lane.b32.xlu0 %v3184, 2
      %v3192 = vpop.permute.xlu0 %3191
      %v3197 = vrot.slane %v2040, 2
      %v3198 = vrot.slane %v2041, 2
      %v3199 = vsel %vm744, %v3197, %v3198
      %v3200 = vrot.slane %v2042, 2
      %v3201 = vsel %vm744, %v3198, %v3200
      %v3202 = vrot.slane %v2043, 2
      %v3203 = vsel %vm744, %v3200, %v3202
      %v3204 = vrot.slane %v2044, 2
      %v3205 = vsel %vm744, %v3202, %v3204
      %3206 = vrot.lane.b32.xlu0 %v3199, 4
      %v3207 = vpop.permute.xlu0 %3206
      %3208 = vrot.lane.b32.xlu0 %v3201, 4
      %v3209 = vpop.permute.xlu0 %3208
      %3210 = vrot.lane.b32.xlu0 %v3203, 4
      %v3211 = vpop.permute.xlu0 %3210
      %3212 = vrot.lane.b32.xlu0 %v3205, 4
      %v3213 = vpop.permute.xlu0 %3212
      %v3218 = vsel %vm913, %v2040, %v3186
      %v3219 = vsel %vm913, %v2041, %v3188
      %v3220 = vsel %vm913, %v2042, %v3190
      %v3221 = vsel %vm913, %v2043, %v3192
      %v3222 = vsel %vm946, %v3218, %v3207
      %v3223 = vsel %vm946, %v3219, %v3209
      %v3224 = vsel %vm946, %v3220, %v3211
      %v3225 = vsel %vm946, %v3221, %v3213
      %s3226 = scalar_lea.vmem %s5, 16
      %v3227 = vld [vmem:[%s3226] sm:$0x3f]
      %v3229 = vsel %vm980, %v3222, 0
      %v3232 = vsel %vm980, %v3223, 0
      %v3235 = vsel %vm980, %v3224, 0
      %v3238 = vsel %vm980, %v3225, 0
      %v3241 = vsel %vm744, %v3227, 0
      %3243 = vmatprep.subr.mxu0 0.0
      %3244 = vmatpush1.msra.mxu0 %v3241
      %3245 = vmatprep.subr.mxu0 0.0
      %3246 = vmatpush1.msra.mxu0 0.0
      %3247 = vmatprep.subr.mxu0 0.0
      %3248 = vmatpush1.msra.mxu0 0.0
      %3249 = vmatprep.subr.mxu0 0.0
      %3250 = vmatpush1.msra.mxu0 0.0
      %3251 = vmatprep.subr.mxu0 0.0
      %3252 = vmatpush1.msra.mxu0 0.0
      %3253 = vmatprep.subr.mxu0 0.0
      %3254 = vmatpush1.msra.mxu0 0.0
      %3255 = vmatprep.subr.mxu0 0.0
      %3256 = vmatpush1.msra.mxu0 0.0
      %3257 = vmatprep.subr.mxu0 0.0
      %3258 = vmatpush1.msra.mxu0 0.0
      %3259 = vmatprep.subr.mxu0 0.0
      %3260 = vmatpush1.msra.mxu0 0.0
      %3261 = vmatprep.subr.mxu0 0.0
      %3262 = vmatpush1.msra.mxu0 0.0
      %3263 = vmatprep.subr.mxu0 0.0
      %3264 = vmatpush1.msra.mxu0 0.0
      %3265 = vmatprep.subr.mxu0 0.0
      %3266 = vmatpush1.msra.mxu0 0.0
      %3267 = vmatprep.subr.mxu0 0.0
      %3268 = vmatpush1.msra.mxu0 0.0
      %3269 = vmatprep.subr.mxu0 0.0
      %3270 = vmatpush1.msra.mxu0 0.0
      %3271 = vmatprep.subr.mxu0 0.0
      %3272 = vmatpush1.msra.mxu0 0.0
      %3273 = vmatprep.subr.mxu0 0.0
      %3274 = vmatpush1.msra.mxu0 0.0
      %3275 = vmatprep.subr.mxu0 0.0
      %3276 = vmatpush1.msra.mxu0 0.0
      %3277 = vmatprep.subr.mxu0 0.0
      %3278 = vmatpush1.msra.mxu0 0.0
      %3279 = vmatprep.subr.mxu0 0.0
      %3280 = vmatpush1.msra.mxu0 0.0
      %3281 = vmatprep.subr.mxu0 0.0
      %3282 = vmatpush1.msra.mxu0 0.0
      %3283 = vmatprep.subr.mxu0 0.0
      %3284 = vmatpush1.msra.mxu0 0.0
      %3285 = vmatprep.subr.mxu0 0.0
      %3286 = vmatpush1.msra.mxu0 0.0
      %3287 = vmatprep.subr.mxu0 0.0
      %3288 = vmatpush1.msra.mxu0 0.0
      %3289 = vmatprep.subr.mxu0 0.0
      %3290 = vmatpush1.msra.mxu0 0.0
      %3291 = vmatprep.subr.mxu0 0.0
      %3292 = vmatpush1.msra.mxu0 0.0
      %3293 = vmatprep.subr.mxu0 0.0
      %3294 = vmatpush1.msra.mxu0 0.0
      %3295 = vmatprep.subr.mxu0 0.0
      %3296 = vmatpush1.msra.mxu0 0.0
      %3297 = vmatprep.subr.mxu0 0.0
      %3298 = vmatpush1.msra.mxu0 0.0
      %3299 = vmatprep.subr.mxu0 0.0
      %3300 = vmatpush1.msra.mxu0 0.0
      %3301 = vmatprep.subr.mxu0 0.0
      %3302 = vmatpush1.msra.mxu0 0.0
      %3303 = vmatprep.subr.mxu0 0.0
      %3304 = vmatpush1.msra.mxu0 0.0
      %3305 = vmatprep.subr.mxu0 0.0
      %3306 = vmatpush1.msra.mxu0 0.0
      %3307 = vmatprep.mubr.f32.mxu0 0.0
      %3308 = vmatmul.mubr.f32.gmra.mrb[0].mxu0 %v2511
      %v3309 = vpop.f32.mrb[0].mxu0
      %v3310 = vadd.f32 0.0, %v3309
      %v3311 = vpop.f32.mrb[0].mxu0
      %3312 = vmatprep.mubr.f32.mxu0 0.0
      %3313 = vmatmul.mubr.f32.gmra.mrb[0].mxu0 %v2514
      %v3314 = vpop.f32.mrb[0].mxu0
      %v3315 = vadd.f32 0.0, %v3314
      %v3316 = vpop.f32.mrb[0].mxu0
      %3317 = vmatprep.mubr.f32.mxu0 0.0
      %3318 = vmatmul.mubr.f32.gmra.mrb[0].mxu0 %v2517
      %v3319 = vpop.f32.mrb[0].mxu0
      %v3320 = vadd.f32 0.0, %v3319
      %v3321 = vpop.f32.mrb[0].mxu0
      %3322 = vmatprep.mubr.f32.mxu0 0.0
      %3323 = vmatmul.mubr.f32.gmra.mrb[0].mxu0 %v2520
      %v3324 = vpop.f32.mrb[0].mxu0
      %v3325 = vadd.f32 0.0, %v3324
      %v3326 = vpop.f32.mrb[0].mxu0
      %3327 = vmatprep.mubr.f32.mxu0 0.0
      %3328 = vmatmul.mubr.f32.gmra.mrb[0].mxu0 %v2523
      %v3329 = vpop.f32.mrb[0].mxu0
      %v3330 = vadd.f32 0.0, %v3329
      %v3331 = vpop.f32.mrb[0].mxu0
      %3332 = vmatprep.mubr.f32.mxu0 0.0
      %3333 = vmatmul.mubr.f32.gmra.mrb[0].mxu0 %v2526
      %v3334 = vpop.f32.mrb[0].mxu0
      %v3335 = vadd.f32 0.0, %v3334
      %v3336 = vpop.f32.mrb[0].mxu0
      %3337 = vmatprep.mubr.f32.mxu0 0.0
      %3338 = vmatmul.mubr.f32.gmra.mrb[0].mxu0 %v2529
      %v3339 = vpop.f32.mrb[0].mxu0
      %v3340 = vadd.f32 0.0, %v3339
      %v3341 = vpop.f32.mrb[0].mxu0
      %3342 = vmatprep.mubr.f32.mxu0 0.0
      %3343 = vmatmul.mubr.f32.gmra.mrb[0].mxu0 %v2532
      %v3344 = vpop.f32.mrb[0].mxu0
      %v3345 = vadd.f32 0.0, %v3344
      %v3346 = vpop.f32.mrb[0].mxu0
      %3347 = vmatprep.mubr.f32.mxu0 0.0
      %3348 = vmatmul.mubr.f32.gmra.mrb[0].mxu0 %v2535
      %v3349 = vpop.f32.mrb[0].mxu0
      %v3350 = vadd.f32 0.0, %v3349
      %v3351 = vpop.f32.mrb[0].mxu0
      %3352 = vmatprep.mubr.f32.mxu0 0.0
      %3353 = vmatmul.mubr.f32.gmra.mrb[0].mxu0 %v2538
      %v3354 = vpop.f32.mrb[0].mxu0
      %v3355 = vadd.f32 0.0, %v3354
      %v3356 = vpop.f32.mrb[0].mxu0
      %3357 = vmatprep.mubr.f32.mxu0 0.0
      %3358 = vmatmul.mubr.f32.gmra.mrb[0].mxu0 %v2541
      %v3359 = vpop.f32.mrb[0].mxu0
      %v3360 = vadd.f32 0.0, %v3359
      %v3361 = vpop.f32.mrb[0].mxu0
      %3362 = vmatprep.mubr.f32.mxu0 0.0
      %3363 = vmatmul.mubr.f32.gmra.mrb[0].mxu0 %v2544
      %v3364 = vpop.f32.mrb[0].mxu0
      %v3365 = vadd.f32 0.0, %v3364
      %v3366 = vpop.f32.mrb[0].mxu0
      %3367 = vmatprep.mubr.f32.mxu0 0.0
      %3368 = vmatmul.mubr.f32.gmra.mrb[0].mxu0 %v2547
      %v3369 = vpop.f32.mrb[0].mxu0
      %v3370 = vadd.f32 0.0, %v3369
      %v3371 = vpop.f32.mrb[0].mxu0
      %3372 = vmatprep.mubr.f32.mxu0 0.0
      %3373 = vmatmul.mubr.f32.gmra.mrb[0].mxu0 %v2550
      %v3374 = vpop.f32.mrb[0].mxu0
      %v3375 = vadd.f32 0.0, %v3374
      %v3376 = vpop.f32.mrb[0].mxu0
      %3377 = vmatprep.mubr.f32.mxu0 0.0
      %3378 = vmatmul.mubr.f32.gmra.mrb[0].mxu0 %v2553
      %v3379 = vpop.f32.mrb[0].mxu0
      %v3380 = vadd.f32 0.0, %v3379
      %v3381 = vpop.f32.mrb[0].mxu0
      %3382 = vmatprep.mubr.f32.mxu0 0.0
      %3383 = vmatmul.mubr.f32.gmra.mrb[0].mxu0 %v2556
      %v3384 = vpop.f32.mrb[0].mxu0
      %v3385 = vadd.f32 0.0, %v3384
      %v3386 = vpop.f32.mrb[0].mxu0
      %3387 = vmatprep.mubr.f32.mxu0 0.0
      %3388 = vmatmul.mubr.f32.gmra.mrb[0].mxu0 %v2559
      %v3389 = vpop.f32.mrb[0].mxu0
      %v3390 = vadd.f32 0.0, %v3389
      %v3391 = vpop.f32.mrb[0].mxu0
      %3392 = vmatprep.mubr.f32.mxu0 0.0
      %3393 = vmatmul.mubr.f32.gmra.mrb[0].mxu0 %v2562
      %v3394 = vpop.f32.mrb[0].mxu0
      %v3395 = vadd.f32 0.0, %v3394
      %v3396 = vpop.f32.mrb[0].mxu0
      %3397 = vmatprep.mubr.f32.mxu0 0.0
      %3398 = vmatmul.mubr.f32.gmra.mrb[0].mxu0 %v2565
      %v3399 = vpop.f32.mrb[0].mxu0
      %v3400 = vadd.f32 0.0, %v3399
      %v3401 = vpop.f32.mrb[0].mxu0
      %3402 = vmatprep.mubr.f32.mxu0 0.0
      %3403 = vmatmul.mubr.f32.gmra.mrb[0].mxu0 %v2568
      %v3404 = vpop.f32.mrb[0].mxu0
      %v3405 = vadd.f32 0.0, %v3404
      %v3406 = vpop.f32.mrb[0].mxu0
      %3407 = vmatprep.mubr.f32.mxu0 0.0
      %3408 = vmatmul.mubr.f32.gmra.mrb[0].mxu0 %v2571
      %v3409 = vpop.f32.mrb[0].mxu0
      %v3410 = vadd.f32 0.0, %v3409
      %v3411 = vpop.f32.mrb[0].mxu0
      %3412 = vmatprep.mubr.f32.mxu0 0.0
      %3413 = vmatmul.mubr.f32.gmra.mrb[0].mxu0 %v2574
      %v3414 = vpop.f32.mrb[0].mxu0
      %v3415 = vadd.f32 0.0, %v3414
      %v3416 = vpop.f32.mrb[0].mxu0
      %3417 = vmatprep.mubr.f32.mxu0 0.0
      %3418 = vmatmul.mubr.f32.gmra.mrb[0].mxu0 %v2577
      %v3419 = vpop.f32.mrb[0].mxu0
      %v3420 = vadd.f32 0.0, %v3419
      %v3421 = vpop.f32.mrb[0].mxu0
      %3422 = vmatprep.mubr.f32.mxu0 0.0
      %3423 = vmatmul.mubr.f32.gmra.mrb[0].mxu0 %v2580
      %v3424 = vpop.f32.mrb[0].mxu0
      %v3425 = vadd.f32 0.0, %v3424
      %v3426 = vpop.f32.mrb[0].mxu0
      %3427 = vmatprep.mubr.f32.mxu0 0.0
      %3428 = vmatmul.mubr.f32.gmra.mrb[0].mxu0 %v2900
      %v3429 = vpop.f32.mrb[0].mxu0
      %v3430 = vadd.f32 0.0, %v3429
      %v3431 = vpop.f32.mrb[0].mxu0
      %3432 = vmatprep.mubr.f32.mxu0 0.0
      %3433 = vmatmul.mubr.f32.gmra.mrb[0].mxu0 %v2903
      %v3434 = vpop.f32.mrb[0].mxu0
      %v3435 = vadd.f32 0.0, %v3434
      %v3436 = vpop.f32.mrb[0].mxu0
      %3437 = vmatprep.mubr.f32.mxu0 0.0
      %3438 = vmatmul.mubr.f32.gmra.mrb[0].mxu0 %v2906
      %v3439 = vpop.f32.mrb[0].mxu0
      %v3440 = vadd.f32 0.0, %v3439
      %v3441 = vpop.f32.mrb[0].mxu0
      %3442 = vmatprep.mubr.f32.mxu0 0.0
      %3443 = vmatmul.mubr.f32.gmra.mrb[0].mxu0 %v2909
      %v3444 = vpop.f32.mrb[0].mxu0
      %v3445 = vadd.f32 0.0, %v3444
      %v3446 = vpop.f32.mrb[0].mxu0
      %3447 = vmatprep.mubr.f32.mxu0 0.0
      %3448 = vmatmul.mubr.f32.gmra.mrb[0].mxu0 %v3229
      %v3449 = vpop.f32.mrb[0].mxu0
      %v3450 = vadd.f32 0.0, %v3449
      %v3451 = vpop.f32.mrb[0].mxu0
      %3452 = vmatprep.mubr.f32.mxu0 0.0
      %3453 = vmatmul.mubr.f32.gmra.mrb[0].mxu0 %v3232
      %v3454 = vpop.f32.mrb[0].mxu0
      %v3455 = vadd.f32 0.0, %v3454
      %v3456 = vpop.f32.mrb[0].mxu0
      %3457 = vmatprep.mubr.f32.mxu0 0.0
      %3458 = vmatmul.mubr.f32.gmra.mrb[0].mxu0 %v3235
      %v3459 = vpop.f32.mrb[0].mxu0
      %v3460 = vadd.f32 0.0, %v3459
      %v3461 = vpop.f32.mrb[0].mxu0
      %3462 = vmatprep.mubr.f32.mxu0 0.0
      %3463 = vmatmul.mubr.f32.gmra.mrb[0].mxu0 %v3238
      %v3464 = vpop.f32.mrb[0].mxu0
      %v3465 = vadd.f32 0.0, %v3464
      %v3466 = vpop.f32.mrb[0].mxu0
      %3467 = vdwg.mxu0
      %v3468 = vadd.f32 %v3139, %v3310
      %v3469 = vadd.f32 %v3140, %v3315
      %v3470 = vadd.f32 %v3141, %v3320
      %v3471 = vadd.f32 %v3142, %v3325
      %v3472 = vadd.f32 %v3143, %v3330
      %v3473 = vadd.f32 %v3144, %v3335
      %v3474 = vadd.f32 %v3145, %v3340
      %v3475 = vadd.f32 %v3146, %v3345
      %v3476 = vadd.f32 %v3147, %v3350
      %v3477 = vadd.f32 %v3148, %v3355
      %v3478 = vadd.f32 %v3149, %v3360
      %v3479 = vadd.f32 %v3150, %v3365
      %v3480 = vadd.f32 %v3151, %v3370
      %v3481 = vadd.f32 %v3152, %v3375
      %v3482 = vadd.f32 %v3153, %v3380
      %v3483 = vadd.f32 %v3154, %v3385
      %v3484 = vadd.f32 %v3155, %v3390
      %v3485 = vadd.f32 %v3156, %v3395
      %v3486 = vadd.f32 %v3157, %v3400
      %v3487 = vadd.f32 %v3158, %v3405
      %v3488 = vadd.f32 %v3159, %v3410
      %v3489 = vadd.f32 %v3160, %v3415
      %v3490 = vadd.f32 %v3161, %v3420
      %v3491 = vadd.f32 %v3162, %v3425
      %v3492 = vadd.f32 %v3163, %v3430
      %v3493 = vadd.f32 %v3164, %v3435
      %v3494 = vadd.f32 %v3165, %v3440
      %v3495 = vadd.f32 %v3166, %v3445
      %v3496 = vadd.f32 %v3167, %v3450
      %v3497 = vadd.f32 %v3168, %v3455
      %v3498 = vadd.f32 %v3169, %v3460
      %v3499 = vadd.f32 %v3170, %v3465
      %v3500 = vmax.f32 %v3468, 0.0
      %v3501 = vmax.f32 %v3469, 0.0
      %v3502 = vmax.f32 %v3470, 0.0
      %v3503 = vmax.f32 %v3471, 0.0
      %v3504 = vmax.f32 %v3472, 0.0
      %v3505 = vmax.f32 %v3473, 0.0
      %v3506 = vmax.f32 %v3474, 0.0
      %v3507 = vmax.f32 %v3475, 0.0
      %v3508 = vmax.f32 %v3476, 0.0
      %v3509 = vmax.f32 %v3477, 0.0
      %v3510 = vmax.f32 %v3478, 0.0
      %v3511 = vmax.f32 %v3479, 0.0
      %v3512 = vmax.f32 %v3480, 0.0
      %v3513 = vmax.f32 %v3481, 0.0
      %v3514 = vmax.f32 %v3482, 0.0
      %v3515 = vmax.f32 %v3483, 0.0
      %v3516 = vmax.f32 %v3484, 0.0
      %v3517 = vmax.f32 %v3485, 0.0
      %v3518 = vmax.f32 %v3486, 0.0
      %v3519 = vmax.f32 %v3487, 0.0
      %v3520 = vmax.f32 %v3488, 0.0
      %v3521 = vmax.f32 %v3489, 0.0
      %v3522 = vmax.f32 %v3490, 0.0
      %v3523 = vmax.f32 %v3491, 0.0
      %v3524 = vmax.f32 %v3492, 0.0
      %v3525 = vmax.f32 %v3493, 0.0
      %v3526 = vmax.f32 %v3494, 0.0
      %v3527 = vmax.f32 %v3495, 0.0
      %v3528 = vmax.f32 %v3496, 0.0
      %v3529 = vmax.f32 %v3497, 0.0
      %v3530 = vmax.f32 %v3498, 0.0
      %v3531 = vmax.f32 %v3499, 0.0
      %3532 = vst.msk [vmem:[%s476] sm:$0xff] %vm946, %v3500
      %3533 = vst.msk [vmem:[%s476 + $0x8] sm:$0xff] %vm946, %v3501
      %3534 = vst.msk [vmem:[%s476 + $0x10] sm:$0xff] %vm946, %v3502
      %3535 = vst.msk [vmem:[%s476 + $0x18] sm:$0xff] %vm946, %v3503
      %3536 = vst.msk [vmem:[%s476 + $0x20] sm:$0xff] %vm946, %v3504
      %3537 = vst.msk [vmem:[%s476 + $0x28] sm:$0xff] %vm946, %v3505
      %3538 = vst.msk [vmem:[%s476 + $0x30] sm:$0xff] %vm946, %v3506
      %3539 = vst.msk [vmem:[%s476 + $0x38] sm:$0xff] %vm946, %v3507
      %3540 = vst.msk [vmem:[%s476 + $0x40] sm:$0xff] %vm946, %v3508
      %3541 = vst.msk [vmem:[%s476 + $0x48] sm:$0xff] %vm946, %v3509
      %3542 = vst.msk [vmem:[%s476 + $0x50] sm:$0xff] %vm946, %v3510
      %3543 = vst.msk [vmem:[%s476 + $0x58] sm:$0xff] %vm946, %v3511
      %3544 = vst.msk [vmem:[%s476 + $0x60] sm:$0xff] %vm946, %v3512
      %3545 = vst.msk [vmem:[%s476 + $0x68] sm:$0xff] %vm946, %v3513
      %3546 = vst.msk [vmem:[%s476 + $0x70] sm:$0xff] %vm946, %v3514
      %3547 = vst.msk [vmem:[%s476 + $0x78] sm:$0xff] %vm946, %v3515
      %3548 = vst.msk [vmem:[%s476 + $0x80] sm:$0xff] %vm946, %v3516
      %3549 = vst.msk [vmem:[%s476 + $0x88] sm:$0xff] %vm946, %v3517
      %3550 = vst.msk [vmem:[%s476 + $0x90] sm:$0xff] %vm946, %v3518
      %3551 = vst.msk [vmem:[%s476 + $0x98] sm:$0xff] %vm946, %v3519
      %3552 = vst.msk [vmem:[%s476 + $0xa0] sm:$0xff] %vm946, %v3520
      %3553 = vst.msk [vmem:[%s476 + $0xa8] sm:$0xff] %vm946, %v3521
      %3554 = vst.msk [vmem:[%s476 + $0xb0] sm:$0xff] %vm946, %v3522
      %3555 = vst.msk [vmem:[%s476 + $0xb8] sm:$0xff] %vm946, %v3523
      %3556 = vst.msk [vmem:[%s476 + $0xc0] sm:$0xff] %vm946, %v3524
      %3557 = vst.msk [vmem:[%s476 + $0xc8] sm:$0xff] %vm946, %v3525
      %3558 = vst.msk [vmem:[%s476 + $0xd0] sm:$0xff] %vm946, %v3526
      %3559 = vst.msk [vmem:[%s476 + $0xd8] sm:$0xff] %vm946, %v3527
      %3560 = vst.msk [vmem:[%s476 + $0xe0] sm:$0xff] %vm946, %v3528
      %3561 = vst.msk [vmem:[%s476 + $0xe8] sm:$0xff] %vm946, %v3529
      %3562 = vst.msk [vmem:[%s476 + $0xf0] sm:$0xff] %vm946, %v3530
      %3563 = vst.msk [vmem:[%s476 + $0xf8] sm:$0xff] %vm946, %v3531
      %s3564 = smul.u32 32, %s23
      %p3565 = scmp.lt.s32.totalorder %s22, 1
      %s3566 = scalar_select %p3565, %s22, 1
      %p3567 = scmp.lt.s32.totalorder %s3564, 127
      %s3568 = scalar_select %p3567, %s3564, 127
      %s3569 = smul.addr %s3566, 128
      %s3570 = sadd.s32 %s3568, %s3569
      %s3571 = smul.addr %s3570, 8
      %s3572 = scalar_lea.vmem %s7, %s3571
      // Predicated region
      $region49: #{up_forward.4} parent=47 // pred_check
        %p3573 = pneg %p225
      $region50: #{up_forward.4} parent=47 // pred_check_branch
        %3575 = sbr.rel (%p3573) target = $region52
      $region51: #{up_forward.4} parent=47 // pred_region
        %s3576 = smul.u32 32, %s23
      $region52: #{up_forward.4} parent=47 // pred_fallthru
        _
    $region48: #{up_forward.4} parent=5 // pred_fallthru
      _
    %p3577 = scmp.le.s32.totalorder 2, %s13
    // Predicated region
    $region53: #{up_forward.4} parent=5 // pred_check
      %p3578 = pneg %p3577
    $region54: #{up_forward.4} parent=5 // pred_check_branch
      %3580 = sbr.rel (%p3578) target = $region56
    $region55: #{up_forward.4} parent=5 // pred_region
      %s3581 = ssub.s32 %s13, 2
      // Predicated region
      $region57: #{up_forward.4} parent=55 // pred_check
        %p3582 = pneg %p231
      $region58: #{up_forward.4} parent=55 // pred_check_branch
        %3584 = sbr.rel (%p3582) target = $region60
      $region59: #{up_forward.4} parent=55 // pred_region
        %s3585 = smul.u32 32, %s25
        %p3586 = scmp.lt.s32.totalorder %s24, 1
        %s3587 = scalar_select %p3586, %s24, 1
        %p3588 = scmp.lt.s32.totalorder %s3585, 127
        %s3589 = scalar_select %p3588, %s3585, 127
        %s3590 = smul.addr %s3587, 128
        %s3591 = sadd.s32 %s3589, %s3590
        %s3592 = smul.addr %s3591, 8
        %s3593 = scalar_lea.vmem %s7, %s3592
      $region60: #{up_forward.4} parent=55 // pred_fallthru
        _
    $region56: #{up_forward.4} parent=5 // pred_fallthru
      _
  $region6: #{up_forward.4} parent=0 // loop_footer
    %s17 = sadd.s32 1, %s13
  $region7: #{up_forward.4} parent=0 // loop_footer_branch
    %12 = sbr.rel target = $region3
  $region8: #{up_forward.4} parent=0 // loop_exit
    _

// kernel: up_forward.5
$region0: #{up_forward.5}
  #allocation0 [shape = 'u32[]', space=smem, size = 0x4, offset = 0x4, fixed_abs, tag = 'smem constant byte address 0x4 - core index']
  #allocation1 [shape = 'u32[144,128]{1,0:T(1,128)}', space=vmem, size = 0x12000, scoped, tag = 'internal scratch']
  %s0 = inlined_call_operand.vmem [shape: f32[2,34,34,4], index: 0, kind: input, shape index: {}]
  %s1 = inlined_call_operand.vmem [shape: f32[2,4,2,34,4], index: 1, kind: input, shape index: {}]
  %s2 = inlined_call_operand.vmem [shape: f32[3,12,4], index: 2, kind: input, shape index: {}]
  %s3 = inlined_call_operand.vmem [shape: f32[1,4], index: 3, kind: input, shape index: {}]
  %s4 = inlined_call_operand.vmem [shape: f32[2,1024,4], index: 4, kind: output, shape index: {}]
  %s5 = sld [smem:[#allocation0]]
  $region49: #{up_forward.5} parent=0
    _
  %s7 = ssub.s32 1, %s5
  %s8 = scalar_select 0, %s7, %s5
  loop: start=0, step=1, limit=10
  $region2: #{up_forward.5} parent=0 // loop_pre_header
    _
  $region3: #{up_forward.5} parent=0 // loop_header
    %s10 = sphi 0, %s14
    %p11 = scmp.ge.s32.totalorder %s10, 10
    %s17 = sphi 0, %s29
    %s18 = sphi 0, %s25
    %s19 = sphi 0, %s17
    %s20 = sphi 0, %s18
    %s21 = sphi 0, %s19
    %s22 = sphi 0, %s20
    %s34 = sphi 0, %s36
    %s37 = sphi 0, %s34
    %s38 = sphi 0, %s37
    %s54 = sphi 0, %s38
    %s62 = sphi 0, %s64
    %s65 = sphi 0, %s62
    %s66 = sphi 0, %s65
    %s82 = sphi 0, %s66
    %s86 = sphi 0, %s86
    %s88 = sphi 0, %s86
    %s89 = sphi 0, %s88
    %s103 = sphi 0, %s89
    %s107 = sphi 0, %s107
    %s109 = sphi 0, %s107
    %s110 = sphi 0, %s109
    %s124 = sphi 0, %s110
    %s132 = sphi 0, %s134
    %s135 = sphi 0, %s132
    %s136 = sphi 0, %s135
    %s152 = sphi 0, %s136
  $region4: #{up_forward.5} parent=0 // loop_header_branch
    %13 = sbr.rel (%p11) target = $region8
  $region5: #{up_forward.5} parent=0 // loop_body
    %s15 = ssub.s32 %s10, 1
    %s16 = ssub.s32 %s10, 2
    %s23 = sadd.s32 1, %s18
    %p24 = scmp.ge.s32.totalorder %s23, 4
    %s25 = scalar_select %p24, 0, %s23
    %s26 = sadd.s32 1, %s17
    %s27 = scalar_select %p24, %s26, %s17
    %p28 = scmp.ge.s32.totalorder %s27, 2
    %s29 = scalar_select %p28, 0, %s27
    %s30 = ssub.s32 %s17, %s29
    %s31 = ssub.s32 %s18, %s25
    %s32 = sor.u32 %s30, %s31
    %p33 = scmp.eq.s32.totalorder %s32, 0
    %s35 = sadd.s32 %s34, 1
    %s36 = scalar_select %p33, %s34, %s35
    %p39 = pneg %p33
    %p40 = scmp.eq.s32.totalorder %s10, 7
    %p41 = por %p39, %p40
    %p42 = scmp.ne.s32.totalorder %s34, %s37
    %p43 = scmp.eq.s32.totalorder %s10, 0
    %p44 = por %p42, %p43
    %p45 = scmp.ne.s32.totalorder %s34, %s37
    %p46 = scmp.eq.s32.totalorder %s15, 7
    %p47 = por %p45, %p46
    %p48 = scmp.ne.s32.totalorder %s37, %s38
    %p49 = scmp.eq.s32.totalorder %s15, 0
    %p50 = por %p48, %p49
    %p51 = scmp.ne.s32.totalorder %s37, %s38
    %p52 = scmp.eq.s32.totalorder %s16, 7
    %p53 = por %p51, %p52
    %p55 = scmp.ne.s32.totalorder %s38, %s54
    %p56 = scmp.eq.s32.totalorder %s16, 0
    %p57 = por %p55, %p56
    %s58 = ssub.s32 %s17, %s29
    %s59 = ssub.s32 %s18, %s25
    %s60 = sor.u32 %s58, %s59
    %p61 = scmp.eq.s32.totalorder %s60, 0
    %s63 = sadd.s32 %s62, 1
    %s64 = scalar_select %p61, %s62, %s63
    %p67 = pneg %p61
    %p68 = scmp.eq.s32.totalorder %s10, 7
    %p69 = por %p67, %p68
    %p70 = scmp.ne.s32.totalorder %s62, %s65
    %p71 = scmp.eq.s32.totalorder %s10, 0
    %p72 = por %p70, %p71
    %p73 = scmp.ne.s32.totalorder %s62, %s65
    %p74 = scmp.eq.s32.totalorder %s15, 7
    %p75 = por %p73, %p74
    %p76 = scmp.ne.s32.totalorder %s65, %s66
    %p77 = scmp.eq.s32.totalorder %s15, 0
    %p78 = por %p76, %p77
    %p79 = scmp.ne.s32.totalorder %s65, %s66
    %p80 = scmp.eq.s32.totalorder %s16, 7
    %p81 = por %p79, %p80
    %p83 = scmp.ne.s32.totalorder %s66, %s82
    %p84 = scmp.eq.s32.totalorder %s16, 0
    %p85 = por %p83, %p84
    %s87 = sadd.s32 %s86, 1
    %p90 = scmp.eq.s32.totalorder %s10, 7
    %p91 = scmp.ne.s32.totalorder %s86, %s88
    %p92 = scmp.eq.s32.totalorder %s10, 0
    %p93 = por %p91, %p92
    %p94 = scmp.ne.s32.totalorder %s86, %s88
    %p95 = scmp.eq.s32.totalorder %s15, 7
    %p96 = por %p94, %p95
    %p97 = scmp.ne.s32.totalorder %s88, %s89
    %p98 = scmp.eq.s32.totalorder %s15, 0
    %p99 = por %p97, %p98
    %p100 = scmp.ne.s32.totalorder %s88, %s89
    %p101 = scmp.eq.s32.totalorder %s16, 7
    %p102 = por %p100, %p101
    %p104 = scmp.ne.s32.totalorder %s89, %s103
    %p105 = scmp.eq.s32.totalorder %s16, 0
    %p106 = por %p104, %p105
    %s108 = sadd.s32 %s107, 1
    %p111 = scmp.eq.s32.totalorder %s10, 7
    %p112 = scmp.ne.s32.totalorder %s107, %s109
    %p113 = scmp.eq.s32.totalorder %s10, 0
    %p114 = por %p112, %p113
    %p115 = scmp.ne.s32.totalorder %s107, %s109
    %p116 = scmp.eq.s32.totalorder %s15, 7
    %p117 = por %p115, %p116
    %p118 = scmp.ne.s32.totalorder %s109, %s110
    %p119 = scmp.eq.s32.totalorder %s15, 0
    %p120 = por %p118, %p119
    %p121 = scmp.ne.s32.totalorder %s109, %s110
    %p122 = scmp.eq.s32.totalorder %s16, 7
    %p123 = por %p121, %p122
    %p125 = scmp.ne.s32.totalorder %s110, %s124
    %p126 = scmp.eq.s32.totalorder %s16, 0
    %p127 = por %p125, %p126
    %s128 = ssub.s32 %s17, %s29
    %s129 = ssub.s32 %s18, %s25
    %s130 = sor.u32 %s128, %s129
    %p131 = scmp.eq.s32.totalorder %s130, 0
    %s133 = sadd.s32 %s132, 1
    %s134 = scalar_select %p131, %s132, %s133
    %p137 = pneg %p131
    %p138 = scmp.eq.s32.totalorder %s10, 7
    %p139 = por %p137, %p138
    %p140 = scmp.ne.s32.totalorder %s132, %s135
    %p141 = scmp.eq.s32.totalorder %s10, 0
    %p142 = por %p140, %p141
    %p143 = scmp.ne.s32.totalorder %s132, %s135
    %p144 = scmp.eq.s32.totalorder %s15, 7
    %p145 = por %p143, %p144
    %p146 = scmp.ne.s32.totalorder %s135, %s136
    %p147 = scmp.eq.s32.totalorder %s15, 0
    %p148 = por %p146, %p147
    %p149 = scmp.ne.s32.totalorder %s135, %s136
    %p150 = scmp.eq.s32.totalorder %s16, 7
    %p151 = por %p149, %p150
    %p153 = scmp.ne.s32.totalorder %s136, %s152
    %p154 = scmp.eq.s32.totalorder %s16, 0
    %p155 = por %p153, %p154
    %p156 = scmp.le.s32.totalorder 1, %s10
    %p157 = scmp.lt.s32.totalorder %s10, 9
    %p158 = pnand %p156, %p157
    %p159 = pneg %p158
    // Predicated region
    $region9: #{up_forward.5} parent=5 // pred_check
      _
    $region10: #{up_forward.5} parent=5 // pred_check_branch
      %161 = sbr.rel (%p158) target = $region12
    $region11: #{up_forward.5} parent=5 // pred_region
      %s162 = ssub.s32 %s10, 1
      // Predicated region
      $region13: #{up_forward.5} parent=11 // pred_check
        %p163 = pneg %p99
      $region14: #{up_forward.5} parent=11 // pred_check_branch
        %165 = sbr.rel (%p163) target = $region16
      $region15: #{up_forward.5} parent=11 // pred_region
        _
      $region16: #{up_forward.5} parent=11 // pred_fallthru
        _
      // Predicated region
      $region17: #{up_forward.5} parent=11 // pred_check
        %p166 = pneg %p120
      $region18: #{up_forward.5} parent=11 // pred_check_branch
        %168 = sbr.rel (%p166) target = $region20
      $region19: #{up_forward.5} parent=11 // pred_region
        _
      $region20: #{up_forward.5} parent=11 // pred_fallthru
        _
    $region12: #{up_forward.5} parent=5 // pred_fallthru
      _
    %p169 = scmp.lt.s32.totalorder %s10, 8
    // Predicated region
    $region21: #{up_forward.5} parent=5 // pred_check
      %p170 = pneg %p169
    $region22: #{up_forward.5} parent=5 // pred_check_branch
      %172 = sbr.rel (%p170) target = $region24
    $region23: #{up_forward.5} parent=5 // pred_region
      // Predicated region
      $region25: #{up_forward.5} parent=23 // pred_check
        %p173 = pneg %p44
      $region26: #{up_forward.5} parent=23 // pred_check_branch
        %175 = sbr.rel (%p173) target = $region28
      $region27: #{up_forward.5} parent=23 // pred_region
        %s176 = smul.u32 8, %s18
        %s177 = ssub.s32 34, %s176
        %p178 = scmp.lt.s32.totalorder %s177, 8
        %s179 = scalar_select %p178, %s177, 8
        %s180 = smul.u32 128, %s179
        %s181 = smul.u32 %s180, 5
        %p182 = scmp.lt.s32.totalorder %s17, 1
        %s183 = scalar_select %p182, %s17, 1
        %p184 = scmp.lt.s32.totalorder %s176, 33
        %s185 = scalar_select %p184, %s176, 33
        %s186 = smul.addr %s185, 5
        %s187 = smul.addr %s183, 170
        %s188 = sadd.s32 %s186, %s187
        %s189 = smul.addr %s188, 8
        %s190 = scalar_lea.vmem %s0, %s189
        %s191 = smul.u32 8, %s18
        %s192 = ssub.s32 34, %s191
        %p193 = scmp.lt.s32.totalorder %s192, 8
        %s194 = scalar_select %p193, %s192, 8
        %s195 = smul.u32 128, %s194
        %s196 = smul.u32 %s195, 5
      $region28: #{up_forward.5} parent=23 // pred_fallthru
        _
      // Predicated region
      $region29: #{up_forward.5} parent=23 // pred_check
        %p197 = pneg %p72
      $region30: #{up_forward.5} parent=23 // pred_check_branch
        %199 = sbr.rel (%p197) target = $region32
      $region31: #{up_forward.5} parent=23 // pred_region
        %p200 = scmp.lt.s32.totalorder %s17, 1
        %s201 = scalar_select %p200, %s17, 1
        %p202 = scmp.lt.s32.totalorder %s18, 3
        %s203 = scalar_select %p202, %s18, 3
        %s204 = smul.addr %s203, 10
        %s205 = smul.addr %s201, 40
        %s206 = sadd.s32 %s204, %s205
        %s207 = smul.addr %s206, 8
        %s208 = scalar_lea.vmem %s1, %s207
      $region32: #{up_forward.5} parent=23 // pred_fallthru
        _
    $region24: #{up_forward.5} parent=5 // pred_fallthru
      _
    %p209 = scmp.le.s32.totalorder 1, %s10
    %p210 = scmp.lt.s32.totalorder %s10, 9
    %p211 = pnand %p209, %p210
    %p212 = pneg %p211
    // Predicated region
    $region33: #{up_forward.5} parent=5 // pred_check
      _
    $region34: #{up_forward.5} parent=5 // pred_check_branch
      %214 = sbr.rel (%p211) target = $region36
    $region35: #{up_forward.5} parent=5 // pred_region
      %s215 = ssub.s32 %s10, 1
      %s216 = smul.u32 8, %s20
      %s217 = ssub.s32 34, %s216
      %p218 = scmp.lt.s32.totalorder %s217, 8
      %s219 = scalar_select %p218, %s217, 8
      %s220 = smul.u32 128, %s219
      %s221 = smul.u32 %s220, 5
      %p222 = scmp.lt.s32.totalorder %s19, 1
      %s223 = scalar_select %p222, %s19, 1
      %p224 = scmp.lt.s32.totalorder %s216, 33
      %s225 = scalar_select %p224, %s216, 33
      %s226 = smul.addr %s225, 5
      %s227 = smul.addr %s223, 170
      %s228 = sadd.s32 %s226, %s227
      %s229 = smul.addr %s228, 8
      %s230 = scalar_lea.vmem %s0, %s229
      %p231 = pneg %p50
      %p232 = pneg %p47
      %p233 = scmp.lt.s32.totalorder %s19, 1
      %s234 = scalar_select %p233, %s19, 1
      %p235 = scmp.lt.s32.totalorder %s20, 3
      %s236 = scalar_select %p235, %s20, 3
      %s237 = smul.addr %s236, 10
      %s238 = smul.addr %s234, 40
      %s239 = sadd.s32 %s237, %s238
      %s240 = smul.addr %s239, 8
      %s241 = scalar_lea.vmem %s1, %s240
      %p242 = pneg %p78
      %p243 = pneg %p75
      %p244 = pneg %p99
      %p245 = pneg %p96
      %p246 = pneg %p120
      %p247 = pneg %p117
      %p248 = pneg %p148
      %p249 = pneg %p145
      %s250 = smul.u32 32, %s20
      %p251 = scmp.lt.s32.totalorder %s19, 1
      %s252 = scalar_select %p251, %s19, 1
      %p253 = scmp.lt.s32.totalorder %s250, 127
      %s254 = scalar_select %p253, %s250, 127
      %s255 = smul.addr %s252, 128
      %s256 = sadd.s32 %s254, %s255
      %s257 = smul.addr %s256, 8
      %s258 = scalar_lea.vmem %s4, %s257
      %s259 = smul.u32 8, %s20
      %s260 = ssub.s32 34, %s259
      %p261 = scmp.lt.s32.totalorder %s260, 8
      %s262 = scalar_select %p261, %s260, 8
      %s263 = smul.u32 128, %s262
      %s264 = smul.u32 %s263, 5
      %p265 = scmp.lt.s32.totalorder %s19, 1
      %s266 = scalar_select %p265, %s19, 1
      %p267 = scmp.lt.s32.totalorder %s259, 33
      %s268 = scalar_select %p267, %s259, 33
      %s269 = smul.addr %s268, 5
      %s270 = smul.addr %s266, 170
      %s271 = sadd.s32 %s269, %s270
      %s272 = smul.addr %s271, 8
      %s273 = scalar_lea.vmem %s0, %s272
      %s274 = smul.u32 8, %s20
      %s275 = ssub.s32 34, %s274
      %p276 = scmp.lt.s32.totalorder %s275, 8
      %s277 = scalar_select %p276, %s275, 8
      %s278 = smul.u32 128, %s277
      %s279 = smul.u32 %s278, 5
      %p280 = scmp.lt.s32.totalorder %s19, 1
      %s281 = scalar_select %p280, %s19, 1
      %p282 = scmp.lt.s32.totalorder %s20, 3
      %s283 = scalar_select %p282, %s20, 3
      %s284 = smul.addr %s283, 10
      %s285 = smul.addr %s281, 40
      %s286 = sadd.s32 %s284, %s285
      %s287 = smul.addr %s286, 8
      %s288 = scalar_lea.vmem %s1, %s287
      %s289 = smul.u32 32, %s20
      %p290 = scmp.lt.s32.totalorder %s19, 1
      %s291 = scalar_select %p290, %s19, 1
      %p292 = scmp.lt.s32.totalorder %s289, 127
      %s293 = scalar_select %p292, %s289, 127
      %s294 = smul.addr %s291, 128
      %s295 = sadd.s32 %s293, %s294
      %s296 = smul.addr %s295, 8
      %s297 = scalar_lea.vmem %s4, %s296
      %s298 = smul.u32 32, %s20
      %v299 = vld [vmem:[%s3] sm:$0x1]
      %v301 = vlaneseq
      %v302 = vshrl.u32 %v301, 7
      %v303 = vsub.s32 0, %v302
      %v304 = vrot.slane %v299, %v303
      %v306 = vld [vmem:[%s273] sm:$0xff]
      %v307 = vld [vmem:[%s273 + $0x8] sm:$0xff]
      %v308 = vld [vmem:[%s273 + $0x10] sm:$0xff]
      %v309 = vld [vmem:[%s273 + $0x18] sm:$0xff]
      %v310 = vld [vmem:[%s273 + $0x20] sm:$0x3]
      %v311 = vld [vmem:[%s273 + $0x28] sm:$0xff]
      %v312 = vld [vmem:[%s273 + $0x30] sm:$0xff]
      %v313 = vld [vmem:[%s273 + $0x38] sm:$0xff]
      %v314 = vld [vmem:[%s273 + $0x40] sm:$0xff]
      %v315 = vld [vmem:[%s273 + $0x48] sm:$0x3]
      %v316 = vld [vmem:[%s273 + $0x50] sm:$0xff]
      %v317 = vld [vmem:[%s273 + $0x58] sm:$0xff]
      %v318 = vld [vmem:[%s273 + $0x60] sm:$0xff]
      %v319 = vld [vmem:[%s273 + $0x68] sm:$0xff]
      %v320 = vld [vmem:[%s273 + $0x70] sm:$0x3]
      %v321 = vld [vmem:[%s273 + $0x78] sm:$0xff]
      %v322 = vld [vmem:[%s273 + $0x80] sm:$0xff]
      %v323 = vld [vmem:[%s273 + $0x88] sm:$0xff]
      %v324 = vld [vmem:[%s273 + $0x90] sm:$0xff]
      %v325 = vld [vmem:[%s273 + $0x98] sm:$0x3]
      %v326 = vld [vmem:[%s273 + $0xa0] sm:$0xff]
      %v327 = vld [vmem:[%s273 + $0xa8] sm:$0xff]
      %v328 = vld [vmem:[%s273 + $0xb0] sm:$0xff]
      %v329 = vld [vmem:[%s273 + $0xb8] sm:$0xff]
      %v330 = vld [vmem:[%s273 + $0xc0] sm:$0x3]
      %v331 = vld [vmem:[%s273 + $0xc8] sm:$0xff]
      %v332 = vld [vmem:[%s273 + $0xd0] sm:$0xff]
      %v333 = vld [vmem:[%s273 + $0xd8] sm:$0xff]
      %v334 = vld [vmem:[%s273 + $0xe0] sm:$0xff]
      %v335 = vld [vmem:[%s273 + $0xe8] sm:$0x3]
      %v336 = vld [vmem:[%s273 + $0xf0] sm:$0xff]
      %v337 = vld [vmem:[%s273 + $0xf8] sm:$0xff]
      %v338 = vld [vmem:[%s273 + $0x100] sm:$0xff]
      %v339 = vld [vmem:[%s273 + $0x108] sm:$0xff]
      %v340 = vld [vmem:[%s273 + $0x110] sm:$0x3]
      %v341 = vld [vmem:[%s273 + $0x118] sm:$0xff]
      %v342 = vld [vmem:[%s273 + $0x120] sm:$0xff]
      %v343 = vld [vmem:[%s273 + $0x128] sm:$0xff]
      %v344 = vld [vmem:[%s273 + $0x130] sm:$0xff]
      %v345 = vld [vmem:[%s273 + $0x138] sm:$0x3]
      %v346 = vld [vmem:[%s288] sm:$0xff]
      %v347 = vld [vmem:[%s288 + $0x8] sm:$0xff]
      %v348 = vld [vmem:[%s288 + $0x10] sm:$0xff]
      %v349 = vld [vmem:[%s288 + $0x18] sm:$0xff]
      %v350 = vld [vmem:[%s288 + $0x20] sm:$0x3]
      %v351 = vld [vmem:[%s288 + $0x28] sm:$0xff]
      %v352 = vld [vmem:[%s288 + $0x30] sm:$0xff]
      %v353 = vld [vmem:[%s288 + $0x38] sm:$0xff]
      %v354 = vld [vmem:[%s288 + $0x40] sm:$0xff]
      %v355 = vld [vmem:[%s288 + $0x48] sm:$0x3]
      %vm396 = vcmask 1046528
      %v397 = vrot.slane %v306, 1
      %v398 = vrot.slane %v307, 1
      %v399 = vsel %vm396, %v397, %v398
      %v400 = vrot.slane %v308, 1
      %v401 = vsel %vm396, %v398, %v400
      %v402 = vrot.slane %v309, 1
      %v403 = vsel %vm396, %v400, %v402
      %v404 = vrot.slane %v310, 1
      %v405 = vsel %vm396, %v402, %v404
      %v406 = vrot.slane %v311, 1
      %v407 = vrot.slane %v312, 1
      %v408 = vsel %vm396, %v406, %v407
      %v409 = vrot.slane %v313, 1
      %v410 = vsel %vm396, %v407, %v409
      %v411 = vrot.slane %v314, 1
      %v412 = vsel %vm396, %v409, %v411
      %v413 = vrot.slane %v315, 1
      %v414 = vsel %vm396, %v411, %v413
      %v415 = vrot.slane %v316, 1
      %v416 = vrot.slane %v317, 1
      %v417 = vsel %vm396, %v415, %v416
      %v418 = vrot.slane %v318, 1
      %v419 = vsel %vm396, %v416, %v418
      %v420 = vrot.slane %v319, 1
      %v421 = vsel %vm396, %v418, %v420
      %v422 = vrot.slane %v320, 1
      %v423 = vsel %vm396, %v420, %v422
      %v424 = vrot.slane %v321, 1
      %v425 = vrot.slane %v322, 1
      %v426 = vsel %vm396, %v424, %v425
      %v427 = vrot.slane %v323, 1
      %v428 = vsel %vm396, %v425, %v427
      %v429 = vrot.slane %v324, 1
      %v430 = vsel %vm396, %v427, %v429
      %v431 = vrot.slane %v325, 1
      %v432 = vsel %vm396, %v429, %v431
      %v433 = vrot.slane %v326, 1
      %v434 = vrot.slane %v327, 1
      %v435 = vsel %vm396, %v433, %v434
      %v436 = vrot.slane %v328, 1
      %v437 = vsel %vm396, %v434, %v436
      %v438 = vrot.slane %v329, 1
      %v439 = vsel %vm396, %v436, %v438
      %v440 = vrot.slane %v330, 1
      %v441 = vsel %vm396, %v438, %v440
      %v442 = vrot.slane %v331, 1
      %v443 = vrot.slane %v332, 1
      %v444 = vsel %vm396, %v442, %v443
      %v445 = vrot.slane %v333, 1
      %v446 = vsel %vm396, %v443, %v445
      %v447 = vrot.slane %v334, 1
      %v448 = vsel %vm396, %v445, %v447
      %v449 = vrot.slane %v335, 1
      %v450 = vsel %vm396, %v447, %v449
      %v451 = vrot.slane %v336, 1
      %v452 = vrot.slane %v337, 1
      %v453 = vsel %vm396, %v451, %v452
      %v454 = vrot.slane %v338, 1
      %v455 = vsel %vm396, %v452, %v454
      %v456 = vrot.slane %v339, 1
      %v457 = vsel %vm396, %v454, %v456
      %v458 = vrot.slane %v340, 1
      %v459 = vsel %vm396, %v456, %v458
      %v460 = vrot.slane %v341, 1
      %v461 = vrot.slane %v342, 1
      %v462 = vsel %vm396, %v460, %v461
      %v463 = vrot.slane %v343, 1
      %v464 = vsel %vm396, %v461, %v463
      %v465 = vrot.slane %v344, 1
      %v466 = vsel %vm396, %v463, %v465
      %v467 = vrot.slane %v345, 1
      %v468 = vsel %vm396, %v465, %v467
      %469 = vrot.lane.b32.xlu0 %v399, 4
      %v470 = vpop.permute.xlu0 %469
      %471 = vrot.lane.b32.xlu0 %v401, 4
      %v472 = vpop.permute.xlu0 %471
      %473 = vrot.lane.b32.xlu0 %v403, 4
      %v474 = vpop.permute.xlu0 %473
      %475 = vrot.lane.b32.xlu0 %v405, 4
      %v476 = vpop.permute.xlu0 %475
      %477 = vrot.lane.b32.xlu0 %v408, 4
      %v478 = vpop.permute.xlu0 %477
      %479 = vrot.lane.b32.xlu0 %v410, 4
      %v480 = vpop.permute.xlu0 %479
      %481 = vrot.lane.b32.xlu0 %v412, 4
      %v482 = vpop.permute.xlu0 %481
      %483 = vrot.lane.b32.xlu0 %v414, 4
      %v484 = vpop.permute.xlu0 %483
      %485 = vrot.lane.b32.xlu0 %v417, 4
      %v486 = vpop.permute.xlu0 %485
      %487 = vrot.lane.b32.xlu0 %v419, 4
      %v488 = vpop.permute.xlu0 %487
      %489 = vrot.lane.b32.xlu0 %v421, 4
      %v490 = vpop.permute.xlu0 %489
      %491 = vrot.lane.b32.xlu0 %v423, 4
      %v492 = vpop.permute.xlu0 %491
      %493 = vrot.lane.b32.xlu0 %v426, 4
      %v494 = vpop.permute.xlu0 %493
      %495 = vrot.lane.b32.xlu0 %v428, 4
      %v496 = vpop.permute.xlu0 %495
      %497 = vrot.lane.b32.xlu0 %v430, 4
      %v498 = vpop.permute.xlu0 %497
      %499 = vrot.lane.b32.xlu0 %v432, 4
      %v500 = vpop.permute.xlu0 %499
      %501 = vrot.lane.b32.xlu0 %v435, 4
      %v502 = vpop.permute.xlu0 %501
      %503 = vrot.lane.b32.xlu0 %v437, 4
      %v504 = vpop.permute.xlu0 %503
      %505 = vrot.lane.b32.xlu0 %v439, 4
      %v506 = vpop.permute.xlu0 %505
      %507 = vrot.lane.b32.xlu0 %v441, 4
      %v508 = vpop.permute.xlu0 %507
      %509 = vrot.lane.b32.xlu0 %v444, 4
      %v510 = vpop.permute.xlu0 %509
      %511 = vrot.lane.b32.xlu0 %v446, 4
      %v512 = vpop.permute.xlu0 %511
      %513 = vrot.lane.b32.xlu0 %v448, 4
      %v514 = vpop.permute.xlu0 %513
      %515 = vrot.lane.b32.xlu0 %v450, 4
      %v516 = vpop.permute.xlu0 %515
      %517 = vrot.lane.b32.xlu0 %v453, 4
      %v518 = vpop.permute.xlu0 %517
      %519 = vrot.lane.b32.xlu0 %v455, 4
      %v520 = vpop.permute.xlu0 %519
      %521 = vrot.lane.b32.xlu0 %v457, 4
      %v522 = vpop.permute.xlu0 %521
      %523 = vrot.lane.b32.xlu0 %v459, 4
      %v524 = vpop.permute.xlu0 %523
      %525 = vrot.lane.b32.xlu0 %v462, 4
      %v526 = vpop.permute.xlu0 %525
      %527 = vrot.lane.b32.xlu0 %v464, 4
      %v528 = vpop.permute.xlu0 %527
      %529 = vrot.lane.b32.xlu0 %v466, 4
      %v530 = vpop.permute.xlu0 %529
      %531 = vrot.lane.b32.xlu0 %v468, 4
      %v532 = vpop.permute.xlu0 %531
      %vm565 = vcmask 1045504
      %v566 = vrot.slane %v306, 2
      %v567 = vrot.slane %v307, 2
      %v568 = vsel %vm565, %v566, %v567
      %v569 = vrot.slane %v308, 2
      %v570 = vsel %vm565, %v567, %v569
      %v571 = vrot.slane %v309, 2
      %v572 = vsel %vm565, %v569, %v571
      %v573 = vrot.slane %v310, 2
      %v574 = vsel %vm565, %v571, %v573
      %v575 = vrot.slane %v311, 2
      %v576 = vrot.slane %v312, 2
      %v577 = vsel %vm565, %v575, %v576
      %v578 = vrot.slane %v313, 2
      %v579 = vsel %vm565, %v576, %v578
      %v580 = vrot.slane %v314, 2
      %v581 = vsel %vm565, %v578, %v580
      %v582 = vrot.slane %v315, 2
      %v583 = vsel %vm565, %v580, %v582
      %v584 = vrot.slane %v316, 2
      %v585 = vrot.slane %v317, 2
      %v586 = vsel %vm565, %v584, %v585
      %v587 = vrot.slane %v318, 2
      %v588 = vsel %vm565, %v585, %v587
      %v589 = vrot.slane %v319, 2
      %v590 = vsel %vm565, %v587, %v589
      %v591 = vrot.slane %v320, 2
      %v592 = vsel %vm565, %v589, %v591
      %v593 = vrot.slane %v321, 2
      %v594 = vrot.slane %v322, 2
      %v595 = vsel %vm565, %v593, %v594
      %v596 = vrot.slane %v323, 2
      %v597 = vsel %vm565, %v594, %v596
      %v598 = vrot.slane %v324, 2
      %v599 = vsel %vm565, %v596, %v598
      %v600 = vrot.slane %v325, 2
      %v601 = vsel %vm565, %v598, %v600
      %v602 = vrot.slane %v326, 2
      %v603 = vrot.slane %v327, 2
      %v604 = vsel %vm565, %v602, %v603
      %v605 = vrot.slane %v328, 2
      %v606 = vsel %vm565, %v603, %v605
      %v607 = vrot.slane %v329, 2
      %v608 = vsel %vm565, %v605, %v607
      %v609 = vrot.slane %v330, 2
      %v610 = vsel %vm565, %v607, %v609
      %v611 = vrot.slane %v331, 2
      %v612 = vrot.slane %v332, 2
      %v613 = vsel %vm565, %v611, %v612
      %v614 = vrot.slane %v333, 2
      %v615 = vsel %vm565, %v612, %v614
      %v616 = vrot.slane %v334, 2
      %v617 = vsel %vm565, %v614, %v616
      %v618 = vrot.slane %v335, 2
      %v619 = vsel %vm565, %v616, %v618
      %v620 = vrot.slane %v336, 2
      %v621 = vrot.slane %v337, 2
      %v622 = vsel %vm565, %v620, %v621
      %v623 = vrot.slane %v338, 2
      %v624 = vsel %vm565, %v621, %v623
      %v625 = vrot.slane %v339, 2
      %v626 = vsel %vm565, %v623, %v625
      %v627 = vrot.slane %v340, 2
      %v628 = vsel %vm565, %v625, %v627
      %v629 = vrot.slane %v341, 2
      %v630 = vrot.slane %v342, 2
      %v631 = vsel %vm565, %v629, %v630
      %v632 = vrot.slane %v343, 2
      %v633 = vsel %vm565, %v630, %v632
      %v634 = vrot.slane %v344, 2
      %v635 = vsel %vm565, %v632, %v634
      %v636 = vrot.slane %v345, 2
      %v637 = vsel %vm565, %v634, %v636
      %638 = vrot.lane.b32.xlu0 %v568, 8
      %v639 = vpop.permute.xlu0 %638
      %640 = vrot.lane.b32.xlu0 %v570, 8
      %v641 = vpop.permute.xlu0 %640
      %642 = vrot.lane.b32.xlu0 %v572, 8
      %v643 = vpop.permute.xlu0 %642
      %644 = vrot.lane.b32.xlu0 %v574, 8
      %v645 = vpop.permute.xlu0 %644
      %646 = vrot.lane.b32.xlu0 %v577, 8
      %v647 = vpop.permute.xlu0 %646
      %648 = vrot.lane.b32.xlu0 %v579, 8
      %v649 = vpop.permute.xlu0 %648
      %650 = vrot.lane.b32.xlu0 %v581, 8
      %v651 = vpop.permute.xlu0 %650
      %652 = vrot.lane.b32.xlu0 %v583, 8
      %v653 = vpop.permute.xlu0 %652
      %654 = vrot.lane.b32.xlu0 %v586, 8
      %v655 = vpop.permute.xlu0 %654
      %656 = vrot.lane.b32.xlu0 %v588, 8
      %v657 = vpop.permute.xlu0 %656
      %658 = vrot.lane.b32.xlu0 %v590, 8
      %v659 = vpop.permute.xlu0 %658
      %660 = vrot.lane.b32.xlu0 %v592, 8
      %v661 = vpop.permute.xlu0 %660
      %662 = vrot.lane.b32.xlu0 %v595, 8
      %v663 = vpop.permute.xlu0 %662
      %664 = vrot.lane.b32.xlu0 %v597, 8
      %v665 = vpop.permute.xlu0 %664
      %666 = vrot.lane.b32.xlu0 %v599, 8
      %v667 = vpop.permute.xlu0 %666
      %668 = vrot.lane.b32.xlu0 %v601, 8
      %v669 = vpop.permute.xlu0 %668
      %670 = vrot.lane.b32.xlu0 %v604, 8
      %v671 = vpop.permute.xlu0 %670
      %672 = vrot.lane.b32.xlu0 %v606, 8
      %v673 = vpop.permute.xlu0 %672
      %674 = vrot.lane.b32.xlu0 %v608, 8
      %v675 = vpop.permute.xlu0 %674
      %676 = vrot.lane.b32.xlu0 %v610, 8
      %v677 = vpop.permute.xlu0 %676
      %678 = vrot.lane.b32.xlu0 %v613, 8
      %v679 = vpop.permute.xlu0 %678
      %680 = vrot.lane.b32.xlu0 %v615, 8
      %v681 = vpop.permute.xlu0 %680
      %682 = vrot.lane.b32.xlu0 %v617, 8
      %v683 = vpop.permute.xlu0 %682
      %684 = vrot.lane.b32.xlu0 %v619, 8
      %v685 = vpop.permute.xlu0 %684
      %686 = vrot.lane.b32.xlu0 %v622, 8
      %v687 = vpop.permute.xlu0 %686
      %688 = vrot.lane.b32.xlu0 %v624, 8
      %v689 = vpop.permute.xlu0 %688
      %690 = vrot.lane.b32.xlu0 %v626, 8
      %v691 = vpop.permute.xlu0 %690
      %692 = vrot.lane.b32.xlu0 %v628, 8
      %v693 = vpop.permute.xlu0 %692
      %694 = vrot.lane.b32.xlu0 %v631, 8
      %v695 = vpop.permute.xlu0 %694
      %696 = vrot.lane.b32.xlu0 %v633, 8
      %v697 = vpop.permute.xlu0 %696
      %698 = vrot.lane.b32.xlu0 %v635, 8
      %v699 = vpop.permute.xlu0 %698
      %700 = vrot.lane.b32.xlu0 %v637, 8
      %v701 = vpop.permute.xlu0 %700
      %vm734 = vcmask 31744
      %v735 = vsel %vm734, %v306, %v470
      %v736 = vsel %vm734, %v307, %v472
      %v737 = vsel %vm734, %v308, %v474
      %v738 = vsel %vm734, %v309, %v476
      %v739 = vsel %vm734, %v311, %v478
      %v740 = vsel %vm734, %v312, %v480
      %v741 = vsel %vm734, %v313, %v482
      %v742 = vsel %vm734, %v314, %v484
      %v743 = vsel %vm734, %v316, %v486
      %v744 = vsel %vm734, %v317, %v488
      %v745 = vsel %vm734, %v318, %v490
      %v746 = vsel %vm734, %v319, %v492
      %v747 = vsel %vm734, %v321, %v494
      %v748 = vsel %vm734, %v322, %v496
      %v749 = vsel %vm734, %v323, %v498
      %v750 = vsel %vm734, %v324, %v500
      %v751 = vsel %vm734, %v326, %v502
      %v752 = vsel %vm734, %v327, %v504
      %v753 = vsel %vm734, %v328, %v506
      %v754 = vsel %vm734, %v329, %v508
      %v755 = vsel %vm734, %v331, %v510
      %v756 = vsel %vm734, %v332, %v512
      %v757 = vsel %vm734, %v333, %v514
      %v758 = vsel %vm734, %v334, %v516
      %v759 = vsel %vm734, %v336, %v518
      %v760 = vsel %vm734, %v337, %v520
      %v761 = vsel %vm734, %v338, %v522
      %v762 = vsel %vm734, %v339, %v524
      %v763 = vsel %vm734, %v341, %v526
      %v764 = vsel %vm734, %v342, %v528
      %v765 = vsel %vm734, %v343, %v530
      %v766 = vsel %vm734, %v344, %v532
      %vm767 = vcmask 64512
      %v768 = vsel %vm767, %v735, %v639
      %v769 = vsel %vm767, %v736, %v641
      %v770 = vsel %vm767, %v737, %v643
      %v771 = vsel %vm767, %v738, %v645
      %v772 = vsel %vm767, %v739, %v647
      %v773 = vsel %vm767, %v740, %v649
      %v774 = vsel %vm767, %v741, %v651
      %v775 = vsel %vm767, %v742, %v653
      %v776 = vsel %vm767, %v743, %v655
      %v777 = vsel %vm767, %v744, %v657
      %v778 = vsel %vm767, %v745, %v659
      %v779 = vsel %vm767, %v746, %v661
      %v780 = vsel %vm767, %v747, %v663
      %v781 = vsel %vm767, %v748, %v665
      %v782 = vsel %vm767, %v749, %v667
      %v783 = vsel %vm767, %v750, %v669
      %v784 = vsel %vm767, %v751, %v671
      %v785 = vsel %vm767, %v752, %v673
      %v786 = vsel %vm767, %v753, %v675
      %v787 = vsel %vm767, %v754, %v677
      %v788 = vsel %vm767, %v755, %v679
      %v789 = vsel %vm767, %v756, %v681
      %v790 = vsel %vm767, %v757, %v683
      %v791 = vsel %vm767, %v758, %v685
      %v792 = vsel %vm767, %v759, %v687
      %v793 = vsel %vm767, %v760, %v689
      %v794 = vsel %vm767, %v761, %v691
      %v795 = vsel %vm767, %v762, %v693
      %v796 = vsel %vm767, %v763, %v695
      %v797 = vsel %vm767, %v764, %v697
      %v798 = vsel %vm767, %v765, %v699
      %v799 = vsel %vm767, %v766, %v701
      %v800 = vld [vmem:[%s2] sm:$0xff]
      %v801 = vld [vmem:[%s2 + $0x8] sm:$0xf]
      %vm802 = vcmask 97280
      %v804 = vsel %vm802, %v768, 0
      %v807 = vsel %vm802, %v769, 0
      %v810 = vsel %vm802, %v770, 0
      %v813 = vsel %vm802, %v771, 0
      %v816 = vsel %vm802, %v772, 0
      %v819 = vsel %vm802, %v773, 0
      %v822 = vsel %vm802, %v774, 0
      %v825 = vsel %vm802, %v775, 0
      %v828 = vsel %vm802, %v776, 0
      %v831 = vsel %vm802, %v777, 0
      %v834 = vsel %vm802, %v778, 0
      %v837 = vsel %vm802, %v779, 0
      %v840 = vsel %vm802, %v780, 0
      %v843 = vsel %vm802, %v781, 0
      %v846 = vsel %vm802, %v782, 0
      %v849 = vsel %vm802, %v783, 0
      %v852 = vsel %vm802, %v784, 0
      %v855 = vsel %vm802, %v785, 0
      %v858 = vsel %vm802, %v786, 0
      %v861 = vsel %vm802, %v787, 0
      %v864 = vsel %vm802, %v788, 0
      %v867 = vsel %vm802, %v789, 0
      %v870 = vsel %vm802, %v790, 0
      %v873 = vsel %vm802, %v791, 0
      %v876 = vsel %vm802, %v792, 0
      %v879 = vsel %vm802, %v793, 0
      %v882 = vsel %vm802, %v794, 0
      %v885 = vsel %vm802, %v795, 0
      %v888 = vsel %vm802, %v796, 0
      %v891 = vsel %vm802, %v797, 0
      %v894 = vsel %vm802, %v798, 0
      %v897 = vsel %vm802, %v799, 0
      %vm899 = vcmask 1043456
      %v901 = vsel %vm899, %v801, 0
      %903 = vmatprep.subr.mxu0 0.0
      %904 = vmatpush1.msra.mxu0 %v800
      %905 = vmatprep.subr.mxu0 0.0
      %906 = vmatpush1.msra.mxu0 %v901
      %907 = vmatprep.subr.mxu0 0.0
      %908 = vmatpush1.msra.mxu0 0.0
      %909 = vmatprep.subr.mxu0 0.0
      %910 = vmatpush1.msra.mxu0 0.0
      %911 = vmatprep.subr.mxu0 0.0
      %912 = vmatpush1.msra.mxu0 0.0
      %913 = vmatprep.subr.mxu0 0.0
      %914 = vmatpush1.msra.mxu0 0.0
      %915 = vmatprep.subr.mxu0 0.0
      %916 = vmatpush1.msra.mxu0 0.0
      %917 = vmatprep.subr.mxu0 0.0
      %918 = vmatpush1.msra.mxu0 0.0
      %919 = vmatprep.subr.mxu0 0.0
      %920 = vmatpush1.msra.mxu0 0.0
      %921 = vmatprep.subr.mxu0 0.0
      %922 = vmatpush1.msra.mxu0 0.0
      %923 = vmatprep.subr.mxu0 0.0
      %924 = vmatpush1.msra.mxu0 0.0
      %925 = vmatprep.subr.mxu0 0.0
      %926 = vmatpush1.msra.mxu0 0.0
      %927 = vmatprep.subr.mxu0 0.0
      %928 = vmatpush1.msra.mxu0 0.0
      %929 = vmatprep.subr.mxu0 0.0
      %930 = vmatpush1.msra.mxu0 0.0
      %931 = vmatprep.subr.mxu0 0.0
      %932 = vmatpush1.msra.mxu0 0.0
      %933 = vmatprep.subr.mxu0 0.0
      %934 = vmatpush1.msra.mxu0 0.0
      %935 = vmatprep.subr.mxu0 0.0
      %936 = vmatpush1.msra.mxu0 0.0
      %937 = vmatprep.subr.mxu0 0.0
      %938 = vmatpush1.msra.mxu0 0.0
      %939 = vmatprep.subr.mxu0 0.0
      %940 = vmatpush1.msra.mxu0 0.0
      %941 = vmatprep.subr.mxu0 0.0
      %942 = vmatpush1.msra.mxu0 0.0
      %943 = vmatprep.subr.mxu0 0.0
      %944 = vmatpush1.msra.mxu0 0.0
      %945 = vmatprep.subr.mxu0 0.0
      %946 = vmatpush1.msra.mxu0 0.0
      %947 = vmatprep.subr.mxu0 0.0
      %948 = vmatpush1.msra.mxu0 0.0
      %949 = vmatprep.subr.mxu0 0.0
      %950 = vmatpush1.msra.mxu0 0.0
      %951 = vmatprep.subr.mxu0 0.0
      %952 = vmatpush1.msra.mxu0 0.0
      %953 = vmatprep.subr.mxu0 0.0
      %954 = vmatpush1.msra.mxu0 0.0
      %955 = vmatprep.subr.mxu0 0.0
      %956 = vmatpush1.msra.mxu0 0.0
      %957 = vmatprep.subr.mxu0 0.0
      %958 = vmatpush1.msra.mxu0 0.0
      %959 = vmatprep.subr.mxu0 0.0
      %960 = vmatpush1.msra.mxu0 0.0
      %961 = vmatprep.subr.mxu0 0.0
      %962 = vmatpush1.msra.mxu0 0.0
      %963 = vmatprep.subr.mxu0 0.0
      %964 = vmatpush1.msra.mxu0 0.0
      %965 = vmatprep.subr.mxu0 0.0
      %966 = vmatpush1.msra.mxu0 0.0
      %967 = vmatprep.mubr.f32.mxu0 0.0
      %968 = vmatmul.mubr.f32.gmra.mrb[0].mxu0 %v804
      %v969 = vpop.f32.mrb[0].mxu0
      %v970 = vadd.f32 0.0, %v969
      %v971 = vpop.f32.mrb[0].mxu0
      %972 = vmatprep.mubr.f32.mxu0 0.0
      %973 = vmatmul.mubr.f32.gmra.mrb[0].mxu0 %v807
      %v974 = vpop.f32.mrb[0].mxu0
      %v975 = vadd.f32 0.0, %v974
      %v976 = vpop.f32.mrb[0].mxu0
      %977 = vmatprep.mubr.f32.mxu0 0.0
      %978 = vmatmul.mubr.f32.gmra.mrb[0].mxu0 %v810
      %v979 = vpop.f32.mrb[0].mxu0
      %v980 = vadd.f32 0.0, %v979
      %v981 = vpop.f32.mrb[0].mxu0
      %982 = vmatprep.mubr.f32.mxu0 0.0
      %983 = vmatmul.mubr.f32.gmra.mrb[0].mxu0 %v813
      %v984 = vpop.f32.mrb[0].mxu0
      %v985 = vadd.f32 0.0, %v984
      %v986 = vpop.f32.mrb[0].mxu0
      %987 = vmatprep.mubr.f32.mxu0 0.0
      %988 = vmatmul.mubr.f32.gmra.mrb[0].mxu0 %v816
      %v989 = vpop.f32.mrb[0].mxu0
      %v990 = vadd.f32 0.0, %v989
      %v991 = vpop.f32.mrb[0].mxu0
      %992 = vmatprep.mubr.f32.mxu0 0.0
      %993 = vmatmul.mubr.f32.gmra.mrb[0].mxu0 %v819
      %v994 = vpop.f32.mrb[0].mxu0
      %v995 = vadd.f32 0.0, %v994
      %v996 = vpop.f32.mrb[0].mxu0
      %997 = vmatprep.mubr.f32.mxu0 0.0
      %998 = vmatmul.mubr.f32.gmra.mrb[0].mxu0 %v822
      %v999 = vpop.f32.mrb[0].mxu0
      %v1000 = vadd.f32 0.0, %v999
      %v1001 = vpop.f32.mrb[0].mxu0
      %1002 = vmatprep.mubr.f32.mxu0 0.0
      %1003 = vmatmul.mubr.f32.gmra.mrb[0].mxu0 %v825
      %v1004 = vpop.f32.mrb[0].mxu0
      %v1005 = vadd.f32 0.0, %v1004
      %v1006 = vpop.f32.mrb[0].mxu0
      %1007 = vmatprep.mubr.f32.mxu0 0.0
      %1008 = vmatmul.mubr.f32.gmra.mrb[0].mxu0 %v828
      %v1009 = vpop.f32.mrb[0].mxu0
      %v1010 = vadd.f32 0.0, %v1009
      %v1011 = vpop.f32.mrb[0].mxu0
      %1012 = vmatprep.mubr.f32.mxu0 0.0
      %1013 = vmatmul.mubr.f32.gmra.mrb[0].mxu0 %v831
      %v1014 = vpop.f32.mrb[0].mxu0
      %v1015 = vadd.f32 0.0, %v1014
      %v1016 = vpop.f32.mrb[0].mxu0
      %1017 = vmatprep.mubr.f32.mxu0 0.0
      %1018 = vmatmul.mubr.f32.gmra.mrb[0].mxu0 %v834
      %v1019 = vpop.f32.mrb[0].mxu0
      %v1020 = vadd.f32 0.0, %v1019
      %v1021 = vpop.f32.mrb[0].mxu0
      %1022 = vmatprep.mubr.f32.mxu0 0.0
      %1023 = vmatmul.mubr.f32.gmra.mrb[0].mxu0 %v837
      %v1024 = vpop.f32.mrb[0].mxu0
      %v1025 = vadd.f32 0.0, %v1024
      %v1026 = vpop.f32.mrb[0].mxu0
      %1027 = vmatprep.mubr.f32.mxu0 0.0
      %1028 = vmatmul.mubr.f32.gmra.mrb[0].mxu0 %v840
      %v1029 = vpop.f32.mrb[0].mxu0
      %v1030 = vadd.f32 0.0, %v1029
      %v1031 = vpop.f32.mrb[0].mxu0
      %1032 = vmatprep.mubr.f32.mxu0 0.0
      %1033 = vmatmul.mubr.f32.gmra.mrb[0].mxu0 %v843
      %v1034 = vpop.f32.mrb[0].mxu0
      %v1035 = vadd.f32 0.0, %v1034
      %v1036 = vpop.f32.mrb[0].mxu0
      %1037 = vmatprep.mubr.f32.mxu0 0.0
      %1038 = vmatmul.mubr.f32.gmra.mrb[0].mxu0 %v846
      %v1039 = vpop.f32.mrb[0].mxu0
      %v1040 = vadd.f32 0.0, %v1039
      %v1041 = vpop.f32.mrb[0].mxu0
      %1042 = vmatprep.mubr.f32.mxu0 0.0
      %1043 = vmatmul.mubr.f32.gmra.mrb[0].mxu0 %v849
      %v1044 = vpop.f32.mrb[0].mxu0
      %v1045 = vadd.f32 0.0, %v1044
      %v1046 = vpop.f32.mrb[0].mxu0
      %1047 = vmatprep.mubr.f32.mxu0 0.0
      %1048 = vmatmul.mubr.f32.gmra.mrb[0].mxu0 %v852
      %v1049 = vpop.f32.mrb[0].mxu0
      %v1050 = vadd.f32 0.0, %v1049
      %v1051 = vpop.f32.mrb[0].mxu0
      %1052 = vmatprep.mubr.f32.mxu0 0.0
      %1053 = vmatmul.mubr.f32.gmra.mrb[0].mxu0 %v855
      %v1054 = vpop.f32.mrb[0].mxu0
      %v1055 = vadd.f32 0.0, %v1054
      %v1056 = vpop.f32.mrb[0].mxu0
      %1057 = vmatprep.mubr.f32.mxu0 0.0
      %1058 = vmatmul.mubr.f32.gmra.mrb[0].mxu0 %v858
      %v1059 = vpop.f32.mrb[0].mxu0
      %v1060 = vadd.f32 0.0, %v1059
      %v1061 = vpop.f32.mrb[0].mxu0
      %1062 = vmatprep.mubr.f32.mxu0 0.0
      %1063 = vmatmul.mubr.f32.gmra.mrb[0].mxu0 %v861
      %v1064 = vpop.f32.mrb[0].mxu0
      %v1065 = vadd.f32 0.0, %v1064
      %v1066 = vpop.f32.mrb[0].mxu0
      %1067 = vmatprep.mubr.f32.mxu0 0.0
      %1068 = vmatmul.mubr.f32.gmra.mrb[0].mxu0 %v864
      %v1069 = vpop.f32.mrb[0].mxu0
      %v1070 = vadd.f32 0.0, %v1069
      %v1071 = vpop.f32.mrb[0].mxu0
      %1072 = vmatprep.mubr.f32.mxu0 0.0
      %1073 = vmatmul.mubr.f32.gmra.mrb[0].mxu0 %v867
      %v1074 = vpop.f32.mrb[0].mxu0
      %v1075 = vadd.f32 0.0, %v1074
      %v1076 = vpop.f32.mrb[0].mxu0
      %1077 = vmatprep.mubr.f32.mxu0 0.0
      %1078 = vmatmul.mubr.f32.gmra.mrb[0].mxu0 %v870
      %v1079 = vpop.f32.mrb[0].mxu0
      %v1080 = vadd.f32 0.0, %v1079
      %v1081 = vpop.f32.mrb[0].mxu0
      %1082 = vmatprep.mubr.f32.mxu0 0.0
      %1083 = vmatmul.mubr.f32.gmra.mrb[0].mxu0 %v873
      %v1084 = vpop.f32.mrb[0].mxu0
      %v1085 = vadd.f32 0.0, %v1084
      %v1086 = vpop.f32.mrb[0].mxu0
      %1087 = vmatprep.mubr.f32.mxu0 0.0
      %1088 = vmatmul.mubr.f32.gmra.mrb[0].mxu0 %v876
      %v1089 = vpop.f32.mrb[0].mxu0
      %v1090 = vadd.f32 0.0, %v1089
      %v1091 = vpop.f32.mrb[0].mxu0
      %1092 = vmatprep.mubr.f32.mxu0 0.0
      %1093 = vmatmul.mubr.f32.gmra.mrb[0].mxu0 %v879
      %v1094 = vpop.f32.mrb[0].mxu0
      %v1095 = vadd.f32 0.0, %v1094
      %v1096 = vpop.f32.mrb[0].mxu0
      %1097 = vmatprep.mubr.f32.mxu0 0.0
      %1098 = vmatmul.mubr.f32.gmra.mrb[0].mxu0 %v882
      %v1099 = vpop.f32.mrb[0].mxu0
      %v1100 = vadd.f32 0.0, %v1099
      %v1101 = vpop.f32.mrb[0].mxu0
      %1102 = vmatprep.mubr.f32.mxu0 0.0
      %1103 = vmatmul.mubr.f32.gmra.mrb[0].mxu0 %v885
      %v1104 = vpop.f32.mrb[0].mxu0
      %v1105 = vadd.f32 0.0, %v1104
      %v1106 = vpop.f32.mrb[0].mxu0
      %1107 = vmatprep.mubr.f32.mxu0 0.0
      %1108 = vmatmul.mubr.f32.gmra.mrb[0].mxu0 %v888
      %v1109 = vpop.f32.mrb[0].mxu0
      %v1110 = vadd.f32 0.0, %v1109
      %v1111 = vpop.f32.mrb[0].mxu0
      %1112 = vmatprep.mubr.f32.mxu0 0.0
      %1113 = vmatmul.mubr.f32.gmra.mrb[0].mxu0 %v891
      %v1114 = vpop.f32.mrb[0].mxu0
      %v1115 = vadd.f32 0.0, %v1114
      %v1116 = vpop.f32.mrb[0].mxu0
      %1117 = vmatprep.mubr.f32.mxu0 0.0
      %1118 = vmatmul.mubr.f32.gmra.mrb[0].mxu0 %v894
      %v1119 = vpop.f32.mrb[0].mxu0
      %v1120 = vadd.f32 0.0, %v1119
      %v1121 = vpop.f32.mrb[0].mxu0
      %1122 = vmatprep.mubr.f32.mxu0 0.0
      %1123 = vmatmul.mubr.f32.gmra.mrb[0].mxu0 %v897
      %v1124 = vpop.f32.mrb[0].mxu0
      %v1125 = vadd.f32 0.0, %v1124
      %v1126 = vpop.f32.mrb[0].mxu0
      %1127 = vdwg.mxu0
      %v1128 = vadd.f32 %v304, %v970
      %v1129 = vadd.f32 %v304, %v975
      %v1130 = vadd.f32 %v304, %v980
      %v1131 = vadd.f32 %v304, %v985
      %v1132 = vadd.f32 %v304, %v990
      %v1133 = vadd.f32 %v304, %v995
      %v1134 = vadd.f32 %v304, %v1000
      %v1135 = vadd.f32 %v304, %v1005
      %v1136 = vadd.f32 %v304, %v1010
      %v1137 = vadd.f32 %v304, %v1015
      %v1138 = vadd.f32 %v304, %v1020
      %v1139 = vadd.f32 %v304, %v1025
      %v1140 = vadd.f32 %v304, %v1030
      %v1141 = vadd.f32 %v304, %v1035
      %v1142 = vadd.f32 %v304, %v1040
      %v1143 = vadd.f32 %v304, %v1045
      %v1144 = vadd.f32 %v304, %v1050
      %v1145 = vadd.f32 %v304, %v1055
      %v1146 = vadd.f32 %v304, %v1060
      %v1147 = vadd.f32 %v304, %v1065
      %v1148 = vadd.f32 %v304, %v1070
      %v1149 = vadd.f32 %v304, %v1075
      %v1150 = vadd.f32 %v304, %v1080
      %v1151 = vadd.f32 %v304, %v1085
      %v1152 = vadd.f32 %v304, %v1090
      %v1153 = vadd.f32 %v304, %v1095
      %v1154 = vadd.f32 %v304, %v1100
      %v1155 = vadd.f32 %v304, %v1105
      %v1156 = vadd.f32 %v304, %v1110
      %v1157 = vadd.f32 %v304, %v1115
      %v1158 = vadd.f32 %v304, %v1120
      %v1159 = vadd.f32 %v304, %v1125
      %v1165 = vrot.slane %v346, 1
      %v1166 = vrot.slane %v347, 1
      %v1167 = vsel %vm396, %v1165, %v1166
      %v1168 = vrot.slane %v348, 1
      %v1169 = vsel %vm396, %v1166, %v1168
      %v1170 = vrot.slane %v349, 1
      %v1171 = vsel %vm396, %v1168, %v1170
      %v1172 = vrot.slane %v350, 1
      %v1173 = vsel %vm396, %v1170, %v1172
      %1174 = vrot.lane.b32.xlu0 %v1167, 4
      %v1175 = vpop.permute.xlu0 %1174
      %1176 = vrot.lane.b32.xlu0 %v1169, 4
      %v1177 = vpop.permute.xlu0 %1176
      %1178 = vrot.lane.b32.xlu0 %v1171, 4
      %v1179 = vpop.permute.xlu0 %1178
      %1180 = vrot.lane.b32.xlu0 %v1173, 4
      %v1181 = vpop.permute.xlu0 %1180
      %v1186 = vrot.slane %v346, 2
      %v1187 = vrot.slane %v347, 2
      %v1188 = vsel %vm565, %v1186, %v1187
      %v1189 = vrot.slane %v348, 2
      %v1190 = vsel %vm565, %v1187, %v1189
      %v1191 = vrot.slane %v349, 2
      %v1192 = vsel %vm565, %v1189, %v1191
      %v1193 = vrot.slane %v350, 2
      %v1194 = vsel %vm565, %v1191, %v1193
      %1195 = vrot.lane.b32.xlu0 %v1188, 8
      %v1196 = vpop.permute.xlu0 %1195
      %1197 = vrot.lane.b32.xlu0 %v1190, 8
      %v1198 = vpop.permute.xlu0 %1197
      %1199 = vrot.lane.b32.xlu0 %v1192, 8
      %v1200 = vpop.permute.xlu0 %1199
      %1201 = vrot.lane.b32.xlu0 %v1194, 8
      %v1202 = vpop.permute.xlu0 %1201
      %v1207 = vsel %vm734, %v346, %v1175
      %v1208 = vsel %vm734, %v347, %v1177
      %v1209 = vsel %vm734, %v348, %v1179
      %v1210 = vsel %vm734, %v349, %v1181
      %v1211 = vsel %vm767, %v1207, %v1196
      %v1212 = vsel %vm767, %v1208, %v1198
      %v1213 = vsel %vm767, %v1209, %v1200
      %v1214 = vsel %vm767, %v1210, %v1202
      %s1215 = scalar_lea.vmem %s2, 16
      %v1216 = vld [vmem:[%s1215] sm:$0xff]
      %v1217 = vld [vmem:[%s1215 + $0x8] sm:$0xf]
      %v1219 = vsel %vm802, %v1211, 0
      %v1222 = vsel %vm802, %v1212, 0
      %v1225 = vsel %vm802, %v1213, 0
      %v1228 = vsel %vm802, %v1214, 0
      %v1231 = vsel %vm899, %v1217, 0
      %1233 = vmatprep.subr.mxu0 0.0
      %1234 = vmatpush1.msra.mxu0 %v1216
      %1235 = vmatprep.subr.mxu0 0.0
      %1236 = vmatpush1.msra.mxu0 %v1231
      %1237 = vmatprep.subr.mxu0 0.0
      %1238 = vmatpush1.msra.mxu0 0.0
      %1239 = vmatprep.subr.mxu0 0.0
      %1240 = vmatpush1.msra.mxu0 0.0
      %1241 = vmatprep.subr.mxu0 0.0
      %1242 = vmatpush1.msra.mxu0 0.0
      %1243 = vmatprep.subr.mxu0 0.0
      %1244 = vmatpush1.msra.mxu0 0.0
      %1245 = vmatprep.subr.mxu0 0.0
      %1246 = vmatpush1.msra.mxu0 0.0
      %1247 = vmatprep.subr.mxu0 0.0
      %1248 = vmatpush1.msra.mxu0 0.0
      %1249 = vmatprep.subr.mxu0 0.0
      %1250 = vmatpush1.msra.mxu0 0.0
      %1251 = vmatprep.subr.mxu0 0.0
      %1252 = vmatpush1.msra.mxu0 0.0
      %1253 = vmatprep.subr.mxu0 0.0
      %1254 = vmatpush1.msra.mxu0 0.0
      %1255 = vmatprep.subr.mxu0 0.0
      %1256 = vmatpush1.msra.mxu0 0.0
      %1257 = vmatprep.subr.mxu0 0.0
      %1258 = vmatpush1.msra.mxu0 0.0
      %1259 = vmatprep.subr.mxu0 0.0
      %1260 = vmatpush1.msra.mxu0 0.0
      %1261 = vmatprep.subr.mxu0 0.0
      %1262 = vmatpush1.msra.mxu0 0.0
      %1263 = vmatprep.subr.mxu0 0.0
      %1264 = vmatpush1.msra.mxu0 0.0
      %1265 = vmatprep.subr.mxu0 0.0
      %1266 = vmatpush1.msra.mxu0 0.0
      %1267 = vmatprep.subr.mxu0 0.0
      %1268 = vmatpush1.msra.mxu0 0.0
      %1269 = vmatprep.subr.mxu0 0.0
      %1270 = vmatpush1.msra.mxu0 0.0
      %1271 = vmatprep.subr.mxu0 0.0
      %1272 = vmatpush1.msra.mxu0 0.0
      %1273 = vmatprep.subr.mxu0 0.0
      %1274 = vmatpush1.msra.mxu0 0.0
      %1275 = vmatprep.subr.mxu0 0.0
      %1276 = vmatpush1.msra.mxu0 0.0
      %1277 = vmatprep.subr.mxu0 0.0
      %1278 = vmatpush1.msra.mxu0 0.0
      %1279 = vmatprep.subr.mxu0 0.0
      %1280 = vmatpush1.msra.mxu0 0.0
      %1281 = vmatprep.subr.mxu0 0.0
      %1282 = vmatpush1.msra.mxu0 0.0
      %1283 = vmatprep.subr.mxu0 0.0
      %1284 = vmatpush1.msra.mxu0 0.0
      %1285 = vmatprep.subr.mxu0 0.0
      %1286 = vmatpush1.msra.mxu0 0.0
      %1287 = vmatprep.subr.mxu0 0.0
      %1288 = vmatpush1.msra.mxu0 0.0
      %1289 = vmatprep.subr.mxu0 0.0
      %1290 = vmatpush1.msra.mxu0 0.0
      %1291 = vmatprep.subr.mxu0 0.0
      %1292 = vmatpush1.msra.mxu0 0.0
      %1293 = vmatprep.subr.mxu0 0.0
      %1294 = vmatpush1.msra.mxu0 0.0
      %1295 = vmatprep.subr.mxu0 0.0
      %1296 = vmatpush1.msra.mxu0 0.0
      %1297 = vmatprep.mubr.f32.mxu0 0.0
      %1298 = vmatmul.mubr.f32.gmra.mrb[0].mxu0 %v816
      %v1299 = vpop.f32.mrb[0].mxu0
      %v1300 = vadd.f32 0.0, %v1299
      %v1301 = vpop.f32.mrb[0].mxu0
      %1302 = vmatprep.mubr.f32.mxu0 0.0
      %1303 = vmatmul.mubr.f32.gmra.mrb[0].mxu0 %v819
      %v1304 = vpop.f32.mrb[0].mxu0
      %v1305 = vadd.f32 0.0, %v1304
      %v1306 = vpop.f32.mrb[0].mxu0
      %1307 = vmatprep.mubr.f32.mxu0 0.0
      %1308 = vmatmul.mubr.f32.gmra.mrb[0].mxu0 %v822
      %v1309 = vpop.f32.mrb[0].mxu0
      %v1310 = vadd.f32 0.0, %v1309
      %v1311 = vpop.f32.mrb[0].mxu0
      %1312 = vmatprep.mubr.f32.mxu0 0.0
      %1313 = vmatmul.mubr.f32.gmra.mrb[0].mxu0 %v825
      %v1314 = vpop.f32.mrb[0].mxu0
      %v1315 = vadd.f32 0.0, %v1314
      %v1316 = vpop.f32.mrb[0].mxu0
      %1317 = vmatprep.mubr.f32.mxu0 0.0
      %1318 = vmatmul.mubr.f32.gmra.mrb[0].mxu0 %v828
      %v1319 = vpop.f32.mrb[0].mxu0
      %v1320 = vadd.f32 0.0, %v1319
      %v1321 = vpop.f32.mrb[0].mxu0
      %1322 = vmatprep.mubr.f32.mxu0 0.0
      %1323 = vmatmul.mubr.f32.gmra.mrb[0].mxu0 %v831
      %v1324 = vpop.f32.mrb[0].mxu0
      %v1325 = vadd.f32 0.0, %v1324
      %v1326 = vpop.f32.mrb[0].mxu0
      %1327 = vmatprep.mubr.f32.mxu0 0.0
      %1328 = vmatmul.mubr.f32.gmra.mrb[0].mxu0 %v834
      %v1329 = vpop.f32.mrb[0].mxu0
      %v1330 = vadd.f32 0.0, %v1329
      %v1331 = vpop.f32.mrb[0].mxu0
      %1332 = vmatprep.mubr.f32.mxu0 0.0
      %1333 = vmatmul.mubr.f32.gmra.mrb[0].mxu0 %v837
      %v1334 = vpop.f32.mrb[0].mxu0
      %v1335 = vadd.f32 0.0, %v1334
      %v1336 = vpop.f32.mrb[0].mxu0
      %1337 = vmatprep.mubr.f32.mxu0 0.0
      %1338 = vmatmul.mubr.f32.gmra.mrb[0].mxu0 %v840
      %v1339 = vpop.f32.mrb[0].mxu0
      %v1340 = vadd.f32 0.0, %v1339
      %v1341 = vpop.f32.mrb[0].mxu0
      %1342 = vmatprep.mubr.f32.mxu0 0.0
      %1343 = vmatmul.mubr.f32.gmra.mrb[0].mxu0 %v843
      %v1344 = vpop.f32.mrb[0].mxu0
      %v1345 = vadd.f32 0.0, %v1344
      %v1346 = vpop.f32.mrb[0].mxu0
      %1347 = vmatprep.mubr.f32.mxu0 0.0
      %1348 = vmatmul.mubr.f32.gmra.mrb[0].mxu0 %v846
      %v1349 = vpop.f32.mrb[0].mxu0
      %v1350 = vadd.f32 0.0, %v1349
      %v1351 = vpop.f32.mrb[0].mxu0
      %1352 = vmatprep.mubr.f32.mxu0 0.0
      %1353 = vmatmul.mubr.f32.gmra.mrb[0].mxu0 %v849
      %v1354 = vpop.f32.mrb[0].mxu0
      %v1355 = vadd.f32 0.0, %v1354
      %v1356 = vpop.f32.mrb[0].mxu0
      %1357 = vmatprep.mubr.f32.mxu0 0.0
      %1358 = vmatmul.mubr.f32.gmra.mrb[0].mxu0 %v852
      %v1359 = vpop.f32.mrb[0].mxu0
      %v1360 = vadd.f32 0.0, %v1359
      %v1361 = vpop.f32.mrb[0].mxu0
      %1362 = vmatprep.mubr.f32.mxu0 0.0
      %1363 = vmatmul.mubr.f32.gmra.mrb[0].mxu0 %v855
      %v1364 = vpop.f32.mrb[0].mxu0
      %v1365 = vadd.f32 0.0, %v1364
      %v1366 = vpop.f32.mrb[0].mxu0
      %1367 = vmatprep.mubr.f32.mxu0 0.0
      %1368 = vmatmul.mubr.f32.gmra.mrb[0].mxu0 %v858
      %v1369 = vpop.f32.mrb[0].mxu0
      %v1370 = vadd.f32 0.0, %v1369
      %v1371 = vpop.f32.mrb[0].mxu0
      %1372 = vmatprep.mubr.f32.mxu0 0.0
      %1373 = vmatmul.mubr.f32.gmra.mrb[0].mxu0 %v861
      %v1374 = vpop.f32.mrb[0].mxu0
      %v1375 = vadd.f32 0.0, %v1374
      %v1376 = vpop.f32.mrb[0].mxu0
      %1377 = vmatprep.mubr.f32.mxu0 0.0
      %1378 = vmatmul.mubr.f32.gmra.mrb[0].mxu0 %v864
      %v1379 = vpop.f32.mrb[0].mxu0
      %v1380 = vadd.f32 0.0, %v1379
      %v1381 = vpop.f32.mrb[0].mxu0
      %1382 = vmatprep.mubr.f32.mxu0 0.0
      %1383 = vmatmul.mubr.f32.gmra.mrb[0].mxu0 %v867
      %v1384 = vpop.f32.mrb[0].mxu0
      %v1385 = vadd.f32 0.0, %v1384
      %v1386 = vpop.f32.mrb[0].mxu0
      %1387 = vmatprep.mubr.f32.mxu0 0.0
      %1388 = vmatmul.mubr.f32.gmra.mrb[0].mxu0 %v870
      %v1389 = vpop.f32.mrb[0].mxu0
      %v1390 = vadd.f32 0.0, %v1389
      %v1391 = vpop.f32.mrb[0].mxu0
      %1392 = vmatprep.mubr.f32.mxu0 0.0
      %1393 = vmatmul.mubr.f32.gmra.mrb[0].mxu0 %v873
      %v1394 = vpop.f32.mrb[0].mxu0
      %v1395 = vadd.f32 0.0, %v1394
      %v1396 = vpop.f32.mrb[0].mxu0
      %1397 = vmatprep.mubr.f32.mxu0 0.0
      %1398 = vmatmul.mubr.f32.gmra.mrb[0].mxu0 %v876
      %v1399 = vpop.f32.mrb[0].mxu0
      %v1400 = vadd.f32 0.0, %v1399
      %v1401 = vpop.f32.mrb[0].mxu0
      %1402 = vmatprep.mubr.f32.mxu0 0.0
      %1403 = vmatmul.mubr.f32.gmra.mrb[0].mxu0 %v879
      %v1404 = vpop.f32.mrb[0].mxu0
      %v1405 = vadd.f32 0.0, %v1404
      %v1406 = vpop.f32.mrb[0].mxu0
      %1407 = vmatprep.mubr.f32.mxu0 0.0
      %1408 = vmatmul.mubr.f32.gmra.mrb[0].mxu0 %v882
      %v1409 = vpop.f32.mrb[0].mxu0
      %v1410 = vadd.f32 0.0, %v1409
      %v1411 = vpop.f32.mrb[0].mxu0
      %1412 = vmatprep.mubr.f32.mxu0 0.0
      %1413 = vmatmul.mubr.f32.gmra.mrb[0].mxu0 %v885
      %v1414 = vpop.f32.mrb[0].mxu0
      %v1415 = vadd.f32 0.0, %v1414
      %v1416 = vpop.f32.mrb[0].mxu0
      %1417 = vmatprep.mubr.f32.mxu0 0.0
      %1418 = vmatmul.mubr.f32.gmra.mrb[0].mxu0 %v888
      %v1419 = vpop.f32.mrb[0].mxu0
      %v1420 = vadd.f32 0.0, %v1419
      %v1421 = vpop.f32.mrb[0].mxu0
      %1422 = vmatprep.mubr.f32.mxu0 0.0
      %1423 = vmatmul.mubr.f32.gmra.mrb[0].mxu0 %v891
      %v1424 = vpop.f32.mrb[0].mxu0
      %v1425 = vadd.f32 0.0, %v1424
      %v1426 = vpop.f32.mrb[0].mxu0
      %1427 = vmatprep.mubr.f32.mxu0 0.0
      %1428 = vmatmul.mubr.f32.gmra.mrb[0].mxu0 %v894
      %v1429 = vpop.f32.mrb[0].mxu0
      %v1430 = vadd.f32 0.0, %v1429
      %v1431 = vpop.f32.mrb[0].mxu0
      %1432 = vmatprep.mubr.f32.mxu0 0.0
      %1433 = vmatmul.mubr.f32.gmra.mrb[0].mxu0 %v897
      %v1434 = vpop.f32.mrb[0].mxu0
      %v1435 = vadd.f32 0.0, %v1434
      %v1436 = vpop.f32.mrb[0].mxu0
      %1437 = vmatprep.mubr.f32.mxu0 0.0
      %1438 = vmatmul.mubr.f32.gmra.mrb[0].mxu0 %v1219
      %v1439 = vpop.f32.mrb[0].mxu0
      %v1440 = vadd.f32 0.0, %v1439
      %v1441 = vpop.f32.mrb[0].mxu0
      %1442 = vmatprep.mubr.f32.mxu0 0.0
      %1443 = vmatmul.mubr.f32.gmra.mrb[0].mxu0 %v1222
      %v1444 = vpop.f32.mrb[0].mxu0
      %v1445 = vadd.f32 0.0, %v1444
      %v1446 = vpop.f32.mrb[0].mxu0
      %1447 = vmatprep.mubr.f32.mxu0 0.0
      %1448 = vmatmul.mubr.f32.gmra.mrb[0].mxu0 %v1225
      %v1449 = vpop.f32.mrb[0].mxu0
      %v1450 = vadd.f32 0.0, %v1449
      %v1451 = vpop.f32.mrb[0].mxu0
      %1452 = vmatprep.mubr.f32.mxu0 0.0
      %1453 = vmatmul.mubr.f32.gmra.mrb[0].mxu0 %v1228
      %v1454 = vpop.f32.mrb[0].mxu0
      %v1455 = vadd.f32 0.0, %v1454
      %v1456 = vpop.f32.mrb[0].mxu0
      %1457 = vdwg.mxu0
      %v1458 = vadd.f32 %v1128, %v1300
      %v1459 = vadd.f32 %v1129, %v1305
      %v1460 = vadd.f32 %v1130, %v1310
      %v1461 = vadd.f32 %v1131, %v1315
      %v1462 = vadd.f32 %v1132, %v1320
      %v1463 = vadd.f32 %v1133, %v1325
      %v1464 = vadd.f32 %v1134, %v1330
      %v1465 = vadd.f32 %v1135, %v1335
      %v1466 = vadd.f32 %v1136, %v1340
      %v1467 = vadd.f32 %v1137, %v1345
      %v1468 = vadd.f32 %v1138, %v1350
      %v1469 = vadd.f32 %v1139, %v1355
      %v1470 = vadd.f32 %v1140, %v1360
      %v1471 = vadd.f32 %v1141, %v1365
      %v1472 = vadd.f32 %v1142, %v1370
      %v1473 = vadd.f32 %v1143, %v1375
      %v1474 = vadd.f32 %v1144, %v1380
      %v1475 = vadd.f32 %v1145, %v1385
      %v1476 = vadd.f32 %v1146, %v1390
      %v1477 = vadd.f32 %v1147, %v1395
      %v1478 = vadd.f32 %v1148, %v1400
      %v1479 = vadd.f32 %v1149, %v1405
      %v1480 = vadd.f32 %v1150, %v1410
      %v1481 = vadd.f32 %v1151, %v1415
      %v1482 = vadd.f32 %v1152, %v1420
      %v1483 = vadd.f32 %v1153, %v1425
      %v1484 = vadd.f32 %v1154, %v1430
      %v1485 = vadd.f32 %v1155, %v1435
      %v1486 = vadd.f32 %v1156, %v1440
      %v1487 = vadd.f32 %v1157, %v1445
      %v1488 = vadd.f32 %v1158, %v1450
      %v1489 = vadd.f32 %v1159, %v1455
      %v1495 = vrot.slane %v351, 1
      %v1496 = vrot.slane %v352, 1
      %v1497 = vsel %vm396, %v1495, %v1496
      %v1498 = vrot.slane %v353, 1
      %v1499 = vsel %vm396, %v1496, %v1498
      %v1500 = vrot.slane %v354, 1
      %v1501 = vsel %vm396, %v1498, %v1500
      %v1502 = vrot.slane %v355, 1
      %v1503 = vsel %vm396, %v1500, %v1502
      %1504 = vrot.lane.b32.xlu0 %v1497, 4
      %v1505 = vpop.permute.xlu0 %1504
      %1506 = vrot.lane.b32.xlu0 %v1499, 4
      %v1507 = vpop.permute.xlu0 %1506
      %1508 = vrot.lane.b32.xlu0 %v1501, 4
      %v1509 = vpop.permute.xlu0 %1508
      %1510 = vrot.lane.b32.xlu0 %v1503, 4
      %v1511 = vpop.permute.xlu0 %1510
      %v1516 = vrot.slane %v351, 2
      %v1517 = vrot.slane %v352, 2
      %v1518 = vsel %vm565, %v1516, %v1517
      %v1519 = vrot.slane %v353, 2
      %v1520 = vsel %vm565, %v1517, %v1519
      %v1521 = vrot.slane %v354, 2
      %v1522 = vsel %vm565, %v1519, %v1521
      %v1523 = vrot.slane %v355, 2
      %v1524 = vsel %vm565, %v1521, %v1523
      %1525 = vrot.lane.b32.xlu0 %v1518, 8
      %v1526 = vpop.permute.xlu0 %1525
      %1527 = vrot.lane.b32.xlu0 %v1520, 8
      %v1528 = vpop.permute.xlu0 %1527
      %1529 = vrot.lane.b32.xlu0 %v1522, 8
      %v1530 = vpop.permute.xlu0 %1529
      %1531 = vrot.lane.b32.xlu0 %v1524, 8
      %v1532 = vpop.permute.xlu0 %1531
      %v1537 = vsel %vm734, %v351, %v1505
      %v1538 = vsel %vm734, %v352, %v1507
      %v1539 = vsel %vm734, %v353, %v1509
      %v1540 = vsel %vm734, %v354, %v1511
      %v1541 = vsel %vm767, %v1537, %v1526
      %v1542 = vsel %vm767, %v1538, %v1528
      %v1543 = vsel %vm767, %v1539, %v1530
      %v1544 = vsel %vm767, %v1540, %v1532
      %s1545 = scalar_lea.vmem %s2, 32
      %v1546 = vld [vmem:[%s1545] sm:$0xff]
      %v1547 = vld [vmem:[%s1545 + $0x8] sm:$0xf]
      %v1549 = vsel %vm802, %v1541, 0
      %v1552 = vsel %vm802, %v1542, 0
      %v1555 = vsel %vm802, %v1543, 0
      %v1558 = vsel %vm802, %v1544, 0
      %v1561 = vsel %vm899, %v1547, 0
      %1563 = vmatprep.subr.mxu0 0.0
      %1564 = vmatpush1.msra.mxu0 %v1546
      %1565 = vmatprep.subr.mxu0 0.0
      %1566 = vmatpush1.msra.mxu0 %v1561
      %1567 = vmatprep.subr.mxu0 0.0
      %1568 = vmatpush1.msra.mxu0 0.0
      %1569 = vmatprep.subr.mxu0 0.0
      %1570 = vmatpush1.msra.mxu0 0.0
      %1571 = vmatprep.subr.mxu0 0.0
      %1572 = vmatpush1.msra.mxu0 0.0
      %1573 = vmatprep.subr.mxu0 0.0
      %1574 = vmatpush1.msra.mxu0 0.0
      %1575 = vmatprep.subr.mxu0 0.0
      %1576 = vmatpush1.msra.mxu0 0.0
      %1577 = vmatprep.subr.mxu0 0.0
      %1578 = vmatpush1.msra.mxu0 0.0
      %1579 = vmatprep.subr.mxu0 0.0
      %1580 = vmatpush1.msra.mxu0 0.0
      %1581 = vmatprep.subr.mxu0 0.0
      %1582 = vmatpush1.msra.mxu0 0.0
      %1583 = vmatprep.subr.mxu0 0.0
      %1584 = vmatpush1.msra.mxu0 0.0
      %1585 = vmatprep.subr.mxu0 0.0
      %1586 = vmatpush1.msra.mxu0 0.0
      %1587 = vmatprep.subr.mxu0 0.0
      %1588 = vmatpush1.msra.mxu0 0.0
      %1589 = vmatprep.subr.mxu0 0.0
      %1590 = vmatpush1.msra.mxu0 0.0
      %1591 = vmatprep.subr.mxu0 0.0
      %1592 = vmatpush1.msra.mxu0 0.0
      %1593 = vmatprep.subr.mxu0 0.0
      %1594 = vmatpush1.msra.mxu0 0.0
      %1595 = vmatprep.subr.mxu0 0.0
      %1596 = vmatpush1.msra.mxu0 0.0
      %1597 = vmatprep.subr.mxu0 0.0
      %1598 = vmatpush1.msra.mxu0 0.0
      %1599 = vmatprep.subr.mxu0 0.0
      %1600 = vmatpush1.msra.mxu0 0.0
      %1601 = vmatprep.subr.mxu0 0.0
      %1602 = vmatpush1.msra.mxu0 0.0
      %1603 = vmatprep.subr.mxu0 0.0
      %1604 = vmatpush1.msra.mxu0 0.0
      %1605 = vmatprep.subr.mxu0 0.0
      %1606 = vmatpush1.msra.mxu0 0.0
      %1607 = vmatprep.subr.mxu0 0.0
      %1608 = vmatpush1.msra.mxu0 0.0
      %1609 = vmatprep.subr.mxu0 0.0
      %1610 = vmatpush1.msra.mxu0 0.0
      %1611 = vmatprep.subr.mxu0 0.0
      %1612 = vmatpush1.msra.mxu0 0.0
      %1613 = vmatprep.subr.mxu0 0.0
      %1614 = vmatpush1.msra.mxu0 0.0
      %1615 = vmatprep.subr.mxu0 0.0
      %1616 = vmatpush1.msra.mxu0 0.0
      %1617 = vmatprep.subr.mxu0 0.0
      %1618 = vmatpush1.msra.mxu0 0.0
      %1619 = vmatprep.subr.mxu0 0.0
      %1620 = vmatpush1.msra.mxu0 0.0
      %1621 = vmatprep.subr.mxu0 0.0
      %1622 = vmatpush1.msra.mxu0 0.0
      %1623 = vmatprep.subr.mxu0 0.0
      %1624 = vmatpush1.msra.mxu0 0.0
      %1625 = vmatprep.subr.mxu0 0.0
      %1626 = vmatpush1.msra.mxu0 0.0
      %1627 = vmatprep.mubr.f32.mxu0 0.0
      %1628 = vmatmul.mubr.f32.gmra.mrb[0].mxu0 %v828
      %v1629 = vpop.f32.mrb[0].mxu0
      %v1630 = vadd.f32 0.0, %v1629
      %v1631 = vpop.f32.mrb[0].mxu0
      %1632 = vmatprep.mubr.f32.mxu0 0.0
      %1633 = vmatmul.mubr.f32.gmra.mrb[0].mxu0 %v831
      %v1634 = vpop.f32.mrb[0].mxu0
      %v1635 = vadd.f32 0.0, %v1634
      %v1636 = vpop.f32.mrb[0].mxu0
      %1637 = vmatprep.mubr.f32.mxu0 0.0
      %1638 = vmatmul.mubr.f32.gmra.mrb[0].mxu0 %v834
      %v1639 = vpop.f32.mrb[0].mxu0
      %v1640 = vadd.f32 0.0, %v1639
      %v1641 = vpop.f32.mrb[0].mxu0
      %1642 = vmatprep.mubr.f32.mxu0 0.0
      %1643 = vmatmul.mubr.f32.gmra.mrb[0].mxu0 %v837
      %v1644 = vpop.f32.mrb[0].mxu0
      %v1645 = vadd.f32 0.0, %v1644
      %v1646 = vpop.f32.mrb[0].mxu0
      %1647 = vmatprep.mubr.f32.mxu0 0.0
      %1648 = vmatmul.mubr.f32.gmra.mrb[0].mxu0 %v840
      %v1649 = vpop.f32.mrb[0].mxu0
      %v1650 = vadd.f32 0.0, %v1649
      %v1651 = vpop.f32.mrb[0].mxu0
      %1652 = vmatprep.mubr.f32.mxu0 0.0
      %1653 = vmatmul.mubr.f32.gmra.mrb[0].mxu0 %v843
      %v1654 = vpop.f32.mrb[0].mxu0
      %v1655 = vadd.f32 0.0, %v1654
      %v1656 = vpop.f32.mrb[0].mxu0
      %1657 = vmatprep.mubr.f32.mxu0 0.0
      %1658 = vmatmul.mubr.f32.gmra.mrb[0].mxu0 %v846
      %v1659 = vpop.f32.mrb[0].mxu0
      %v1660 = vadd.f32 0.0, %v1659
      %v1661 = vpop.f32.mrb[0].mxu0
      %1662 = vmatprep.mubr.f32.mxu0 0.0
      %1663 = vmatmul.mubr.f32.gmra.mrb[0].mxu0 %v849
      %v1664 = vpop.f32.mrb[0].mxu0
      %v1665 = vadd.f32 0.0, %v1664
      %v1666 = vpop.f32.mrb[0].mxu0
      %1667 = vmatprep.mubr.f32.mxu0 0.0
      %1668 = vmatmul.mubr.f32.gmra.mrb[0].mxu0 %v852
      %v1669 = vpop.f32.mrb[0].mxu0
      %v1670 = vadd.f32 0.0, %v1669
      %v1671 = vpop.f32.mrb[0].mxu0
      %1672 = vmatprep.mubr.f32.mxu0 0.0
      %1673 = vmatmul.mubr.f32.gmra.mrb[0].mxu0 %v855
      %v1674 = vpop.f32.mrb[0].mxu0
      %v1675 = vadd.f32 0.0, %v1674
      %v1676 = vpop.f32.mrb[0].mxu0
      %1677 = vmatprep.mubr.f32.mxu0 0.0
      %1678 = vmatmul.mubr.f32.gmra.mrb[0].mxu0 %v858
      %v1679 = vpop.f32.mrb[0].mxu0
      %v1680 = vadd.f32 0.0, %v1679
      %v1681 = vpop.f32.mrb[0].mxu0
      %1682 = vmatprep.mubr.f32.mxu0 0.0
      %1683 = vmatmul.mubr.f32.gmra.mrb[0].mxu0 %v861
      %v1684 = vpop.f32.mrb[0].mxu0
      %v1685 = vadd.f32 0.0, %v1684
      %v1686 = vpop.f32.mrb[0].mxu0
      %1687 = vmatprep.mubr.f32.mxu0 0.0
      %1688 = vmatmul.mubr.f32.gmra.mrb[0].mxu0 %v864
      %v1689 = vpop.f32.mrb[0].mxu0
      %v1690 = vadd.f32 0.0, %v1689
      %v1691 = vpop.f32.mrb[0].mxu0
      %1692 = vmatprep.mubr.f32.mxu0 0.0
      %1693 = vmatmul.mubr.f32.gmra.mrb[0].mxu0 %v867
      %v1694 = vpop.f32.mrb[0].mxu0
      %v1695 = vadd.f32 0.0, %v1694
      %v1696 = vpop.f32.mrb[0].mxu0
      %1697 = vmatprep.mubr.f32.mxu0 0.0
      %1698 = vmatmul.mubr.f32.gmra.mrb[0].mxu0 %v870
      %v1699 = vpop.f32.mrb[0].mxu0
      %v1700 = vadd.f32 0.0, %v1699
      %v1701 = vpop.f32.mrb[0].mxu0
      %1702 = vmatprep.mubr.f32.mxu0 0.0
      %1703 = vmatmul.mubr.f32.gmra.mrb[0].mxu0 %v873
      %v1704 = vpop.f32.mrb[0].mxu0
      %v1705 = vadd.f32 0.0, %v1704
      %v1706 = vpop.f32.mrb[0].mxu0
      %1707 = vmatprep.mubr.f32.mxu0 0.0
      %1708 = vmatmul.mubr.f32.gmra.mrb[0].mxu0 %v876
      %v1709 = vpop.f32.mrb[0].mxu0
      %v1710 = vadd.f32 0.0, %v1709
      %v1711 = vpop.f32.mrb[0].mxu0
      %1712 = vmatprep.mubr.f32.mxu0 0.0
      %1713 = vmatmul.mubr.f32.gmra.mrb[0].mxu0 %v879
      %v1714 = vpop.f32.mrb[0].mxu0
      %v1715 = vadd.f32 0.0, %v1714
      %v1716 = vpop.f32.mrb[0].mxu0
      %1717 = vmatprep.mubr.f32.mxu0 0.0
      %1718 = vmatmul.mubr.f32.gmra.mrb[0].mxu0 %v882
      %v1719 = vpop.f32.mrb[0].mxu0
      %v1720 = vadd.f32 0.0, %v1719
      %v1721 = vpop.f32.mrb[0].mxu0
      %1722 = vmatprep.mubr.f32.mxu0 0.0
      %1723 = vmatmul.mubr.f32.gmra.mrb[0].mxu0 %v885
      %v1724 = vpop.f32.mrb[0].mxu0
      %v1725 = vadd.f32 0.0, %v1724
      %v1726 = vpop.f32.mrb[0].mxu0
      %1727 = vmatprep.mubr.f32.mxu0 0.0
      %1728 = vmatmul.mubr.f32.gmra.mrb[0].mxu0 %v888
      %v1729 = vpop.f32.mrb[0].mxu0
      %v1730 = vadd.f32 0.0, %v1729
      %v1731 = vpop.f32.mrb[0].mxu0
      %1732 = vmatprep.mubr.f32.mxu0 0.0
      %1733 = vmatmul.mubr.f32.gmra.mrb[0].mxu0 %v891
      %v1734 = vpop.f32.mrb[0].mxu0
      %v1735 = vadd.f32 0.0, %v1734
      %v1736 = vpop.f32.mrb[0].mxu0
      %1737 = vmatprep.mubr.f32.mxu0 0.0
      %1738 = vmatmul.mubr.f32.gmra.mrb[0].mxu0 %v894
      %v1739 = vpop.f32.mrb[0].mxu0
      %v1740 = vadd.f32 0.0, %v1739
      %v1741 = vpop.f32.mrb[0].mxu0
      %1742 = vmatprep.mubr.f32.mxu0 0.0
      %1743 = vmatmul.mubr.f32.gmra.mrb[0].mxu0 %v897
      %v1744 = vpop.f32.mrb[0].mxu0
      %v1745 = vadd.f32 0.0, %v1744
      %v1746 = vpop.f32.mrb[0].mxu0
      %1747 = vmatprep.mubr.f32.mxu0 0.0
      %1748 = vmatmul.mubr.f32.gmra.mrb[0].mxu0 %v1219
      %v1749 = vpop.f32.mrb[0].mxu0
      %v1750 = vadd.f32 0.0, %v1749
      %v1751 = vpop.f32.mrb[0].mxu0
      %1752 = vmatprep.mubr.f32.mxu0 0.0
      %1753 = vmatmul.mubr.f32.gmra.mrb[0].mxu0 %v1222
      %v1754 = vpop.f32.mrb[0].mxu0
      %v1755 = vadd.f32 0.0, %v1754
      %v1756 = vpop.f32.mrb[0].mxu0
      %1757 = vmatprep.mubr.f32.mxu0 0.0
      %1758 = vmatmul.mubr.f32.gmra.mrb[0].mxu0 %v1225
      %v1759 = vpop.f32.mrb[0].mxu0
      %v1760 = vadd.f32 0.0, %v1759
      %v1761 = vpop.f32.mrb[0].mxu0
      %1762 = vmatprep.mubr.f32.mxu0 0.0
      %1763 = vmatmul.mubr.f32.gmra.mrb[0].mxu0 %v1228
      %v1764 = vpop.f32.mrb[0].mxu0
      %v1765 = vadd.f32 0.0, %v1764
      %v1766 = vpop.f32.mrb[0].mxu0
      %1767 = vmatprep.mubr.f32.mxu0 0.0
      %1768 = vmatmul.mubr.f32.gmra.mrb[0].mxu0 %v1549
      %v1769 = vpop.f32.mrb[0].mxu0
      %v1770 = vadd.f32 0.0, %v1769
      %v1771 = vpop.f32.mrb[0].mxu0
      %1772 = vmatprep.mubr.f32.mxu0 0.0
      %1773 = vmatmul.mubr.f32.gmra.mrb[0].mxu0 %v1552
      %v1774 = vpop.f32.mrb[0].mxu0
      %v1775 = vadd.f32 0.0, %v1774
      %v1776 = vpop.f32.mrb[0].mxu0
      %1777 = vmatprep.mubr.f32.mxu0 0.0
      %1778 = vmatmul.mubr.f32.gmra.mrb[0].mxu0 %v1555
      %v1779 = vpop.f32.mrb[0].mxu0
      %v1780 = vadd.f32 0.0, %v1779
      %v1781 = vpop.f32.mrb[0].mxu0
      %1782 = vmatprep.mubr.f32.mxu0 0.0
      %1783 = vmatmul.mubr.f32.gmra.mrb[0].mxu0 %v1558
      %v1784 = vpop.f32.mrb[0].mxu0
      %v1785 = vadd.f32 0.0, %v1784
      %v1786 = vpop.f32.mrb[0].mxu0
      %1787 = vdwg.mxu0
      %v1788 = vadd.f32 %v1458, %v1630
      %v1789 = vadd.f32 %v1459, %v1635
      %v1790 = vadd.f32 %v1460, %v1640
      %v1791 = vadd.f32 %v1461, %v1645
      %v1792 = vadd.f32 %v1462, %v1650
      %v1793 = vadd.f32 %v1463, %v1655
      %v1794 = vadd.f32 %v1464, %v1660
      %v1795 = vadd.f32 %v1465, %v1665
      %v1796 = vadd.f32 %v1466, %v1670
      %v1797 = vadd.f32 %v1467, %v1675
      %v1798 = vadd.f32 %v1468, %v1680
      %v1799 = vadd.f32 %v1469, %v1685
      %v1800 = vadd.f32 %v1470, %v1690
      %v1801 = vadd.f32 %v1471, %v1695
      %v1802 = vadd.f32 %v1472, %v1700
      %v1803 = vadd.f32 %v1473, %v1705
      %v1804 = vadd.f32 %v1474, %v1710
      %v1805 = vadd.f32 %v1475, %v1715
      %v1806 = vadd.f32 %v1476, %v1720
      %v1807 = vadd.f32 %v1477, %v1725
      %v1808 = vadd.f32 %v1478, %v1730
      %v1809 = vadd.f32 %v1479, %v1735
      %v1810 = vadd.f32 %v1480, %v1740
      %v1811 = vadd.f32 %v1481, %v1745
      %v1812 = vadd.f32 %v1482, %v1750
      %v1813 = vadd.f32 %v1483, %v1755
      %v1814 = vadd.f32 %v1484, %v1760
      %v1815 = vadd.f32 %v1485, %v1765
      %v1816 = vadd.f32 %v1486, %v1770
      %v1817 = vadd.f32 %v1487, %v1775
      %v1818 = vadd.f32 %v1488, %v1780
      %v1819 = vadd.f32 %v1489, %v1785
      %v1820 = vmax.f32 %v1788, 0.0
      %v1821 = vmax.f32 %v1789, 0.0
      %v1822 = vmax.f32 %v1790, 0.0
      %v1823 = vmax.f32 %v1791, 0.0
      %v1824 = vmax.f32 %v1792, 0.0
      %v1825 = vmax.f32 %v1793, 0.0
      %v1826 = vmax.f32 %v1794, 0.0
      %v1827 = vmax.f32 %v1795, 0.0
      %v1828 = vmax.f32 %v1796, 0.0
      %v1829 = vmax.f32 %v1797, 0.0
      %v1830 = vmax.f32 %v1798, 0.0
      %v1831 = vmax.f32 %v1799, 0.0
      %v1832 = vmax.f32 %v1800, 0.0
      %v1833 = vmax.f32 %v1801, 0.0
      %v1834 = vmax.f32 %v1802, 0.0
      %v1835 = vmax.f32 %v1803, 0.0
      %v1836 = vmax.f32 %v1804, 0.0
      %v1837 = vmax.f32 %v1805, 0.0
      %v1838 = vmax.f32 %v1806, 0.0
      %v1839 = vmax.f32 %v1807, 0.0
      %v1840 = vmax.f32 %v1808, 0.0
      %v1841 = vmax.f32 %v1809, 0.0
      %v1842 = vmax.f32 %v1810, 0.0
      %v1843 = vmax.f32 %v1811, 0.0
      %v1844 = vmax.f32 %v1812, 0.0
      %v1845 = vmax.f32 %v1813, 0.0
      %v1846 = vmax.f32 %v1814, 0.0
      %v1847 = vmax.f32 %v1815, 0.0
      %v1848 = vmax.f32 %v1816, 0.0
      %v1849 = vmax.f32 %v1817, 0.0
      %v1850 = vmax.f32 %v1818, 0.0
      %v1851 = vmax.f32 %v1819, 0.0
      %1852 = vst.msk [vmem:[%s297] sm:$0xff] %vm734, %v1820
      %1853 = vst.msk [vmem:[%s297 + $0x8] sm:$0xff] %vm734, %v1821
      %1854 = vst.msk [vmem:[%s297 + $0x10] sm:$0xff] %vm734, %v1822
      %1855 = vst.msk [vmem:[%s297 + $0x18] sm:$0xff] %vm734, %v1823
      %1856 = vst.msk [vmem:[%s297 + $0x20] sm:$0xff] %vm734, %v1824
      %1857 = vst.msk [vmem:[%s297 + $0x28] sm:$0xff] %vm734, %v1825
      %1858 = vst.msk [vmem:[%s297 + $0x30] sm:$0xff] %vm734, %v1826
      %1859 = vst.msk [vmem:[%s297 + $0x38] sm:$0xff] %vm734, %v1827
      %1860 = vst.msk [vmem:[%s297 + $0x40] sm:$0xff] %vm734, %v1828
      %1861 = vst.msk [vmem:[%s297 + $0x48] sm:$0xff] %vm734, %v1829
      %1862 = vst.msk [vmem:[%s297 + $0x50] sm:$0xff] %vm734, %v1830
      %1863 = vst.msk [vmem:[%s297 + $0x58] sm:$0xff] %vm734, %v1831
      %1864 = vst.msk [vmem:[%s297 + $0x60] sm:$0xff] %vm734, %v1832
      %1865 = vst.msk [vmem:[%s297 + $0x68] sm:$0xff] %vm734, %v1833
      %1866 = vst.msk [vmem:[%s297 + $0x70] sm:$0xff] %vm734, %v1834
      %1867 = vst.msk [vmem:[%s297 + $0x78] sm:$0xff] %vm734, %v1835
      %1868 = vst.msk [vmem:[%s297 + $0x80] sm:$0xff] %vm734, %v1836
      %1869 = vst.msk [vmem:[%s297 + $0x88] sm:$0xff] %vm734, %v1837
      %1870 = vst.msk [vmem:[%s297 + $0x90] sm:$0xff] %vm734, %v1838
      %1871 = vst.msk [vmem:[%s297 + $0x98] sm:$0xff] %vm734, %v1839
      %1872 = vst.msk [vmem:[%s297 + $0xa0] sm:$0xff] %vm734, %v1840
      %1873 = vst.msk [vmem:[%s297 + $0xa8] sm:$0xff] %vm734, %v1841
      %1874 = vst.msk [vmem:[%s297 + $0xb0] sm:$0xff] %vm734, %v1842
      %1875 = vst.msk [vmem:[%s297 + $0xb8] sm:$0xff] %vm734, %v1843
      %1876 = vst.msk [vmem:[%s297 + $0xc0] sm:$0xff] %vm734, %v1844
      %1877 = vst.msk [vmem:[%s297 + $0xc8] sm:$0xff] %vm734, %v1845
      %1878 = vst.msk [vmem:[%s297 + $0xd0] sm:$0xff] %vm734, %v1846
      %1879 = vst.msk [vmem:[%s297 + $0xd8] sm:$0xff] %vm734, %v1847
      %1880 = vst.msk [vmem:[%s297 + $0xe0] sm:$0xff] %vm734, %v1848
      %1881 = vst.msk [vmem:[%s297 + $0xe8] sm:$0xff] %vm734, %v1849
      %1882 = vst.msk [vmem:[%s297 + $0xf0] sm:$0xff] %vm734, %v1850
      %1883 = vst.msk [vmem:[%s297 + $0xf8] sm:$0xff] %vm734, %v1851
      %s1884 = smul.u32 32, %s20
      %p1885 = scmp.lt.s32.totalorder %s19, 1
      %s1886 = scalar_select %p1885, %s19, 1
      %p1887 = scmp.lt.s32.totalorder %s1884, 127
      %s1888 = scalar_select %p1887, %s1884, 127
      %s1889 = smul.addr %s1886, 128
      %s1890 = sadd.s32 %s1888, %s1889
      %s1891 = smul.addr %s1890, 8
      %s1892 = scalar_lea.vmem %s4, %s1891
      // Predicated region
      $region37: #{up_forward.5} parent=35 // pred_check
        %p1893 = pneg %p145
      $region38: #{up_forward.5} parent=35 // pred_check_branch
        %1895 = sbr.rel (%p1893) target = $region40
      $region39: #{up_forward.5} parent=35 // pred_region
        %s1896 = smul.u32 32, %s20
      $region40: #{up_forward.5} parent=35 // pred_fallthru
        _
    $region36: #{up_forward.5} parent=5 // pred_fallthru
      _
    %p1897 = scmp.le.s32.totalorder 2, %s10
    // Predicated region
    $region41: #{up_forward.5} parent=5 // pred_check
      %p1898 = pneg %p1897
    $region42: #{up_forward.5} parent=5 // pred_check_branch
      %1900 = sbr.rel (%p1898) target = $region44
    $region43: #{up_forward.5} parent=5 // pred_region
      %s1901 = ssub.s32 %s10, 2
      // Predicated region
      $region45: #{up_forward.5} parent=43 // pred_check
        %p1902 = pneg %p151
      $region46: #{up_forward.5} parent=43 // pred_check_branch
        %1904 = sbr.rel (%p1902) target = $region48
      $region47: #{up_forward.5} parent=43 // pred_region
        %s1905 = smul.u32 32, %s22
        %p1906 = scmp.lt.s32.totalorder %s21, 1
        %s1907 = scalar_select %p1906, %s21, 1
        %p1908 = scmp.lt.s32.totalorder %s1905, 127
        %s1909 = scalar_select %p1908, %s1905, 127
        %s1910 = smul.addr %s1907, 128
        %s1911 = sadd.s32 %s1909, %s1910
        %s1912 = smul.addr %s1911, 8
        %s1913 = scalar_lea.vmem %s4, %s1912
      $region48: #{up_forward.5} parent=43 // pred_fallthru
        _
    $region44: #{up_forward.5} parent=5 // pred_fallthru
      _
  $region6: #{up_forward.5} parent=0 // loop_footer
    %s14 = sadd.s32 1, %s10
  $region7: #{up_forward.5} parent=0 // loop_footer_branch
    %9 = sbr.rel target = $region3
  $region8: #{up_forward.5} parent=0 // loop_exit
    _

</llo_original>
